<compile_context>
chip_gen: v5e
topology: v5e:2x2
jax: 0.10.0
libtpu: 0.0.40
codegen_flags: <defaults>
</compile_context>

<pallas_src>
import functools

import jax
import jax.numpy as jnp
from jax.experimental import pallas as pl
from jax.experimental.pallas import tpu as pltpu

# Version-tolerant alias (newer jax: CompilerParams; some older: TPUCompilerParams).
_CompilerParams = getattr(pltpu, "CompilerParams", None) or getattr(pltpu, "TPUCompilerParams")


def _pick_tile(dim, pref, quantum):
    """Largest tile <= pref that divides dim and is a multiple of `quantum`.
    Falls back to the full dim (always a legal block shape)."""
    if dim <= pref:
        return dim
    t = (pref // quantum) * quantum
    while t >= quantum:
        if dim % t == 0:
            return t
        t -= quantum
    return dim


# ----------------------------------------------------------------------------
# Generic tiled matmul kernel:  y = (x @ w) * out_scale (+ bias) (+ ReLU)
# ----------------------------------------------------------------------------
def _matmul_kernel(relu, out_scale, has_bias, *refs):
    if has_bias:
        x_ref, w_ref, b_ref, o_ref, acc_ref = refs
    else:
        x_ref, w_ref, o_ref, acc_ref = refs
        b_ref = None
    k = pl.program_id(2)

    @pl.when(k == 0)
    def _init():
        acc_ref[...] = jnp.zeros_like(acc_ref)

    # Feed the MXU bf16 operands; accumulate in f32.
    a = x_ref[...].astype(jnp.bfloat16)
    b = w_ref[...].astype(jnp.bfloat16)
    acc_ref[...] += jnp.dot(a, b, preferred_element_type=jnp.float32)

    @pl.when(k == pl.num_programs(2) - 1)
    def _finalize():
        y = acc_ref[...]
        if out_scale != 1.0:
            y = y * out_scale              # scale folded into the small finalize step
        if b_ref is not None:
            y = y + b_ref[...]             # f32 bias, added once per output tile
        if relu:
            y = jnp.maximum(y, 0.0)
        o_ref[...] = y.astype(o_ref.dtype)


def matmul_bias_act(x, w, bias=None, *, relu=False, out_scale=1.0,
                    out_dtype=None, tm=256, tn=256, tk=256):
    """Tiled Pallas matmul: x [M,K] @ w [K,N] (+bias [N]) (*out_scale) (+ReLU)."""
    M, K = x.shape
    K2, N = w.shape
    assert K == K2, (x.shape, w.shape)
    out_dtype = out_dtype or x.dtype

    tm = _pick_tile(M, tm, 8)      # sublane axis
    tn = _pick_tile(N, tn, 128)    # lane-dense output tiles
    tk = _pick_tile(K, tk, 128)
    grid = (M // tm, N // tn, K // tk)

    in_specs = [pl.BlockSpec((tm, tk), lambda i, j, k: (i, k)),
                pl.BlockSpec((tk, tn), lambda i, j, k: (k, j))]
    args = [x, w]
    if bias is not None:
        in_specs.append(pl.BlockSpec((1, tn), lambda i, j, k: (0, j)))
        args.append(jnp.asarray(bias, jnp.float32).reshape(1, N))

    # VMEM budget: double-buffered in/out tiles + f32 accumulator, with headroom.
    est = 2 * (tm * tk * x.dtype.itemsize + tk * tn * w.dtype.itemsize)
    if bias is not None:
        est += 2 * tn * 4
    est += 2 * tm * tn * jnp.dtype(out_dtype).itemsize + tm * tn * 4
    vmem_limit = int(min(48 * 1024 * 1024, max(16 * 1024 * 1024, 2 * est)))

    kernel = functools.partial(_matmul_kernel, bool(relu), float(out_scale),
                               bias is not None)
    return pl.pallas_call(
        kernel,
        out_shape=jax.ShapeDtypeStruct((M, N), out_dtype),
        grid_spec=pltpu.PrefetchScalarGridSpec(
            num_scalar_prefetch=0,
            grid=grid,
            in_specs=in_specs,
            out_specs=pl.BlockSpec((tm, tn), lambda i, j, k: (i, j)),
            scratch_shapes=[pltpu.VMEM((tm, tn), jnp.float32)]),
        compiler_params=_CompilerParams(
            dimension_semantics=("parallel", "parallel", "arbitrary"),
            vmem_limit_bytes=vmem_limit),
    )(*args)


# ----------------------------------------------------------------------------
# KFLA in JAX: parameter buffers mirror kfla_parameters()
#   per Linear layer: weight_mean [out,in], bias_mean [out],
#                     weight_U_half [out,out], weight_V_half [in,in]
# ----------------------------------------------------------------------------
class KFLAPallas:
    def __init__(self, layer_dims, key):
        """layer_dims: list of (in_features, out_features) for a Linear MLP."""
        self.layers = []
        for (din, dout) in layer_dims:
            key, kw, kb, ku, kv = jax.random.split(key, 5)
            w_mean = (jax.random.normal(kw, (dout, din), jnp.float32)
                      / jnp.sqrt(jnp.float32(din)))
            b_mean = 0.1 * jax.random.normal(kb, (dout,), jnp.float32)
            # kfla_parameters() initialises U_half / V_half with zeros; use small
            # deterministic values (as if estimate_variance had run) so the
            # Kronecker perturbation path is exercised non-trivially.
            u_half = 0.01 * jax.random.normal(ku, (dout, dout), jnp.float32)
            v_half = 0.01 * jax.random.normal(kv, (din, din), jnp.float32)

            # One-time preprocessing for the kernel path: pre-transposed factors
            # (no per-sample HBM transpose), stored in bf16 (half HBM traffic);
            # [M^T ; U^T] concatenated once so the per-layer output matmul is a
            # single fused K-reduction.
            mt_ut = jnp.concatenate([w_mean.T, u_half.T], axis=0)   # [din+dout, dout]
            self.layers.append(dict(
                din=din, dout=dout,
                weight_mean=w_mean, bias_mean=b_mean,
                weight_U_half=u_half, weight_V_half=v_half,
                MUt=mt_ut.astype(jnp.bfloat16),
                Vt=v_half.T.astype(jnp.bfloat16),
                bias=b_mean.astype(jnp.float32),
            ))

    @staticmethod
    def _draw_noise(key, din, dout):
        # E^T drawn directly in [din, dout] layout (same iid N(0,1) distribution as
        # torch.randn(dout, din) transposed) -> no per-sample transpose glue.
        return jax.random.normal(key, (din, dout), jnp.bfloat16)

    def forward_sample(self, x, key, scale=1.0):
        """Per layer:  h @ W^T + b  with  W = M + scale * U E V, computed as
           h @ M^T + scale * ((h @ V^T) @ E^T) @ U^T + b   (W never materialized)."""
        h = x
        n = len(self.layers)
        for i, layer in enumerate(self.layers):
            key, ke = jax.random.split(key)
            et = self._draw_noise(ke, layer["din"], layer["dout"])
            # Kronecker perturbation projected onto the batch (B << din, dout):
            t1 = matmul_bias_act(h, layer["Vt"])                    # h @ V^T
            t2 = matmul_bias_act(t1, et, out_scale=scale)           # scale * (h V^T) E^T
            # Fused output matmul over the concatenated K axis: h@M^T + t2@U^T + b.
            xs = jnp.concatenate([h, t2], axis=1)
            h = matmul_bias_act(xs, layer["MUt"], bias=layer["bias"],
                                relu=(i < n - 1), out_dtype=jnp.float32)
        return h  # logits (softmax applied outside, as in kfla_predict)


# Pure-JAX f32 reference following the original KFLA formula exactly.
def _reference_forward_sample(model, x, key, scale=1.0):
    h = x
    n = len(model.layers)
    for i, layer in enumerate(model.layers):
        key, ke = jax.random.split(key)
        et = KFLAPallas._draw_noise(ke, layer["din"], layer["dout"]).astype(jnp.float32)
        E = et.T                                              # [dout, din] = torch.randn(*M.shape)
        W = layer["weight_mean"] + scale * (layer["weight_U_half"] @ E @ layer["weight_V_half"])
        h = h @ W.T + layer["bias_mean"]
        if i < n - 1:
            h = jnp.maximum(h, 0.0)
    return h


if __name__ == "__main__":
    key = jax.random.PRNGKey(0)
    k_model, k_x, k_sample = jax.random.split(key, 3)

    B, D_IN, HIDDEN, N_CLASSES = 16, 128, 512, 16
    model = KFLAPallas([(D_IN, HIDDEN), (HIDDEN, N_CLASSES)], k_model)
    x = jax.random.normal(k_x, (B, D_IN), jnp.float32)

    fwd = jax.jit(lambda xx, kk: model.forward_sample(xx, kk, scale=1.0))
    logits = jax.block_until_ready(fwd(x, k_sample))

    ref = _reference_forward_sample(model, x, k_sample, scale=1.0)
    assert logits.shape == (B, N_CLASSES)
    # bf16 MXU operands / bf16-stored factors vs. pure-f32 reference -> loose tolerance.
    assert jnp.allclose(logits, ref, atol=5e-2, rtol=5e-2), (
        "mismatch vs reference; max|diff|=%e" % float(jnp.max(jnp.abs(logits - ref))))

    # TODO(synk): estimate_variance / get_hessian / KFAC rely on Cholesky factorization,
    # autograd hooks and data loaders (host-side setup); only the forward/sample hot
    # path used by kfla_predict is implemented as Pallas kernels.
    print("KERNEL_OK")
</pallas_src>

<mosaic_0001>
module attributes {stable_mosaic.version = 11 : i64} {
  func.func @_matmul_kernel(%arg0: i32, %arg1: i32, %arg2: i32, %arg3: memref<16x128xf32, #tpu.memory_space<vmem>>, %arg4: memref<128x128xbf16, #tpu.memory_space<vmem>>, %arg5: memref<16x128xf32, #tpu.memory_space<vmem>>, %arg6: memref<16x128xf32, #tpu.memory_space<vmem>>) attributes {dimension_semantics = [#tpu.dimension_semantics<parallel>, #tpu.dimension_semantics<parallel>, #tpu.dimension_semantics<arbitrary>], iteration_bounds = array<i64: 1, 1, 1>, scalar_prefetch = 0 : i64, scratch_operands = 1 : i64, tpu.core_type = #tpu.core_type<tc>, window_params = [{transform_indices = @transform_0, window_bounds = array<i64: 16, 128>}, {transform_indices = @transform_1, window_bounds = array<i64: 128, 128>}, {transform_indices = @transform_2, window_bounds = array<i64: 16, 128>}]} {
    %c0_i32 = arith.constant 0 : i32
    %0 = arith.cmpi eq, %arg2, %c0_i32 : i32
    %1 = arith.extui %0 : i1 to i32
    %c0_i32_0 = arith.constant 0 : i32
    %2 = arith.cmpi ne, %1, %c0_i32_0 : i32
    scf.if %2 {
      %cst_10 = arith.constant 0.000000e+00 : f32
      %13 = vector.broadcast %cst_10 : f32 to vector<16x128xf32>
      %c0_11 = arith.constant 0 : index
      %c0_12 = arith.constant 0 : index
      %14 = vector.load %arg6[%c0_11, %c0_12] : memref<16x128xf32, #tpu.memory_space<vmem>>, vector<16x128xf32>
      tpu.vector_store %arg6[%c0_11, %c0_12], %13 {strides = array<i32>} : memref<16x128xf32, #tpu.memory_space<vmem>>, vector<16x128xf32>,
    } else {
    }
    %c0 = arith.constant 0 : index
    %c0_1 = arith.constant 0 : index
    %3 = vector.load %arg3[%c0, %c0_1] : memref<16x128xf32, #tpu.memory_space<vmem>>, vector<16x128xf32>
    %4 = arith.truncf %3 : vector<16x128xf32> to vector<16x128xbf16>
    %c0_2 = arith.constant 0 : index
    %c0_3 = arith.constant 0 : index
    %5 = vector.load %arg4[%c0_2, %c0_3] : memref<128x128xbf16, #tpu.memory_space<vmem>>, vector<128x128xbf16>
    %c0_4 = arith.constant 0 : index
    %c0_5 = arith.constant 0 : index
    %6 = vector.load %arg6[%c0_4, %c0_5] : memref<16x128xf32, #tpu.memory_space<vmem>>, vector<16x128xf32>
    %cst = arith.constant dense<0.000000e+00> : vector<16x128xf32>
    %7 = tpu.matmul %4, %5, %cst {dimension_numbers = #tpu.dot_dimension_numbers<[1], [0], [0], [1], [0, 0, 1, 1], [], []>} : vector<16x128xbf16>, vector<128x128xbf16>, vector<16x128xf32> -> vector<16x128xf32>
    %8 = arith.addf %6, %7 : vector<16x128xf32>
    %c0_6 = arith.constant 0 : index
    %c0_7 = arith.constant 0 : index
    %9 = vector.load %arg6[%c0_6, %c0_7] : memref<16x128xf32, #tpu.memory_space<vmem>>, vector<16x128xf32>
    tpu.vector_store %arg6[%c0_6, %c0_7], %8 {strides = array<i32>} : memref<16x128xf32, #tpu.memory_space<vmem>>, vector<16x128xf32>,
    %c0_i32_8 = arith.constant 0 : i32
    %10 = arith.cmpi eq, %arg2, %c0_i32_8 : i32
    %11 = arith.extui %10 : i1 to i32
    %c0_i32_9 = arith.constant 0 : i32
    %12 = arith.cmpi ne, %11, %c0_i32_9 : i32
    scf.if %12 {
      %c0_10 = arith.constant 0 : index
      %c0_11 = arith.constant 0 : index
      %13 = vector.load %arg6[%c0_10, %c0_11] : memref<16x128xf32, #tpu.memory_space<vmem>>, vector<16x128xf32>
      %c0_12 = arith.constant 0 : index
      %c0_13 = arith.constant 0 : index
      %14 = vector.load %arg5[%c0_12, %c0_13] : memref<16x128xf32, #tpu.memory_space<vmem>>, vector<16x128xf32>
      tpu.vector_store %arg5[%c0_12, %c0_13], %13 {strides = array<i32>} : memref<16x128xf32, #tpu.memory_space<vmem>>, vector<16x128xf32>,
    } else {
    }
    return
  }
  func.func @transform_0(%arg0: i32, %arg1: i32, %arg2: i32) -> (i32, i32) {
    %c0_i32 = arith.constant 0 : i32
    return %arg0, %arg2 : i32, i32
  }
  func.func @transform_1(%arg0: i32, %arg1: i32, %arg2: i32) -> (i32, i32) {
    %c0_i32 = arith.constant 0 : i32
    return %arg2, %arg1 : i32, i32
  }
  func.func @transform_2(%arg0: i32, %arg1: i32, %arg2: i32) -> (i32, i32) {
    %c0_i32 = arith.constant 0 : i32
    return %arg0, %arg1 : i32, i32
  }
}

module attributes {stable_mosaic.version = 11 : i64} {
  func.func @_matmul_kernel(%arg0: i32, %arg1: i32, %arg2: i32, %arg3: memref<16x128xf32, #tpu.memory_space<vmem>>, %arg4: memref<128x256xbf16, #tpu.memory_space<vmem>>, %arg5: memref<16x256xf32, #tpu.memory_space<vmem>>, %arg6: memref<16x256xf32, #tpu.memory_space<vmem>>) attributes {dimension_semantics = [#tpu.dimension_semantics<parallel>, #tpu.dimension_semantics<parallel>, #tpu.dimension_semantics<arbitrary>], iteration_bounds = array<i64: 1, 2, 1>, scalar_prefetch = 0 : i64, scratch_operands = 1 : i64, tpu.core_type = #tpu.core_type<tc>, window_params = [{transform_indices = @transform_0, window_bounds = array<i64: 16, 128>}, {transform_indices = @transform_1, window_bounds = array<i64: 128, 256>}, {transform_indices = @transform_2, window_bounds = array<i64: 16, 256>}]} {
    %c0_i32 = arith.constant 0 : i32
    %0 = arith.cmpi eq, %arg2, %c0_i32 : i32
    %1 = arith.extui %0 : i1 to i32
    %c0_i32_0 = arith.constant 0 : i32
    %2 = arith.cmpi ne, %1, %c0_i32_0 : i32
    scf.if %2 {
      %cst_10 = arith.constant 0.000000e+00 : f32
      %13 = vector.broadcast %cst_10 : f32 to vector<16x256xf32>
      %c0_11 = arith.constant 0 : index
      %c0_12 = arith.constant 0 : index
      %14 = vector.load %arg6[%c0_11, %c0_12] : memref<16x256xf32, #tpu.memory_space<vmem>>, vector<16x256xf32>
      tpu.vector_store %arg6[%c0_11, %c0_12], %13 {strides = array<i32>} : memref<16x256xf32, #tpu.memory_space<vmem>>, vector<16x256xf32>,
    } else {
    }
    %c0 = arith.constant 0 : index
    %c0_1 = arith.constant 0 : index
    %3 = vector.load %arg3[%c0, %c0_1] : memref<16x128xf32, #tpu.memory_space<vmem>>, vector<16x128xf32>
    %4 = arith.truncf %3 : vector<16x128xf32> to vector<16x128xbf16>
    %c0_2 = arith.constant 0 : index
    %c0_3 = arith.constant 0 : index
    %5 = vector.load %arg4[%c0_2, %c0_3] : memref<128x256xbf16, #tpu.memory_space<vmem>>, vector<128x256xbf16>
    %c0_4 = arith.constant 0 : index
    %c0_5 = arith.constant 0 : index
    %6 = vector.load %arg6[%c0_4, %c0_5] : memref<16x256xf32, #tpu.memory_space<vmem>>, vector<16x256xf32>
    %cst = arith.constant dense<0.000000e+00> : vector<16x256xf32>
    %7 = tpu.matmul %4, %5, %cst {dimension_numbers = #tpu.dot_dimension_numbers<[1], [0], [0], [1], [0, 0, 1, 1], [], []>} : vector<16x128xbf16>, vector<128x256xbf16>, vector<16x256xf32> -> vector<16x256xf32>
    %8 = arith.addf %6, %7 : vector<16x256xf32>
    %c0_6 = arith.constant 0 : index
    %c0_7 = arith.constant 0 : index
    %9 = vector.load %arg6[%c0_6, %c0_7] : memref<16x256xf32, #tpu.memory_space<vmem>>, vector<16x256xf32>
    tpu.vector_store %arg6[%c0_6, %c0_7], %8 {strides = array<i32>} : memref<16x256xf32, #tpu.memory_space<vmem>>, vector<16x256xf32>,
    %c0_i32_8 = arith.constant 0 : i32
    %10 = arith.cmpi eq, %arg2, %c0_i32_8 : i32
    %11 = arith.extui %10 : i1 to i32
    %c0_i32_9 = arith.constant 0 : i32
    %12 = arith.cmpi ne, %11, %c0_i32_9 : i32
    scf.if %12 {
      %c0_10 = arith.constant 0 : index
      %c0_11 = arith.constant 0 : index
      %13 = vector.load %arg6[%c0_10, %c0_11] : memref<16x256xf32, #tpu.memory_space<vmem>>, vector<16x256xf32>
      %c0_12 = arith.constant 0 : index
      %c0_13 = arith.constant 0 : index
      %14 = vector.load %arg5[%c0_12, %c0_13] : memref<16x256xf32, #tpu.memory_space<vmem>>, vector<16x256xf32>
      tpu.vector_store %arg5[%c0_12, %c0_13], %13 {strides = array<i32>} : memref<16x256xf32, #tpu.memory_space<vmem>>, vector<16x256xf32>,
    } else {
    }
    return
  }
  func.func @transform_0(%arg0: i32, %arg1: i32, %arg2: i32) -> (i32, i32) {
    %c0_i32 = arith.constant 0 : i32
    return %arg0, %arg2 : i32, i32
  }
  func.func @transform_1(%arg0: i32, %arg1: i32, %arg2: i32) -> (i32, i32) {
    %c0_i32 = arith.constant 0 : i32
    return %arg2, %arg1 : i32, i32
  }
  func.func @transform_2(%arg0: i32, %arg1: i32, %arg2: i32) -> (i32, i32) {
    %c0_i32 = arith.constant 0 : i32
    return %arg0, %arg1 : i32, i32
  }
}

module attributes {stable_mosaic.version = 11 : i64} {
  func.func @_matmul_kernel(%arg0: i32, %arg1: i32, %arg2: i32, %arg3: memref<16x128xf32, #tpu.memory_space<vmem>>, %arg4: memref<128x256xbf16, #tpu.memory_space<vmem>>, %arg5: memref<1x256xf32, #tpu.memory_space<vmem>>, %arg6: memref<16x256xf32, #tpu.memory_space<vmem>>, %arg7: memref<16x256xf32, #tpu.memory_space<vmem>>) attributes {dimension_semantics = [#tpu.dimension_semantics<parallel>, #tpu.dimension_semantics<parallel>, #tpu.dimension_semantics<arbitrary>], iteration_bounds = array<i64: 1, 2, 5>, scalar_prefetch = 0 : i64, scratch_operands = 1 : i64, tpu.core_type = #tpu.core_type<tc>, window_params = [{transform_indices = @transform_0, window_bounds = array<i64: 16, 128>}, {transform_indices = @transform_1, window_bounds = array<i64: 128, 256>}, {transform_indices = @transform_2, window_bounds = array<i64: 1, 256>}, {transform_indices = @transform_3, window_bounds = array<i64: 16, 256>}]} {
    %c0_i32 = arith.constant 0 : i32
    %0 = arith.cmpi eq, %arg2, %c0_i32 : i32
    %1 = arith.extui %0 : i1 to i32
    %c0_i32_0 = arith.constant 0 : i32
    %2 = arith.cmpi ne, %1, %c0_i32_0 : i32
    scf.if %2 {
      %cst_9 = arith.constant 0.000000e+00 : f32
      %13 = vector.broadcast %cst_9 : f32 to vector<16x256xf32>
      %c0_10 = arith.constant 0 : index
      %c0_11 = arith.constant 0 : index
      %14 = vector.load %arg7[%c0_10, %c0_11] : memref<16x256xf32, #tpu.memory_space<vmem>>, vector<16x256xf32>
      tpu.vector_store %arg7[%c0_10, %c0_11], %13 {strides = array<i32>} : memref<16x256xf32, #tpu.memory_space<vmem>>, vector<16x256xf32>,
    } else {
    }
    %c0 = arith.constant 0 : index
    %c0_1 = arith.constant 0 : index
    %3 = vector.load %arg3[%c0, %c0_1] : memref<16x128xf32, #tpu.memory_space<vmem>>, vector<16x128xf32>
    %4 = arith.truncf %3 : vector<16x128xf32> to vector<16x128xbf16>
    %c0_2 = arith.constant 0 : index
    %c0_3 = arith.constant 0 : index
    %5 = vector.load %arg4[%c0_2, %c0_3] : memref<128x256xbf16, #tpu.memory_space<vmem>>, vector<128x256xbf16>
    %c0_4 = arith.constant 0 : index
    %c0_5 = arith.constant 0 : index
    %6 = vector.load %arg7[%c0_4, %c0_5] : memref<16x256xf32, #tpu.memory_space<vmem>>, vector<16x256xf32>
    %cst = arith.constant dense<0.000000e+00> : vector<16x256xf32>
    %7 = tpu.matmul %4, %5, %cst {dimension_numbers = #tpu.dot_dimension_numbers<[1], [0], [0], [1], [0, 0, 1, 1], [], []>} : vector<16x128xbf16>, vector<128x256xbf16>, vector<16x256xf32> -> vector<16x256xf32>
    %8 = arith.addf %6, %7 : vector<16x256xf32>
    %c0_6 = arith.constant 0 : index
    %c0_7 = arith.constant 0 : index
    %9 = vector.load %arg7[%c0_6, %c0_7] : memref<16x256xf32, #tpu.memory_space<vmem>>, vector<16x256xf32>
    tpu.vector_store %arg7[%c0_6, %c0_7], %8 {strides = array<i32>} : memref<16x256xf32, #tpu.memory_space<vmem>>, vector<16x256xf32>,
    %c4_i32 = arith.constant 4 : i32
    %10 = arith.cmpi eq, %arg2, %c4_i32 : i32
    %11 = arith.extui %10 : i1 to i32
    %c0_i32_8 = arith.constant 0 : i32
    %12 = arith.cmpi ne, %11, %c0_i32_8 : i32
    scf.if %12 {
      %c0_9 = arith.constant 0 : index
      %c0_10 = arith.constant 0 : index
      %13 = vector.load %arg7[%c0_9, %c0_10] : memref<16x256xf32, #tpu.memory_space<vmem>>, vector<16x256xf32>
      %c0_11 = arith.constant 0 : index
      %c0_12 = arith.constant 0 : index
      %14 = vector.load %arg5[%c0_11, %c0_12] : memref<1x256xf32, #tpu.memory_space<vmem>>, vector<1x256xf32>
      %15 = vector.broadcast %14 : vector<1x256xf32> to vector<16x256xf32>
      %16 = arith.addf %13, %15 : vector<16x256xf32>
      %cst_13 = arith.constant 0.000000e+00 : f32
      %17 = vector.broadcast %cst_13 : f32 to vector<16x256xf32>
      %18 = arith.maximumf %16, %17 : vector<16x256xf32>
      %c0_14 = arith.constant 0 : index
      %c0_15 = arith.constant 0 : index
      %19 = vector.load %arg6[%c0_14, %c0_15] : memref<16x256xf32, #tpu.memory_space<vmem>>, vector<16x256xf32>
      tpu.vector_store %arg6[%c0_14, %c0_15], %18 {strides = array<i32>} : memref<16x256xf32, #tpu.memory_space<vmem>>, vector<16x256xf32>,
    } else {
    }
    return
  }
  func.func @transform_0(%arg0: i32, %arg1: i32, %arg2: i32) -> (i32, i32) {
    %c0_i32 = arith.constant 0 : i32
    return %arg0, %arg2 : i32, i32
  }
  func.func @transform_1(%arg0: i32, %arg1: i32, %arg2: i32) -> (i32, i32) {
    %c0_i32 = arith.constant 0 : i32
    return %arg2, %arg1 : i32, i32
  }
  func.func @transform_2(%arg0: i32, %arg1: i32, %arg2: i32) -> (i32, i32) {
    %c0_i32 = arith.constant 0 : i32
    %c0_i32_0 = arith.constant 0 : i32
    return %c0_i32, %arg1 : i32, i32
  }
  func.func @transform_3(%arg0: i32, %arg1: i32, %arg2: i32) -> (i32, i32) {
    %c0_i32 = arith.constant 0 : i32
    return %arg0, %arg1 : i32, i32
  }
}

module attributes {stable_mosaic.version = 11 : i64} {
  func.func @_matmul_kernel(%arg0: i32, %arg1: i32, %arg2: i32, %arg3: memref<16x256xf32, #tpu.memory_space<vmem>>, %arg4: memref<256x256xbf16, #tpu.memory_space<vmem>>, %arg5: memref<16x256xf32, #tpu.memory_space<vmem>>, %arg6: memref<16x256xf32, #tpu.memory_space<vmem>>) attributes {dimension_semantics = [#tpu.dimension_semantics<parallel>, #tpu.dimension_semantics<parallel>, #tpu.dimension_semantics<arbitrary>], iteration_bounds = array<i64: 1, 2, 2>, scalar_prefetch = 0 : i64, scratch_operands = 1 : i64, tpu.core_type = #tpu.core_type<tc>, window_params = [{transform_indices = @transform_0, window_bounds = array<i64: 16, 256>}, {transform_indices = @transform_1, window_bounds = array<i64: 256, 256>}, {transform_indices = @transform_2, window_bounds = array<i64: 16, 256>}]} {
    %c0_i32 = arith.constant 0 : i32
    %0 = arith.cmpi eq, %arg2, %c0_i32 : i32
    %1 = arith.extui %0 : i1 to i32
    %c0_i32_0 = arith.constant 0 : i32
    %2 = arith.cmpi ne, %1, %c0_i32_0 : i32
    scf.if %2 {
      %cst_9 = arith.constant 0.000000e+00 : f32
      %13 = vector.broadcast %cst_9 : f32 to vector<16x256xf32>
      %c0_10 = arith.constant 0 : index
      %c0_11 = arith.constant 0 : index
      %14 = vector.load %arg6[%c0_10, %c0_11] : memref<16x256xf32, #tpu.memory_space<vmem>>, vector<16x256xf32>
      tpu.vector_store %arg6[%c0_10, %c0_11], %13 {strides = array<i32>} : memref<16x256xf32, #tpu.memory_space<vmem>>, vector<16x256xf32>,
    } else {
    }
    %c0 = arith.constant 0 : index
    %c0_1 = arith.constant 0 : index
    %3 = vector.load %arg3[%c0, %c0_1] : memref<16x256xf32, #tpu.memory_space<vmem>>, vector<16x256xf32>
    %4 = arith.truncf %3 : vector<16x256xf32> to vector<16x256xbf16>
    %c0_2 = arith.constant 0 : index
    %c0_3 = arith.constant 0 : index
    %5 = vector.load %arg4[%c0_2, %c0_3] : memref<256x256xbf16, #tpu.memory_space<vmem>>, vector<256x256xbf16>
    %c0_4 = arith.constant 0 : index
    %c0_5 = arith.constant 0 : index
    %6 = vector.load %arg6[%c0_4, %c0_5] : memref<16x256xf32, #tpu.memory_space<vmem>>, vector<16x256xf32>
    %cst = arith.constant dense<0.000000e+00> : vector<16x256xf32>
    %7 = tpu.matmul %4, %5, %cst {dimension_numbers = #tpu.dot_dimension_numbers<[1], [0], [0], [1], [0, 0, 1, 1], [], []>} : vector<16x256xbf16>, vector<256x256xbf16>, vector<16x256xf32> -> vector<16x256xf32>
    %8 = arith.addf %6, %7 : vector<16x256xf32>
    %c0_6 = arith.constant 0 : index
    %c0_7 = arith.constant 0 : index
    %9 = vector.load %arg6[%c0_6, %c0_7] : memref<16x256xf32, #tpu.memory_space<vmem>>, vector<16x256xf32>
    tpu.vector_store %arg6[%c0_6, %c0_7], %8 {strides = array<i32>} : memref<16x256xf32, #tpu.memory_space<vmem>>, vector<16x256xf32>,
    %c1_i32 = arith.constant 1 : i32
    %10 = arith.cmpi eq, %arg2, %c1_i32 : i32
    %11 = arith.extui %10 : i1 to i32
    %c0_i32_8 = arith.constant 0 : i32
    %12 = arith.cmpi ne, %11, %c0_i32_8 : i32
    scf.if %12 {
      %c0_9 = arith.constant 0 : index
      %c0_10 = arith.constant 0 : index
      %13 = vector.load %arg6[%c0_9, %c0_10] : memref<16x256xf32, #tpu.memory_space<vmem>>, vector<16x256xf32>
      %c0_11 = arith.constant 0 : index
      %c0_12 = arith.constant 0 : index
      %14 = vector.load %arg5[%c0_11, %c0_12] : memref<16x256xf32, #tpu.memory_space<vmem>>, vector<16x256xf32>
      tpu.vector_store %arg5[%c0_11, %c0_12], %13 {strides = array<i32>} : memref<16x256xf32, #tpu.memory_space<vmem>>, vector<16x256xf32>,
    } else {
    }
    return
  }
  func.func @transform_0(%arg0: i32, %arg1: i32, %arg2: i32) -> (i32, i32) {
    %c0_i32 = arith.constant 0 : i32
    return %arg0, %arg2 : i32, i32
  }
  func.func @transform_1(%arg0: i32, %arg1: i32, %arg2: i32) -> (i32, i32) {
    %c0_i32 = arith.constant 0 : i32
    return %arg2, %arg1 : i32, i32
  }
  func.func @transform_2(%arg0: i32, %arg1: i32, %arg2: i32) -> (i32, i32) {
    %c0_i32 = arith.constant 0 : i32
    return %arg0, %arg1 : i32, i32
  }
}

module attributes {stable_mosaic.version = 11 : i64} {
  func.func @_matmul_kernel(%arg0: i32, %arg1: i32, %arg2: i32, %arg3: memref<16x256xf32, #tpu.memory_space<vmem>>, %arg4: memref<256x16xbf16, #tpu.memory_space<vmem>>, %arg5: memref<16x16xf32, #tpu.memory_space<vmem>>, %arg6: memref<16x16xf32, #tpu.memory_space<vmem>>) attributes {dimension_semantics = [#tpu.dimension_semantics<parallel>, #tpu.dimension_semantics<parallel>, #tpu.dimension_semantics<arbitrary>], iteration_bounds = array<i64: 1, 1, 2>, scalar_prefetch = 0 : i64, scratch_operands = 1 : i64, tpu.core_type = #tpu.core_type<tc>, window_params = [{transform_indices = @transform_0, window_bounds = array<i64: 16, 256>}, {transform_indices = @transform_1, window_bounds = array<i64: 256, 16>}, {transform_indices = @transform_2, window_bounds = array<i64: 16, 16>}]} {
    %c0_i32 = arith.constant 0 : i32
    %0 = arith.cmpi eq, %arg2, %c0_i32 : i32
    %1 = arith.extui %0 : i1 to i32
    %c0_i32_0 = arith.constant 0 : i32
    %2 = arith.cmpi ne, %1, %c0_i32_0 : i32
    scf.if %2 {
      %cst_9 = arith.constant 0.000000e+00 : f32
      %13 = vector.broadcast %cst_9 : f32 to vector<16x16xf32>
      %c0_10 = arith.constant 0 : index
      %c0_11 = arith.constant 0 : index
      %14 = vector.load %arg6[%c0_10, %c0_11] : memref<16x16xf32, #tpu.memory_space<vmem>>, vector<16x16xf32>
      tpu.vector_store %arg6[%c0_10, %c0_11], %13 {strides = array<i32>} : memref<16x16xf32, #tpu.memory_space<vmem>>, vector<16x16xf32>,
    } else {
    }
    %c0 = arith.constant 0 : index
    %c0_1 = arith.constant 0 : index
    %3 = vector.load %arg3[%c0, %c0_1] : memref<16x256xf32, #tpu.memory_space<vmem>>, vector<16x256xf32>
    %4 = arith.truncf %3 : vector<16x256xf32> to vector<16x256xbf16>
    %c0_2 = arith.constant 0 : index
    %c0_3 = arith.constant 0 : index
    %5 = vector.load %arg4[%c0_2, %c0_3] : memref<256x16xbf16, #tpu.memory_space<vmem>>, vector<256x16xbf16>
    %c0_4 = arith.constant 0 : index
    %c0_5 = arith.constant 0 : index
    %6 = vector.load %arg6[%c0_4, %c0_5] : memref<16x16xf32, #tpu.memory_space<vmem>>, vector<16x16xf32>
    %cst = arith.constant dense<0.000000e+00> : vector<16x16xf32>
    %7 = tpu.matmul %4, %5, %cst {dimension_numbers = #tpu.dot_dimension_numbers<[1], [0], [0], [1], [0, 0, 1, 1], [], []>} : vector<16x256xbf16>, vector<256x16xbf16>, vector<16x16xf32> -> vector<16x16xf32>
    %8 = arith.addf %6, %7 : vector<16x16xf32>
    %c0_6 = arith.constant 0 : index
    %c0_7 = arith.constant 0 : index
    %9 = vector.load %arg6[%c0_6, %c0_7] : memref<16x16xf32, #tpu.memory_space<vmem>>, vector<16x16xf32>
    tpu.vector_store %arg6[%c0_6, %c0_7], %8 {strides = array<i32>} : memref<16x16xf32, #tpu.memory_space<vmem>>, vector<16x16xf32>,
    %c1_i32 = arith.constant 1 : i32
    %10 = arith.cmpi eq, %arg2, %c1_i32 : i32
    %11 = arith.extui %10 : i1 to i32
    %c0_i32_8 = arith.constant 0 : i32
    %12 = arith.cmpi ne, %11, %c0_i32_8 : i32
    scf.if %12 {
      %c0_9 = arith.constant 0 : index
      %c0_10 = arith.constant 0 : index
      %13 = vector.load %arg6[%c0_9, %c0_10] : memref<16x16xf32, #tpu.memory_space<vmem>>, vector<16x16xf32>
      %c0_11 = arith.constant 0 : index
      %c0_12 = arith.constant 0 : index
      %14 = vector.load %arg5[%c0_11, %c0_12] : memref<16x16xf32, #tpu.memory_space<vmem>>, vector<16x16xf32>
      tpu.vector_store %arg5[%c0_11, %c0_12], %13 {strides = array<i32>} : memref<16x16xf32, #tpu.memory_space<vmem>>, vector<16x16xf32>,
    } else {
    }
    return
  }
  func.func @transform_0(%arg0: i32, %arg1: i32, %arg2: i32) -> (i32, i32) {
    %c0_i32 = arith.constant 0 : i32
    return %arg0, %arg2 : i32, i32
  }
  func.func @transform_1(%arg0: i32, %arg1: i32, %arg2: i32) -> (i32, i32) {
    %c0_i32 = arith.constant 0 : i32
    return %arg2, %arg1 : i32, i32
  }
  func.func @transform_2(%arg0: i32, %arg1: i32, %arg2: i32) -> (i32, i32) {
    %c0_i32 = arith.constant 0 : i32
    return %arg0, %arg1 : i32, i32
  }
}

module attributes {stable_mosaic.version = 11 : i64} {
  func.func @_matmul_kernel(%arg0: i32, %arg1: i32, %arg2: i32, %arg3: memref<16x528xf32, #tpu.memory_space<vmem>>, %arg4: memref<528x16xbf16, #tpu.memory_space<vmem>>, %arg5: memref<1x16xf32, #tpu.memory_space<vmem>>, %arg6: memref<16x16xf32, #tpu.memory_space<vmem>>, %arg7: memref<16x16xf32, #tpu.memory_space<vmem>>) attributes {dimension_semantics = [#tpu.dimension_semantics<parallel>, #tpu.dimension_semantics<parallel>, #tpu.dimension_semantics<arbitrary>], iteration_bounds = array<i64: 1, 1, 1>, scalar_prefetch = 0 : i64, scratch_operands = 1 : i64, tpu.core_type = #tpu.core_type<tc>, window_params = [{transform_indices = @transform_0, window_bounds = array<i64: 16, 528>}, {transform_indices = @transform_1, window_bounds = array<i64: 528, 16>}, {transform_indices = @transform_2, window_bounds = array<i64: 1, 16>}, {transform_indices = @transform_3, window_bounds = array<i64: 16, 16>}]} {
    %c0_i32 = arith.constant 0 : i32
    %0 = arith.cmpi eq, %arg2, %c0_i32 : i32
    %1 = arith.extui %0 : i1 to i32
    %c0_i32_0 = arith.constant 0 : i32
    %2 = arith.cmpi ne, %1, %c0_i32_0 : i32
    scf.if %2 {
      %cst_10 = arith.constant 0.000000e+00 : f32
      %13 = vector.broadcast %cst_10 : f32 to vector<16x16xf32>
      %c0_11 = arith.constant 0 : index
      %c0_12 = arith.constant 0 : index
      %14 = vector.load %arg7[%c0_11, %c0_12] : memref<16x16xf32, #tpu.memory_space<vmem>>, vector<16x16xf32>
      tpu.vector_store %arg7[%c0_11, %c0_12], %13 {strides = array<i32>} : memref<16x16xf32, #tpu.memory_space<vmem>>, vector<16x16xf32>,
    } else {
    }
    %c0 = arith.constant 0 : index
    %c0_1 = arith.constant 0 : index
    %3 = vector.load %arg3[%c0, %c0_1] : memref<16x528xf32, #tpu.memory_space<vmem>>, vector<16x528xf32>
    %4 = arith.truncf %3 : vector<16x528xf32> to vector<16x528xbf16>
    %c0_2 = arith.constant 0 : index
    %c0_3 = arith.constant 0 : index
    %5 = vector.load %arg4[%c0_2, %c0_3] : memref<528x16xbf16, #tpu.memory_space<vmem>>, vector<528x16xbf16>
    %c0_4 = arith.constant 0 : index
    %c0_5 = arith.constant 0 : index
    %6 = vector.load %arg7[%c0_4, %c0_5] : memref<16x16xf32, #tpu.memory_space<vmem>>, vector<16x16xf32>
    %cst = arith.constant dense<0.000000e+00> : vector<16x16xf32>
    %7 = tpu.matmul %4, %5, %cst {dimension_numbers = #tpu.dot_dimension_numbers<[1], [0], [0], [1], [0, 0, 1, 1], [], []>} : vector<16x528xbf16>, vector<528x16xbf16>, vector<16x16xf32> -> vector<16x16xf32>
    %8 = arith.addf %6, %7 : vector<16x16xf32>
    %c0_6 = arith.constant 0 : index
    %c0_7 = arith.constant 0 : index
    %9 = vector.load %arg7[%c0_6, %c0_7] : memref<16x16xf32, #tpu.memory_space<vmem>>, vector<16x16xf32>
    tpu.vector_store %arg7[%c0_6, %c0_7], %8 {strides = array<i32>} : memref<16x16xf32, #tpu.memory_space<vmem>>, vector<16x16xf32>,
    %c0_i32_8 = arith.constant 0 : i32
    %10 = arith.cmpi eq, %arg2, %c0_i32_8 : i32
    %11 = arith.extui %10 : i1 to i32
    %c0_i32_9 = arith.constant 0 : i32
    %12 = arith.cmpi ne, %11, %c0_i32_9 : i32
    scf.if %12 {
      %c0_10 = arith.constant 0 : index
      %c0_11 = arith.constant 0 : index
      %13 = vector.load %arg7[%c0_10, %c0_11] : memref<16x16xf32, #tpu.memory_space<vmem>>, vector<16x16xf32>
      %c0_12 = arith.constant 0 : index
      %c0_13 = arith.constant 0 : index
      %14 = vector.load %arg5[%c0_12, %c0_13] : memref<1x16xf32, #tpu.memory_space<vmem>>, vector<1x16xf32>
      %15 = vector.broadcast %14 : vector<1x16xf32> to vector<16x16xf32>
      %16 = arith.addf %13, %15 : vector<16x16xf32>
      %c0_14 = arith.constant 0 : index
      %c0_15 = arith.constant 0 : index
      %17 = vector.load %arg6[%c0_14, %c0_15] : memref<16x16xf32, #tpu.memory_space<vmem>>, vector<16x16xf32>
      tpu.vector_store %arg6[%c0_14, %c0_15], %16 {strides = array<i32>} : memref<16x16xf32, #tpu.memory_space<vmem>>, vector<16x16xf32>,
    } else {
    }
    return
  }
  func.func @transform_0(%arg0: i32, %arg1: i32, %arg2: i32) -> (i32, i32) {
    %c0_i32 = arith.constant 0 : i32
    return %arg0, %arg2 : i32, i32
  }
  func.func @transform_1(%arg0: i32, %arg1: i32, %arg2: i32) -> (i32, i32) {
    %c0_i32 = arith.constant 0 : i32
    return %arg2, %arg1 : i32, i32
  }
  func.func @transform_2(%arg0: i32, %arg1: i32, %arg2: i32) -> (i32, i32) {
    %c0_i32 = arith.constant 0 : i32
    %c0_i32_0 = arith.constant 0 : i32
    return %c0_i32, %arg1 : i32, i32
  }
  func.func @transform_3(%arg0: i32, %arg1: i32, %arg2: i32) -> (i32, i32) {
    %c0_i32 = arith.constant 0 : i32
    return %arg0, %arg1 : i32, i32
  }
}

</mosaic_0001>

<llo_original>
// kernel: _lambda_.6
$region0: #{_lambda_.6}
  #allocation0 [shape = 'u32[]', space=smem, size = 0x4, offset = 0x4, fixed_abs, tag = 'smem constant byte address 0x4 - core index']
  #allocation1 [shape = 'u32[72,128]{1,0:T(1,128)}', space=vmem, size = 0x9000, scoped, tag = 'internal scratch']
  #allocation2 [shape = 'f32[16,128]{1,0:T(8,128)}', space=vmem, size = 0x2000, scoped, tag = 'scratch operand']
  %s0 = inlined_call_operand.hbm [shape: f32[16,128], index: 0, kind: input, shape index: {}]
  %s1 = inlined_call_operand.hbm [shape: bf16[128,128], index: 1, kind: input, shape index: {}]
  %s2 = inlined_call_operand.vmem [shape: f32[16,128], index: 2, kind: output, shape index: {}]
  %s3 = sld [smem:[#allocation0]]
  $region34: #{_lambda_.6} parent=0
    _
  %s5 = ssub.s32 1, %s3
  %s6 = scalar_select 0, %s5, %s3
  $region1: #{_lambda_.6} parent=0
    #allocation3 [shape = 'u8[8192]{0}', space=vmem, size = 0x2000, scoped, tag = 'input window, operand 0, single buffered']
    #allocation4 [shape = 's32[1]{0}', space=sflag, size = 0x4, scoped, tag = 'scoped memory for _lambda_.6']
    #allocation5 [shape = 'u8[32768]{0}', space=vmem, size = 0x8000, scoped, tag = 'input window, operand 1, single buffered']
    #allocation6 [shape = 's32[1]{0}', space=sflag, size = 0x4, scoped, tag = 'scoped memory for _lambda_.6']
    %7 = vsyncpa [#allocation4], 0
    %8 = vsyncpa [#allocation6], 0
    // Predicated region
    $region2: #{_lambda_.6} parent=1 // pred_check
      _
    $region3: #{_lambda_.6} parent=1 // pred_check_branch
      %10 = sbr.rel (0) target = $region5
    $region4: #{_lambda_.6} parent=1 // pred_region
      %12 = vsyncadd [#allocation4], 0
      %s13 = sshll.u32 %s0, 4
      %s14 = int_to_ptr.hbm [resolvable:$true] %s13
      %s15 = sshll.u32 [#allocation3], 4
      %s16 = int_to_ptr.vmem [resolvable:$true] %s15
      %21 = dma.hbm_to_vmem [thread:$0]  %s14, 256, %s16, [#allocation4], 128, 128, 8
    $region5: #{_lambda_.6} parent=1 // pred_fallthru
      _
    // Predicated region
    $region6: #{_lambda_.6} parent=1 // pred_check
      _
    $region7: #{_lambda_.6} parent=1 // pred_check_branch
      %23 = sbr.rel (0) target = $region9
    $region8: #{_lambda_.6} parent=1 // pred_region
      %25 = vsyncadd [#allocation6], 0
      %s26 = sshll.u32 %s1, 4
      %s27 = int_to_ptr.hbm [resolvable:$true] %s26
      %s28 = sshll.u32 [#allocation5], 4
      %s29 = int_to_ptr.vmem [resolvable:$true] %s28
      %34 = dma.hbm_to_vmem [thread:$0]  %s27, 1024, %s29, [#allocation6], 64, 64, 4
    $region9: #{_lambda_.6} parent=1 // pred_fallthru
      _
    // Predicated region
    $region10: #{_lambda_.6} parent=1 // pred_check
      _
    $region11: #{_lambda_.6} parent=1 // pred_check_branch
      %36 = sbr.rel (0) target = $region13
    $region12: #{_lambda_.6} parent=1 // pred_region
      %38 = dma.done [#allocation4], 256
    $region13: #{_lambda_.6} parent=1 // pred_fallthru
      _
    // Predicated region
    $region14: #{_lambda_.6} parent=1 // pred_check
      _
    $region15: #{_lambda_.6} parent=1 // pred_check_branch
      %40 = sbr.rel (0) target = $region17
    $region16: #{_lambda_.6} parent=1 // pred_region
      %42 = dma.done [#allocation6], 1024
    $region17: #{_lambda_.6} parent=1 // pred_fallthru
      _
    %p43 = scmp.eq.s32.totalorder 0, 0
    // Predicated region
    $region18: #{_lambda_.6} parent=1 // pred_check
      %p44 = pneg %p43
    $region19: #{_lambda_.6} parent=1 // pred_check_branch
      %46 = sbr.rel (%p44) target = $region21
    $region20: #{_lambda_.6} parent=1 // pred_region
      %47 = vst [vmem:[#allocation2] sm:$0xff] 0.0
      %48 = vst [vmem:[#allocation2 + $0x8] sm:$0xff] 0.0
    $region21: #{_lambda_.6} parent=1 // pred_fallthru
      _
    %v49 = vld [vmem:[#allocation3] sm:$0xff]
    %v50 = vld [vmem:[#allocation3 + $0x8] sm:$0xff]
    %v51 = vpack.c.bf16 %v50, %v49
    %v52 = vld [vmem:[#allocation5] sm:$0xf]
    %v53 = vld [vmem:[#allocation5 + $0x4] sm:$0xf]
    %v54 = vld [vmem:[#allocation5 + $0x8] sm:$0xf]
    %v55 = vld [vmem:[#allocation5 + $0xc] sm:$0xf]
    %v56 = vld [vmem:[#allocation5 + $0x10] sm:$0xf]
    %v57 = vld [vmem:[#allocation5 + $0x14] sm:$0xf]
    %v58 = vld [vmem:[#allocation5 + $0x18] sm:$0xf]
    %v59 = vld [vmem:[#allocation5 + $0x1c] sm:$0xf]
    %v60 = vld [vmem:[#allocation5 + $0x20] sm:$0xf]
    %v61 = vld [vmem:[#allocation5 + $0x24] sm:$0xf]
    %v62 = vld [vmem:[#allocation5 + $0x28] sm:$0xf]
    %v63 = vld [vmem:[#allocation5 + $0x2c] sm:$0xf]
    %v64 = vld [vmem:[#allocation5 + $0x30] sm:$0xf]
    %v65 = vld [vmem:[#allocation5 + $0x34] sm:$0xf]
    %v66 = vld [vmem:[#allocation5 + $0x38] sm:$0xf]
    %v67 = vld [vmem:[#allocation5 + $0x3c] sm:$0xf]
    %v68 = vld [vmem:[#allocation2] sm:$0xff]
    %v69 = vld [vmem:[#allocation2 + $0x8] sm:$0xff]
    %v86 = vunpack.c.l.b16 %v52
    %v87 = vunpack.c.l.b16 %v53
    %v88 = vunpack.c.l.b16 %v54
    %v89 = vunpack.c.l.b16 %v55
    %v90 = vunpack.c.l.b16 %v56
    %v91 = vunpack.c.l.b16 %v57
    %v92 = vunpack.c.l.b16 %v58
    %v93 = vunpack.c.l.b16 %v59
    %v94 = vunpack.c.l.b16 %v60
    %v95 = vunpack.c.l.b16 %v61
    %v96 = vunpack.c.l.b16 %v62
    %v97 = vunpack.c.l.b16 %v63
    %v98 = vunpack.c.l.b16 %v64
    %v99 = vunpack.c.l.b16 %v65
    %v100 = vunpack.c.l.b16 %v66
    %v101 = vunpack.c.l.b16 %v67
    %v102 = vpack.c.b16 %v87, %v86
    %v103 = vpack.c.b16 %v89, %v88
    %v104 = vpack.c.b16 %v91, %v90
    %v105 = vpack.c.b16 %v93, %v92
    %v106 = vpack.c.b16 %v95, %v94
    %v107 = vpack.c.b16 %v97, %v96
    %v108 = vpack.c.b16 %v99, %v98
    %v109 = vpack.c.b16 %v101, %v100
    %118 = vmatpush.bf16.msra.mxu0 %v109
    %119 = vmatpush.bf16.msra.mxu0 %v108
    %120 = vmatpush.bf16.msra.mxu0 %v107
    %121 = vmatpush.bf16.msra.mxu0 %v106
    %122 = vmatpush.bf16.msra.mxu0 %v105
    %123 = vmatpush.bf16.msra.mxu0 %v104
    %124 = vmatpush.bf16.msra.mxu0 %v103
    %125 = vmatpush.bf16.msra.mxu0 %v102
    %126 = vmatmul.bf16.gmra.mxu0 %v51
    %v127 = vpop.f32.mrf.mxu0
    %v128 = vadd.f32 0.0, %v127
    %v129 = vpop.f32.mrf.mxu0
    %v130 = vadd.f32 0.0, %v129
    %131 = vdwg.mxu0
    %v132 = vadd.f32 %v68, %v128
    %v133 = vadd.f32 %v69, %v130
    %134 = vst [vmem:[#allocation2] sm:$0xff] %v132
    %135 = vst [vmem:[#allocation2 + $0x8] sm:$0xff] %v133
    // Predicated region
    $region22: #{_lambda_.6} parent=1 // pred_check
      %p136 = pneg %p43
    $region23: #{_lambda_.6} parent=1 // pred_check_branch
      %138 = sbr.rel (%p136) target = $region25
    $region24: #{_lambda_.6} parent=1 // pred_region
      %v139 = vld [vmem:[#allocation2] sm:$0xff]
      %v140 = vld [vmem:[#allocation2 + $0x8] sm:$0xff]
      %141 = vst [vmem:[%s2] sm:$0xff] %v139
      %142 = vst [vmem:[%s2 + $0x8] sm:$0xff] %v140
    $region25: #{_lambda_.6} parent=1 // pred_fallthru
      _
    // Predicated region
    $region26: #{_lambda_.6} parent=1 // pred_check
      _
    $region27: #{_lambda_.6} parent=1 // pred_check_branch
      %144 = sbr.rel (0) target = $region29
    $region28: #{_lambda_.6} parent=1 // pred_region
      _
    $region29: #{_lambda_.6} parent=1 // pred_fallthru
      _
    // Predicated region
    $region30: #{_lambda_.6} parent=1 // pred_check
      _
    $region31: #{_lambda_.6} parent=1 // pred_check_branch
      %146 = sbr.rel (0) target = $region33
    $region32: #{_lambda_.6} parent=1 // pred_region
      _
    $region33: #{_lambda_.6} parent=1 // pred_fallthru
      _
    %147 = vsyncpa [#allocation4], 1
    %148 = vsyncpa [#allocation6], 1

// kernel: _lambda_.7
$region0: #{_lambda_.7}
  #allocation0 [shape = 'u32[]', space=smem, size = 0x4, offset = 0x4, fixed_abs, tag = 'smem constant byte address 0x4 - core index']
  #allocation1 [shape = 'u32[72,128]{1,0:T(1,128)}', space=vmem, size = 0x9000, scoped, tag = 'internal scratch']
  #allocation2 [shape = 'f32[16,256]{1,0:T(8,128)}', space=vmem, size = 0x4000, scoped, tag = 'scratch operand']
  %s0 = inlined_call_operand.vmem [shape: f32[16,128], index: 0, kind: input, shape index: {}]
  %s1 = inlined_call_operand.vmem [shape: bf16[128,512], index: 1, kind: input, shape index: {}]
  %s2 = inlined_call_operand.vmem [shape: f32[16,512], index: 2, kind: output, shape index: {}]
  %s3 = sld [smem:[#allocation0]]
  $region106: #{_lambda_.7} parent=0
    _
  %s5 = ssub.s32 1, %s3
  %s6 = scalar_select 0, %s5, %s3
  $region1: #{_lambda_.7} parent=0
    #allocation3 [shape = 'u8[131072]{0}', space=vmem, size = 0x20000, scoped, tag = 'input window, operand 1']
    #allocation4 [shape = 'u8[32768]{0}', space=vmem, size = 0x8000, scoped, tag = 'output window, operand 0']
    loop: start=0, step=1, limit=4
    $region2: #{_lambda_.7} parent=1 // loop_pre_header
      _
    $region3: #{_lambda_.7} parent=1 // loop_header
      %s8 = sphi 0, %s12
      %p9 = scmp.ge.s32.totalorder %s8, 4
      %s15 = sphi 0, %s34
      %s16 = sphi 0, %s30
      %s17 = sphi 0, %s26
      %s18 = sphi 0, %s15
      %s19 = sphi 0, %s16
      %s20 = sphi 0, %s17
      %s21 = sphi 0, %s18
      %s22 = sphi 0, %s19
      %s23 = sphi 0, %s20
      %s39 = sphi 0, %s41
      %s42 = sphi 0, %s39
      %s43 = sphi 0, %s42
      %s59 = sphi 0, %s43
      %s67 = sphi 0, %s69
      %s70 = sphi 0, %s67
      %s71 = sphi 0, %s70
      %s87 = sphi 0, %s71
      %s95 = sphi 0, %s97
      %s98 = sphi 0, %s95
      %s99 = sphi 0, %s98
      %s115 = sphi 0, %s99
    $region4: #{_lambda_.7} parent=1 // loop_header_branch
      %11 = sbr.rel (%p9) target = $region8
    $region5: #{_lambda_.7} parent=1 // loop_body
      %s13 = ssub.s32 %s8, 1
      %s14 = ssub.s32 %s8, 2
      %s24 = sadd.s32 1, %s17
      %p25 = scmp.ge.s32.totalorder %s24, 1
      %s26 = scalar_select %p25, 0, %s24
      %s27 = sadd.s32 1, %s16
      %s28 = scalar_select %p25, %s27, %s16
      %p29 = scmp.ge.s32.totalorder %s28, 2
      %s30 = scalar_select %p29, 0, %s28
      %s31 = sadd.s32 1, %s15
      %s32 = scalar_select %p29, %s31, %s15
      %p33 = scmp.ge.s32.totalorder %s32, 1
      %s34 = scalar_select %p33, 0, %s32
      %s35 = ssub.s32 %s15, %s34
      %s36 = ssub.s32 %s17, %s26
      %s37 = sor.u32 %s35, %s36
      %p38 = scmp.eq.s32.totalorder %s37, 0
      %s40 = sadd.s32 %s39, 1
      %s41 = scalar_select %p38, %s39, %s40
      %p44 = pneg %p38
      %p45 = scmp.eq.s32.totalorder %s8, 1
      %p46 = por %p44, %p45
      %p47 = scmp.ne.s32.totalorder %s39, %s42
      %p48 = scmp.eq.s32.totalorder %s8, 0
      %p49 = por %p47, %p48
      %p50 = scmp.ne.s32.totalorder %s39, %s42
      %p51 = scmp.eq.s32.totalorder %s13, 1
      %p52 = por %p50, %p51
      %p53 = scmp.ne.s32.totalorder %s42, %s43
      %p54 = scmp.eq.s32.totalorder %s13, 0
      %p55 = por %p53, %p54
      %p56 = scmp.ne.s32.totalorder %s42, %s43
      %p57 = scmp.eq.s32.totalorder %s14, 1
      %p58 = por %p56, %p57
      %p60 = scmp.ne.s32.totalorder %s43, %s59
      %p61 = scmp.eq.s32.totalorder %s14, 0
      %p62 = por %p60, %p61
      %s63 = ssub.s32 %s17, %s26
      %s64 = ssub.s32 %s16, %s30
      %s65 = sor.u32 %s63, %s64
      %p66 = scmp.eq.s32.totalorder %s65, 0
      %s68 = sadd.s32 %s67, 1
      %s69 = scalar_select %p66, %s67, %s68
      %p72 = pneg %p66
      %p73 = scmp.eq.s32.totalorder %s8, 1
      %p74 = por %p72, %p73
      %p75 = scmp.ne.s32.totalorder %s67, %s70
      %p76 = scmp.eq.s32.totalorder %s8, 0
      %p77 = por %p75, %p76
      %p78 = scmp.ne.s32.totalorder %s67, %s70
      %p79 = scmp.eq.s32.totalorder %s13, 1
      %p80 = por %p78, %p79
      %p81 = scmp.ne.s32.totalorder %s70, %s71
      %p82 = scmp.eq.s32.totalorder %s13, 0
      %p83 = por %p81, %p82
      %p84 = scmp.ne.s32.totalorder %s70, %s71
      %p85 = scmp.eq.s32.totalorder %s14, 1
      %p86 = por %p84, %p85
      %p88 = scmp.ne.s32.totalorder %s71, %s87
      %p89 = scmp.eq.s32.totalorder %s14, 0
      %p90 = por %p88, %p89
      %s91 = ssub.s32 %s15, %s34
      %s92 = ssub.s32 %s16, %s30
      %s93 = sor.u32 %s91, %s92
      %p94 = scmp.eq.s32.totalorder %s93, 0
      %s96 = sadd.s32 %s95, 1
      %s97 = scalar_select %p94, %s95, %s96
      %p100 = pneg %p94
      %p101 = scmp.eq.s32.totalorder %s8, 1
      %p102 = por %p100, %p101
      %p103 = scmp.ne.s32.totalorder %s95, %s98
      %p104 = scmp.eq.s32.totalorder %s8, 0
      %p105 = por %p103, %p104
      %p106 = scmp.ne.s32.totalorder %s95, %s98
      %p107 = scmp.eq.s32.totalorder %s13, 1
      %p108 = por %p106, %p107
      %p109 = scmp.ne.s32.totalorder %s98, %s99
      %p110 = scmp.eq.s32.totalorder %s13, 0
      %p111 = por %p109, %p110
      %p112 = scmp.ne.s32.totalorder %s98, %s99
      %p113 = scmp.eq.s32.totalorder %s14, 1
      %p114 = por %p112, %p113
      %p116 = scmp.ne.s32.totalorder %s99, %s115
      %p117 = scmp.eq.s32.totalorder %s14, 0
      %p118 = por %p116, %p117
      %p119 = scmp.le.s32.totalorder 1, %s8
      %p120 = scmp.lt.s32.totalorder %s8, 3
      %p121 = pnand %p119, %p120
      %p122 = pneg %p121
      // Predicated region
      $region9: #{_lambda_.7} parent=5 // pred_check
        _
      $region10: #{_lambda_.7} parent=5 // pred_check_branch
        %124 = sbr.rel (%p121) target = $region12
      $region11: #{_lambda_.7} parent=5 // pred_region
        %s125 = ssub.s32 %s8, 1
        // Predicated region
        $region13: #{_lambda_.7} parent=11 // pred_check
          %p126 = pneg %p55
        $region14: #{_lambda_.7} parent=11 // pred_check_branch
          %128 = sbr.rel (%p126) target = $region16
        $region15: #{_lambda_.7} parent=11 // pred_region
          %s129 = smul.u32 2, %s18
          %p130 = scmp.lt.s32.totalorder %s129, 1
          %s131 = scalar_select %p130, %s129, 1
          %p132 = scmp.lt.s32.totalorder %s20, 0
          %s133 = scalar_select %p132, %s20, 0
          %s134 = sadd.s32 %s133, %s131
          %s135 = smul.addr %s134, 8
          %s136 = scalar_lea.vmem %s0, %s135
          %s137 = smul.u32 2, %s18
        $region16: #{_lambda_.7} parent=11 // pred_fallthru
          _
      $region12: #{_lambda_.7} parent=5 // pred_fallthru
        _
      %p138 = scmp.lt.s32.totalorder %s8, 2
      // Predicated region
      $region17: #{_lambda_.7} parent=5 // pred_check
        %p139 = pneg %p138
      $region18: #{_lambda_.7} parent=5 // pred_check_branch
        %141 = sbr.rel (%p139) target = $region20
      $region19: #{_lambda_.7} parent=5 // pred_region
        // Predicated region
        $region21: #{_lambda_.7} parent=19 // pred_check
          %p142 = pneg %p77
        $region22: #{_lambda_.7} parent=19 // pred_check_branch
          %144 = sbr.rel (%p142) target = $region24
        $region23: #{_lambda_.7} parent=19 // pred_region
          %s145 = sand.u32 %s67, 1
          %s146 = sand.u32 %s67, 1
          %s147 = smul.addr %s146, 128
          %s148 = scalar_lea.vmem [#allocation3], %s147
          %s149 = smul.u32 16, %s17
          %s150 = smul.u32 2, %s16
          %s151 = smul.addr %s149, 4
          %s152 = sadd.s32 %s150, %s151
          %s153 = smul.addr %s152, 4
          %s154 = scalar_lea.vmem %s1, %s153
          // Predicated region
          $region25: #{_lambda_.7} parent=23 // pred_check
            _
          $region26: #{_lambda_.7} parent=23 // pred_check_branch
            %156 = sbr.rel (0) target = $region28
          $region27: #{_lambda_.7} parent=23 // pred_region
            // Predicated region
            $region29: #{_lambda_.7} parent=27 // pred_check
              _
            $region30: #{_lambda_.7} parent=27 // pred_check_branch
              %158 = sbr.rel (0) target = $region32
            $region31: #{_lambda_.7} parent=27 // pred_region
              // Predicated region
              $region44: #{_lambda_.7} parent=31 // pred_check
                _
              $region45: #{_lambda_.7} parent=31 // pred_check_branch
                %204 = sbr.rel (0) target = $region47
              $region46: #{_lambda_.7} parent=31 // pred_region
                loop: start=0, step=1, limit=1
                $region48: #{_lambda_.7} parent=46 // loop_pre_header
                  _
                $region49: #{_lambda_.7} parent=46 // loop_header
                  %s206 = sphi 0, %s210
                  %p207 = scmp.ge.s32.totalorder %s206, 1
                  %s211 = sphi %s154, %s154
                  %s212 = sphi %s148, %s148
                $region50: #{_lambda_.7} parent=46 // loop_header_branch
                  %209 = sbr.rel (%p207) target = $region54
                $region51: #{_lambda_.7} parent=46 // loop_body
                  %v213 = vld [vmem:[%s211] sm:$0xff]
                  %214 = vst [vmem:[%s212] sm:$0xff] %v213
                  %v215 = vld [vmem:[%s211 + $0x10] sm:$0xff]
                  %216 = vst [vmem:[%s212 + $0x8] sm:$0xff] %v215
                  %v217 = vld [vmem:[%s211 + $0x20] sm:$0xff]
                  %218 = vst [vmem:[%s212 + $0x10] sm:$0xff] %v217
                  %v219 = vld [vmem:[%s211 + $0x30] sm:$0xff]
                  %220 = vst [vmem:[%s212 + $0x18] sm:$0xff] %v219
                  %v221 = vld [vmem:[%s211 + $0x40] sm:$0xff]
                  %222 = vst [vmem:[%s212 + $0x20] sm:$0xff] %v221
                  %v223 = vld [vmem:[%s211 + $0x50] sm:$0xff]
                  %224 = vst [vmem:[%s212 + $0x28] sm:$0xff] %v223
                  %v225 = vld [vmem:[%s211 + $0x60] sm:$0xff]
                  %226 = vst [vmem:[%s212 + $0x30] sm:$0xff] %v225
                  %v227 = vld [vmem:[%s211 + $0x70] sm:$0xff]
                  %228 = vst [vmem:[%s212 + $0x38] sm:$0xff] %v227
                  %v229 = vld [vmem:[%s211 + $0x80] sm:$0xff]
                  %230 = vst [vmem:[%s212 + $0x40] sm:$0xff] %v229
                  %v231 = vld [vmem:[%s211 + $0x90] sm:$0xff]
                  %232 = vst [vmem:[%s212 + $0x48] sm:$0xff] %v231
                  %v233 = vld [vmem:[%s211 + $0xa0] sm:$0xff]
                  %234 = vst [vmem:[%s212 + $0x50] sm:$0xff] %v233
                  %v235 = vld [vmem:[%s211 + $0xb0] sm:$0xff]
                  %236 = vst [vmem:[%s212 + $0x58] sm:$0xff] %v235
                  %v237 = vld [vmem:[%s211 + $0xc0] sm:$0xff]
                  %238 = vst [vmem:[%s212 + $0x60] sm:$0xff] %v237
                  %v239 = vld [vmem:[%s211 + $0xd0] sm:$0xff]
                  %240 = vst [vmem:[%s212 + $0x68] sm:$0xff] %v239
                  %v241 = vld [vmem:[%s211 + $0xe0] sm:$0xff]
                  %242 = vst [vmem:[%s212 + $0x70] sm:$0xff] %v241
                  %v243 = vld [vmem:[%s211 + $0xf0] sm:$0xff]
                  %244 = vst [vmem:[%s212 + $0x78] sm:$0xff] %v243
                $region52: #{_lambda_.7} parent=46 // loop_footer
                  %s210 = sadd.s32 1, %s206
                $region53: #{_lambda_.7} parent=46 // loop_footer_branch
                  %205 = sbr.rel target = $region49
                $region54: #{_lambda_.7} parent=46 // loop_exit
                  _
              $region47: #{_lambda_.7} parent=31 // pred_fallthru
                _
              // Predicated region
              $region55: #{_lambda_.7} parent=31 // pred_check
                _
              $region56: #{_lambda_.7} parent=31 // pred_check_branch
                %246 = sbr.rel target = $region58
              $region57: #{_lambda_.7} parent=31 // pred_region
                _
              $region58: #{_lambda_.7} parent=31 // pred_fallthru
                _
            $region32: #{_lambda_.7} parent=27 // pred_fallthru
              _
            // Predicated region
            $region33: #{_lambda_.7} parent=27 // pred_check
              _
            $region34: #{_lambda_.7} parent=27 // pred_check_branch
              %160 = sbr.rel target = $region36
            $region35: #{_lambda_.7} parent=27 // pred_region
              %s162 = ssub.s32 256, 1
              loop: start=0, step=1, limit=1
              $region37: #{_lambda_.7} parent=35 // loop_pre_header
                _
              $region38: #{_lambda_.7} parent=35 // loop_header
                %s164 = sphi 0, %s168
                %p165 = scmp.ge.s32.totalorder %s164, 1
                %s169 = sphi %s154, %s154
                %s170 = sphi %s148, %s148
              $region39: #{_lambda_.7} parent=35 // loop_header_branch
                %167 = sbr.rel (%p165) target = $region43
              $region40: #{_lambda_.7} parent=35 // loop_body
                %v171 = vld [vmem:[%s169] sm:%s162]
                %172 = vst [vmem:[%s170] sm:%s162] %v171
                %v173 = vld [vmem:[%s169 + $0x10] sm:%s162]
                %174 = vst [vmem:[%s170 + $0x8] sm:%s162] %v173
                %v175 = vld [vmem:[%s169 + $0x20] sm:%s162]
                %176 = vst [vmem:[%s170 + $0x10] sm:%s162] %v175
                %v177 = vld [vmem:[%s169 + $0x30] sm:%s162]
                %178 = vst [vmem:[%s170 + $0x18] sm:%s162] %v177
                %v179 = vld [vmem:[%s169 + $0x40] sm:%s162]
                %180 = vst [vmem:[%s170 + $0x20] sm:%s162] %v179
                %v181 = vld [vmem:[%s169 + $0x50] sm:%s162]
                %182 = vst [vmem:[%s170 + $0x28] sm:%s162] %v181
                %v183 = vld [vmem:[%s169 + $0x60] sm:%s162]
                %184 = vst [vmem:[%s170 + $0x30] sm:%s162] %v183
                %v185 = vld [vmem:[%s169 + $0x70] sm:%s162]
                %186 = vst [vmem:[%s170 + $0x38] sm:%s162] %v185
                %v187 = vld [vmem:[%s169 + $0x80] sm:%s162]
                %188 = vst [vmem:[%s170 + $0x40] sm:%s162] %v187
                %v189 = vld [vmem:[%s169 + $0x90] sm:%s162]
                %190 = vst [vmem:[%s170 + $0x48] sm:%s162] %v189
                %v191 = vld [vmem:[%s169 + $0xa0] sm:%s162]
                %192 = vst [vmem:[%s170 + $0x50] sm:%s162] %v191
                %v193 = vld [vmem:[%s169 + $0xb0] sm:%s162]
                %194 = vst [vmem:[%s170 + $0x58] sm:%s162] %v193
                %v195 = vld [vmem:[%s169 + $0xc0] sm:%s162]
                %196 = vst [vmem:[%s170 + $0x60] sm:%s162] %v195
                %v197 = vld [vmem:[%s169 + $0xd0] sm:%s162]
                %198 = vst [vmem:[%s170 + $0x68] sm:%s162] %v197
                %v199 = vld [vmem:[%s169 + $0xe0] sm:%s162]
                %200 = vst [vmem:[%s170 + $0x70] sm:%s162] %v199
                %v201 = vld [vmem:[%s169 + $0xf0] sm:%s162]
                %202 = vst [vmem:[%s170 + $0x78] sm:%s162] %v201
              $region41: #{_lambda_.7} parent=35 // loop_footer
                %s168 = sadd.s32 1, %s164
              $region42: #{_lambda_.7} parent=35 // loop_footer_branch
                %163 = sbr.rel target = $region38
              $region43: #{_lambda_.7} parent=35 // loop_exit
                _
            $region36: #{_lambda_.7} parent=27 // pred_fallthru
              _
          $region28: #{_lambda_.7} parent=23 // pred_fallthru
            _
          %247 = vnop
        $region24: #{_lambda_.7} parent=19 // pred_fallthru
          _
      $region20: #{_lambda_.7} parent=5 // pred_fallthru
        _
      %p248 = scmp.le.s32.totalorder 1, %s8
      %p249 = scmp.lt.s32.totalorder %s8, 3
      %p250 = pnand %p248, %p249
      %p251 = pneg %p250
      // Predicated region
      $region59: #{_lambda_.7} parent=5 // pred_check
        _
      $region60: #{_lambda_.7} parent=5 // pred_check_branch
        %253 = sbr.rel (%p250) target = $region62
      $region61: #{_lambda_.7} parent=5 // pred_region
        %s254 = ssub.s32 %s8, 1
        %s255 = sand.u32 %s70, 1
        %s256 = sand.u32 %s70, 1
        %s257 = smul.addr %s256, 128
        %s258 = scalar_lea.vmem [#allocation3], %s257
        // Predicated region
        $region63: #{_lambda_.7} parent=61 // pred_check
          %p259 = pneg %p83
        $region64: #{_lambda_.7} parent=61 // pred_check_branch
          %261 = sbr.rel (%p259) target = $region66
        $region65: #{_lambda_.7} parent=61 // pred_region
          _
        $region66: #{_lambda_.7} parent=61 // pred_fallthru
          _
        %s262 = smul.u32 2, %s18
        %p263 = scmp.lt.s32.totalorder %s262, 1
        %s264 = scalar_select %p263, %s262, 1
        %p265 = scmp.lt.s32.totalorder %s20, 0
        %s266 = scalar_select %p265, %s20, 0
        %s267 = sadd.s32 %s266, %s264
        %s268 = smul.addr %s267, 8
        %s269 = scalar_lea.vmem %s0, %s268
        %p270 = pneg %p55
        %p271 = pneg %p52
        %s272 = sand.u32 %s70, 1
        %s273 = sand.u32 %s70, 1
        %s274 = smul.addr %s273, 128
        %s275 = scalar_lea.vmem [#allocation3], %s274
        %p276 = pneg %p83
        %p277 = pneg %p80
        %p278 = pneg %p111
        %p279 = pneg %p108
        %s280 = sand.u32 %s98, 1
        %s281 = sand.u32 %s98, 1
        %s282 = smul.addr %s281, 32
        %s283 = scalar_lea.vmem [#allocation4], %s282
        %s284 = smul.u32 2, %s18
        %p285 = scmp.lt.s32.totalorder %s284, 1
        %s286 = scalar_select %p285, %s284, 1
        %p287 = scmp.lt.s32.totalorder %s20, 0
        %s288 = scalar_select %p287, %s20, 0
        %s289 = sadd.s32 %s288, %s286
        %s290 = smul.addr %s289, 8
        %s291 = scalar_lea.vmem %s0, %s290
        %s292 = smul.u32 2, %s18
        %s293 = smul.u32 16, %s20
        %s294 = smul.u32 2, %s19
        %s295 = smul.u32 2, %s18
        %s296 = smul.u32 2, %s19
        %p297 = scmp.eq.s32.totalorder %s20, 0
        // Predicated region
        $region67: #{_lambda_.7} parent=61 // pred_check
          %p298 = pneg %p297
        $region68: #{_lambda_.7} parent=61 // pred_check_branch
          %300 = sbr.rel (%p298) target = $region70
        $region69: #{_lambda_.7} parent=61 // pred_region
          %301 = vst [vmem:[#allocation2] sm:$0xff] 0.0
          %302 = vst [vmem:[#allocation2 + $0x8] sm:$0xff] 0.0
          %303 = vst [vmem:[#allocation2 + $0x10] sm:$0xff] 0.0
          %304 = vst [vmem:[#allocation2 + $0x18] sm:$0xff] 0.0
        $region70: #{_lambda_.7} parent=61 // pred_fallthru
          _
        %v305 = vld [vmem:[%s291] sm:$0xff]
        %v306 = vld [vmem:[%s291 + $0x8] sm:$0xff]
        %v307 = vpack.c.bf16 %v306, %v305
        %v308 = vld [vmem:[%s258] sm:$0xff]
        %v309 = vld [vmem:[%s258 + $0x8] sm:$0xff]
        %v310 = vld [vmem:[%s258 + $0x10] sm:$0xff]
        %v311 = vld [vmem:[%s258 + $0x18] sm:$0xff]
        %v312 = vld [vmem:[%s258 + $0x20] sm:$0xff]
        %v313 = vld [vmem:[%s258 + $0x28] sm:$0xff]
        %v314 = vld [vmem:[%s258 + $0x30] sm:$0xff]
        %v315 = vld [vmem:[%s258 + $0x38] sm:$0xff]
        %v316 = vld [vmem:[%s258 + $0x40] sm:$0xff]
        %v317 = vld [vmem:[%s258 + $0x48] sm:$0xff]
        %v318 = vld [vmem:[%s258 + $0x50] sm:$0xff]
        %v319 = vld [vmem:[%s258 + $0x58] sm:$0xff]
        %v320 = vld [vmem:[%s258 + $0x60] sm:$0xff]
        %v321 = vld [vmem:[%s258 + $0x68] sm:$0xff]
        %v322 = vld [vmem:[%s258 + $0x70] sm:$0xff]
        %v323 = vld [vmem:[%s258 + $0x78] sm:$0xff]
        %v324 = vld [vmem:[#allocation2] sm:$0xff]
        %v325 = vld [vmem:[#allocation2 + $0x8] sm:$0xff]
        %v326 = vld [vmem:[#allocation2 + $0x10] sm:$0xff]
        %v327 = vld [vmem:[#allocation2 + $0x18] sm:$0xff]
        %v344 = vunpack.c.l.b16 %v308
        %v345 = vunpack.c.h.b16 %v308
        %v346 = vunpack.c.l.b16 %v309
        %v347 = vunpack.c.h.b16 %v309
        %v348 = vunpack.c.l.b16 %v310
        %v349 = vunpack.c.h.b16 %v310
        %v350 = vunpack.c.l.b16 %v311
        %v351 = vunpack.c.h.b16 %v311
        %v352 = vunpack.c.l.b16 %v312
        %v353 = vunpack.c.h.b16 %v312
        %v354 = vunpack.c.l.b16 %v313
        %v355 = vunpack.c.h.b16 %v313
        %v356 = vunpack.c.l.b16 %v314
        %v357 = vunpack.c.h.b16 %v314
        %v358 = vunpack.c.l.b16 %v315
        %v359 = vunpack.c.h.b16 %v315
        %v360 = vunpack.c.l.b16 %v316
        %v361 = vunpack.c.h.b16 %v316
        %v362 = vunpack.c.l.b16 %v317
        %v363 = vunpack.c.h.b16 %v317
        %v364 = vunpack.c.l.b16 %v318
        %v365 = vunpack.c.h.b16 %v318
        %v366 = vunpack.c.l.b16 %v319
        %v367 = vunpack.c.h.b16 %v319
        %v368 = vunpack.c.l.b16 %v320
        %v369 = vunpack.c.h.b16 %v320
        %v370 = vunpack.c.l.b16 %v321
        %v371 = vunpack.c.h.b16 %v321
        %v372 = vunpack.c.l.b16 %v322
        %v373 = vunpack.c.h.b16 %v322
        %v374 = vunpack.c.l.b16 %v323
        %v375 = vunpack.c.h.b16 %v323
        %v376 = vpack.c.b16 %v346, %v344
        %v377 = vpack.c.b16 %v347, %v345
        %v378 = vpack.c.b16 %v350, %v348
        %v379 = vpack.c.b16 %v351, %v349
        %v380 = vpack.c.b16 %v354, %v352
        %v381 = vpack.c.b16 %v355, %v353
        %v382 = vpack.c.b16 %v358, %v356
        %v383 = vpack.c.b16 %v359, %v357
        %v384 = vpack.c.b16 %v362, %v360
        %v385 = vpack.c.b16 %v363, %v361
        %v386 = vpack.c.b16 %v366, %v364
        %v387 = vpack.c.b16 %v367, %v365
        %v388 = vpack.c.b16 %v370, %v368
        %v389 = vpack.c.b16 %v371, %v369
        %v390 = vpack.c.b16 %v374, %v372
        %v391 = vpack.c.b16 %v375, %v373
        %408 = vmatpush.bf16.msra.mxu0 %v390
        %409 = vmatpush.bf16.msra.mxu0 %v388
        %410 = vmatpush.bf16.msra.mxu0 %v386
        %411 = vmatpush.bf16.msra.mxu0 %v384
        %412 = vmatpush.bf16.msra.mxu0 %v382
        %413 = vmatpush.bf16.msra.mxu0 %v380
        %414 = vmatpush.bf16.msra.mxu0 %v378
        %415 = vmatpush.bf16.msra.mxu0 %v376
        %416 = vmatmul.bf16.gmra.mxu0 %v307
        %v417 = vpop.f32.mrf.mxu0
        %v418 = vadd.f32 0.0, %v417
        %v419 = vpop.f32.mrf.mxu0
        %v420 = vadd.f32 0.0, %v419
        %421 = vdwg.mxu0
        %422 = vmatpush.bf16.msra.mxu0 %v391
        %423 = vmatpush.bf16.msra.mxu0 %v389
        %424 = vmatpush.bf16.msra.mxu0 %v387
        %425 = vmatpush.bf16.msra.mxu0 %v385
        %426 = vmatpush.bf16.msra.mxu0 %v383
        %427 = vmatpush.bf16.msra.mxu0 %v381
        %428 = vmatpush.bf16.msra.mxu0 %v379
        %429 = vmatpush.bf16.msra.mxu0 %v377
        %430 = vmatmul.bf16.gmra.mxu0 %v307
        %v431 = vpop.f32.mrf.mxu0
        %v432 = vadd.f32 0.0, %v431
        %v433 = vpop.f32.mrf.mxu0
        %v434 = vadd.f32 0.0, %v433
        %435 = vdwg.mxu0
        %v436 = vadd.f32 %v324, %v418
        %v437 = vadd.f32 %v325, %v432
        %v438 = vadd.f32 %v326, %v420
        %v439 = vadd.f32 %v327, %v434
        %440 = vst [vmem:[#allocation2] sm:$0xff] %v436
        %441 = vst [vmem:[#allocation2 + $0x8] sm:$0xff] %v437
        %442 = vst [vmem:[#allocation2 + $0x10] sm:$0xff] %v438
        %443 = vst [vmem:[#allocation2 + $0x18] sm:$0xff] %v439
        // Predicated region
        $region71: #{_lambda_.7} parent=61 // pred_check
          %p444 = pneg %p297
        $region72: #{_lambda_.7} parent=61 // pred_check_branch
          %446 = sbr.rel (%p444) target = $region74
        $region73: #{_lambda_.7} parent=61 // pred_region
          %v447 = vld [vmem:[#allocation2] sm:$0xff]
          %v448 = vld [vmem:[#allocation2 + $0x8] sm:$0xff]
          %v449 = vld [vmem:[#allocation2 + $0x10] sm:$0xff]
          %v450 = vld [vmem:[#allocation2 + $0x18] sm:$0xff]
          %451 = vst [vmem:[%s283] sm:$0xff] %v447
          %452 = vst [vmem:[%s283 + $0x8] sm:$0xff] %v448
          %453 = vst [vmem:[%s283 + $0x10] sm:$0xff] %v449
          %454 = vst [vmem:[%s283 + $0x18] sm:$0xff] %v450
        $region74: #{_lambda_.7} parent=61 // pred_fallthru
          _
        %s455 = sand.u32 %s98, 1
        %s456 = sand.u32 %s98, 1
        %s457 = smul.addr %s456, 32
        %s458 = scalar_lea.vmem [#allocation4], %s457
        // Predicated region
        $region75: #{_lambda_.7} parent=61 // pred_check
          %p459 = pneg %p108
        $region76: #{_lambda_.7} parent=61 // pred_check_branch
          %461 = sbr.rel (%p459) target = $region78
        $region77: #{_lambda_.7} parent=61 // pred_region
          %s462 = smul.u32 2, %s18
          %s463 = smul.u32 2, %s19
          %s464 = smul.addr %s462, 4
          %s465 = sadd.s32 %s463, %s464
          %s466 = smul.addr %s465, 8
          %s467 = scalar_lea.vmem %s2, %s466
          // Predicated region
          $region79: #{_lambda_.7} parent=77 // pred_check
            _
          $region80: #{_lambda_.7} parent=77 // pred_check_branch
            %469 = sbr.rel (0) target = $region82
          $region81: #{_lambda_.7} parent=77 // pred_region
            // Predicated region
            $region83: #{_lambda_.7} parent=81 // pred_check
              _
            $region84: #{_lambda_.7} parent=81 // pred_check_branch
              %471 = sbr.rel (0) target = $region86
            $region85: #{_lambda_.7} parent=81 // pred_region
              loop: start=0, step=1, limit=1
              $region87: #{_lambda_.7} parent=85 // loop_pre_header
                _
              $region88: #{_lambda_.7} parent=85 // loop_header
                %s473 = sphi 0, %s477
                %p474 = scmp.ge.s32.totalorder %s473, 1
                %s478 = sphi %s458, %s458
                %s479 = sphi %s467, %s467
              $region89: #{_lambda_.7} parent=85 // loop_header_branch
                %476 = sbr.rel (%p474) target = $region93
              $region90: #{_lambda_.7} parent=85 // loop_body
                %v480 = vld [vmem:[%s478] sm:$0xff]
                %481 = vst [vmem:[%s479] sm:$0xff] %v480
                %v482 = vld [vmem:[%s478 + $0x8] sm:$0xff]
                %483 = vst [vmem:[%s479 + $0x8] sm:$0xff] %v482
                %v484 = vld [vmem:[%s478 + $0x10] sm:$0xff]
                %485 = vst [vmem:[%s479 + $0x20] sm:$0xff] %v484
                %v486 = vld [vmem:[%s478 + $0x18] sm:$0xff]
                %487 = vst [vmem:[%s479 + $0x28] sm:$0xff] %v486
              $region91: #{_lambda_.7} parent=85 // loop_footer
                %s477 = sadd.s32 1, %s473
              $region92: #{_lambda_.7} parent=85 // loop_footer_branch
                %472 = sbr.rel target = $region88
              $region93: #{_lambda_.7} parent=85 // loop_exit
                _
            $region86: #{_lambda_.7} parent=81 // pred_fallthru
              _
            // Predicated region
            $region94: #{_lambda_.7} parent=81 // pred_check
              _
            $region95: #{_lambda_.7} parent=81 // pred_check_branch
              %489 = sbr.rel target = $region97
            $region96: #{_lambda_.7} parent=81 // pred_region
              _
            $region97: #{_lambda_.7} parent=81 // pred_fallthru
              _
          $region82: #{_lambda_.7} parent=77 // pred_fallthru
            _
          %490 = vnop
        $region78: #{_lambda_.7} parent=61 // pred_fallthru
          _
      $region62: #{_lambda_.7} parent=5 // pred_fallthru
        _
      %p491 = scmp.le.s32.totalorder 2, %s8
      // Predicated region
      $region98: #{_lambda_.7} parent=5 // pred_check
        %p492 = pneg %p491
      $region99: #{_lambda_.7} parent=5 // pred_check_branch
        %494 = sbr.rel (%p492) target = $region101
      $region100: #{_lambda_.7} parent=5 // pred_region
        %s495 = ssub.s32 %s8, 2
        // Predicated region
        $region102: #{_lambda_.7} parent=100 // pred_check
          %p496 = pneg %p114
        $region103: #{_lambda_.7} parent=100 // pred_check_branch
          %498 = sbr.rel (%p496) target = $region105
        $region104: #{_lambda_.7} parent=100 // pred_region
          %s499 = sand.u32 %s99, 1
          %s500 = sand.u32 %s99, 1
          %s501 = smul.addr %s500, 32
          %s502 = scalar_lea.vmem [#allocation4], %s501
        $region105: #{_lambda_.7} parent=100 // pred_fallthru
          _
      $region101: #{_lambda_.7} parent=5 // pred_fallthru
        _
    $region6: #{_lambda_.7} parent=1 // loop_footer
      %s12 = sadd.s32 1, %s8
    $region7: #{_lambda_.7} parent=1 // loop_footer_branch
      %7 = sbr.rel target = $region3
    $region8: #{_lambda_.7} parent=1 // loop_exit
      _

// kernel: _lambda_.8
$region0: #{_lambda_.8}
  #allocation0 [shape = 'u32[]', space=smem, size = 0x4, offset = 0x4, fixed_abs, tag = 'smem constant byte address 0x4 - core index']
  #allocation1 [shape = 'u32[72,128]{1,0:T(1,128)}', space=vmem, size = 0x9000, scoped, tag = 'internal scratch']
  #allocation2 [shape = 'f32[16,256]{1,0:T(8,128)}', space=vmem, size = 0x4000, scoped, tag = 'scratch operand']
  %s0 = inlined_call_operand.vmem [shape: f32[16,640], index: 0, kind: input, shape index: {}]
  %s1 = inlined_call_operand.hbm [shape: bf16[640,512], index: 1, kind: input, shape index: {}]
  %s2 = inlined_call_operand.vmem [shape: f32[1,512], index: 2, kind: input, shape index: {}]
  %s3 = inlined_call_operand.vmem [shape: f32[16,512], index: 3, kind: output, shape index: {}]
  %s4 = sld [smem:[#allocation0]]
  $region114: #{_lambda_.8} parent=0
    _
  %s6 = ssub.s32 1, %s4
  %s7 = scalar_select 0, %s6, %s4
  $region1: #{_lambda_.8} parent=0
    #allocation3 [shape = 'u8[16384]{0}', space=vmem, size = 0x4000, scoped, tag = 'input window, operand 0']
    #allocation4 [shape = 'u8[131072]{0}', space=vmem, size = 0x20000, scoped, tag = 'input window, operand 1']
    #allocation5 [shape = 's32[2]{0}', space=sflag, size = 0x8, scoped, tag = 'scoped memory for _lambda_.8']
    #allocation6 [shape = 'u8[32768]{0}', space=vmem, size = 0x8000, scoped, tag = 'output window, operand 0']
    %8 = vsyncpa [#allocation5], 0
    %s9 = scalar_lea.sflag [#allocation5], 1
    %10 = vsyncpa %s9, 0
    loop: start=0, step=1, limit=12
    $region2: #{_lambda_.8} parent=1 // loop_pre_header
      _
    $region3: #{_lambda_.8} parent=1 // loop_header
      %s12 = sphi 0, %s16
      %p13 = scmp.ge.s32.totalorder %s12, 12
      %s19 = sphi 0, %s38
      %s20 = sphi 0, %s34
      %s21 = sphi 0, %s30
      %s22 = sphi 0, %s19
      %s23 = sphi 0, %s20
      %s24 = sphi 0, %s21
      %s25 = sphi 0, %s22
      %s26 = sphi 0, %s23
      %s27 = sphi 0, %s24
      %s43 = sphi 0, %s45
      %s46 = sphi 0, %s43
      %s47 = sphi 0, %s46
      %s63 = sphi 0, %s47
      %s71 = sphi 0, %s73
      %s74 = sphi 0, %s71
      %s75 = sphi 0, %s74
      %s91 = sphi 0, %s75
      %s97 = sphi 0, %s99
      %s100 = sphi 0, %s97
      %s101 = sphi 0, %s100
      %s117 = sphi 0, %s101
      %s125 = sphi 0, %s127
      %s128 = sphi 0, %s125
      %s129 = sphi 0, %s128
      %s145 = sphi 0, %s129
    $region4: #{_lambda_.8} parent=1 // loop_header_branch
      %15 = sbr.rel (%p13) target = $region8
    $region5: #{_lambda_.8} parent=1 // loop_body
      %s17 = ssub.s32 %s12, 1
      %s18 = ssub.s32 %s12, 2
      %s28 = sadd.s32 1, %s21
      %p29 = scmp.ge.s32.totalorder %s28, 5
      %s30 = scalar_select %p29, 0, %s28
      %s31 = sadd.s32 1, %s20
      %s32 = scalar_select %p29, %s31, %s20
      %p33 = scmp.ge.s32.totalorder %s32, 2
      %s34 = scalar_select %p33, 0, %s32
      %s35 = sadd.s32 1, %s19
      %s36 = scalar_select %p33, %s35, %s19
      %p37 = scmp.ge.s32.totalorder %s36, 1
      %s38 = scalar_select %p37, 0, %s36
      %s39 = ssub.s32 %s19, %s38
      %s40 = ssub.s32 %s21, %s30
      %s41 = sor.u32 %s39, %s40
      %p42 = scmp.eq.s32.totalorder %s41, 0
      %s44 = sadd.s32 %s43, 1
      %s45 = scalar_select %p42, %s43, %s44
      %p48 = pneg %p42
      %p49 = scmp.eq.s32.totalorder %s12, 9
      %p50 = por %p48, %p49
      %p51 = scmp.ne.s32.totalorder %s43, %s46
      %p52 = scmp.eq.s32.totalorder %s12, 0
      %p53 = por %p51, %p52
      %p54 = scmp.ne.s32.totalorder %s43, %s46
      %p55 = scmp.eq.s32.totalorder %s17, 9
      %p56 = por %p54, %p55
      %p57 = scmp.ne.s32.totalorder %s46, %s47
      %p58 = scmp.eq.s32.totalorder %s17, 0
      %p59 = por %p57, %p58
      %p60 = scmp.ne.s32.totalorder %s46, %s47
      %p61 = scmp.eq.s32.totalorder %s18, 9
      %p62 = por %p60, %p61
      %p64 = scmp.ne.s32.totalorder %s47, %s63
      %p65 = scmp.eq.s32.totalorder %s18, 0
      %p66 = por %p64, %p65
      %s67 = ssub.s32 %s21, %s30
      %s68 = ssub.s32 %s20, %s34
      %s69 = sor.u32 %s67, %s68
      %p70 = scmp.eq.s32.totalorder %s69, 0
      %s72 = sadd.s32 %s71, 1
      %s73 = scalar_select %p70, %s71, %s72
      %p76 = pneg %p70
      %p77 = scmp.eq.s32.totalorder %s12, 9
      %p78 = por %p76, %p77
      %p79 = scmp.ne.s32.totalorder %s71, %s74
      %p80 = scmp.eq.s32.totalorder %s12, 0
      %p81 = por %p79, %p80
      %p82 = scmp.ne.s32.totalorder %s71, %s74
      %p83 = scmp.eq.s32.totalorder %s17, 9
      %p84 = por %p82, %p83
      %p85 = scmp.ne.s32.totalorder %s74, %s75
      %p86 = scmp.eq.s32.totalorder %s17, 0
      %p87 = por %p85, %p86
      %p88 = scmp.ne.s32.totalorder %s74, %s75
      %p89 = scmp.eq.s32.totalorder %s18, 9
      %p90 = por %p88, %p89
      %p92 = scmp.ne.s32.totalorder %s75, %s91
      %p93 = scmp.eq.s32.totalorder %s18, 0
      %p94 = por %p92, %p93
      %s95 = ssub.s32 %s20, %s34
      %p96 = scmp.eq.s32.totalorder %s95, 0
      %s98 = sadd.s32 %s97, 1
      %s99 = scalar_select %p96, %s97, %s98
      %p102 = pneg %p96
      %p103 = scmp.eq.s32.totalorder %s12, 9
      %p104 = por %p102, %p103
      %p105 = scmp.ne.s32.totalorder %s97, %s100
      %p106 = scmp.eq.s32.totalorder %s12, 0
      %p107 = por %p105, %p106
      %p108 = scmp.ne.s32.totalorder %s97, %s100
      %p109 = scmp.eq.s32.totalorder %s17, 9
      %p110 = por %p108, %p109
      %p111 = scmp.ne.s32.totalorder %s100, %s101
      %p112 = scmp.eq.s32.totalorder %s17, 0
      %p113 = por %p111, %p112
      %p114 = scmp.ne.s32.totalorder %s100, %s101
      %p115 = scmp.eq.s32.totalorder %s18, 9
      %p116 = por %p114, %p115
      %p118 = scmp.ne.s32.totalorder %s101, %s117
      %p119 = scmp.eq.s32.totalorder %s18, 0
      %p120 = por %p118, %p119
      %s121 = ssub.s32 %s19, %s38
      %s122 = ssub.s32 %s20, %s34
      %s123 = sor.u32 %s121, %s122
      %p124 = scmp.eq.s32.totalorder %s123, 0
      %s126 = sadd.s32 %s125, 1
      %s127 = scalar_select %p124, %s125, %s126
      %p130 = pneg %p124
      %p131 = scmp.eq.s32.totalorder %s12, 9
      %p132 = por %p130, %p131
      %p133 = scmp.ne.s32.totalorder %s125, %s128
      %p134 = scmp.eq.s32.totalorder %s12, 0
      %p135 = por %p133, %p134
      %p136 = scmp.ne.s32.totalorder %s125, %s128
      %p137 = scmp.eq.s32.totalorder %s17, 9
      %p138 = por %p136, %p137
      %p139 = scmp.ne.s32.totalorder %s128, %s129
      %p140 = scmp.eq.s32.totalorder %s17, 0
      %p141 = por %p139, %p140
      %p142 = scmp.ne.s32.totalorder %s128, %s129
      %p143 = scmp.eq.s32.totalorder %s18, 9
      %p144 = por %p142, %p143
      %p146 = scmp.ne.s32.totalorder %s129, %s145
      %p147 = scmp.eq.s32.totalorder %s18, 0
      %p148 = por %p146, %p147
      %p149 = scmp.le.s32.totalorder 1, %s12
      %p150 = scmp.lt.s32.totalorder %s12, 11
      %p151 = pnand %p149, %p150
      %p152 = pneg %p151
      // Predicated region
      $region9: #{_lambda_.8} parent=5 // pred_check
        _
      $region10: #{_lambda_.8} parent=5 // pred_check_branch
        %154 = sbr.rel (%p151) target = $region12
      $region11: #{_lambda_.8} parent=5 // pred_region
        %s155 = ssub.s32 %s12, 1
      $region12: #{_lambda_.8} parent=5 // pred_fallthru
        _
      %p156 = scmp.lt.s32.totalorder %s12, 10
      // Predicated region
      $region13: #{_lambda_.8} parent=5 // pred_check
        %p157 = pneg %p156
      $region14: #{_lambda_.8} parent=5 // pred_check_branch
        %159 = sbr.rel (%p157) target = $region16
      $region15: #{_lambda_.8} parent=5 // pred_region
        // Predicated region
        $region17: #{_lambda_.8} parent=15 // pred_check
          %p160 = pneg %p53
        $region18: #{_lambda_.8} parent=15 // pred_check_branch
          %162 = sbr.rel (%p160) target = $region20
        $region19: #{_lambda_.8} parent=15 // pred_region
          %s163 = sand.u32 %s43, 1
          %s164 = sand.u32 %s43, 1
          %s165 = smul.addr %s164, 16
          %s166 = scalar_lea.vmem [#allocation3], %s165
          %s167 = smul.u32 2, %s19
          %s168 = smul.addr %s167, 5
          %s169 = sadd.s32 %s21, %s168
          %s170 = smul.addr %s169, 8
          %s171 = scalar_lea.vmem %s0, %s170
          // Predicated region
          $region21: #{_lambda_.8} parent=19 // pred_check
            _
          $region22: #{_lambda_.8} parent=19 // pred_check_branch
            %173 = sbr.rel (0) target = $region24
          $region23: #{_lambda_.8} parent=19 // pred_region
            // Predicated region
            $region25: #{_lambda_.8} parent=23 // pred_check
              _
            $region26: #{_lambda_.8} parent=23 // pred_check_branch
              %175 = sbr.rel (0) target = $region28
            $region27: #{_lambda_.8} parent=23 // pred_region
              // Predicated region
              $region40: #{_lambda_.8} parent=27 // pred_check
                _
              $region41: #{_lambda_.8} parent=27 // pred_check_branch
                %193 = sbr.rel (0) target = $region43
              $region42: #{_lambda_.8} parent=27 // pred_region
                loop: start=0, step=1, limit=1
                $region44: #{_lambda_.8} parent=42 // loop_pre_header
                  _
                $region45: #{_lambda_.8} parent=42 // loop_header
                  %s195 = sphi 0, %s199
                  %p196 = scmp.ge.s32.totalorder %s195, 1
                  %s200 = sphi %s171, %s171
                  %s201 = sphi %s166, %s166
                $region46: #{_lambda_.8} parent=42 // loop_header_branch
                  %198 = sbr.rel (%p196) target = $region50
                $region47: #{_lambda_.8} parent=42 // loop_body
                  %v202 = vld [vmem:[%s200] sm:$0xff]
                  %203 = vst [vmem:[%s201] sm:$0xff] %v202
                  %v204 = vld [vmem:[%s200 + $0x28] sm:$0xff]
                  %205 = vst [vmem:[%s201 + $0x8] sm:$0xff] %v204
                $region48: #{_lambda_.8} parent=42 // loop_footer
                  %s199 = sadd.s32 1, %s195
                $region49: #{_lambda_.8} parent=42 // loop_footer_branch
                  %194 = sbr.rel target = $region45
                $region50: #{_lambda_.8} parent=42 // loop_exit
                  _
              $region43: #{_lambda_.8} parent=27 // pred_fallthru
                _
              // Predicated region
              $region51: #{_lambda_.8} parent=27 // pred_check
                _
              $region52: #{_lambda_.8} parent=27 // pred_check_branch
                %207 = sbr.rel target = $region54
              $region53: #{_lambda_.8} parent=27 // pred_region
                _
              $region54: #{_lambda_.8} parent=27 // pred_fallthru
                _
            $region28: #{_lambda_.8} parent=23 // pred_fallthru
              _
            // Predicated region
            $region29: #{_lambda_.8} parent=23 // pred_check
              _
            $region30: #{_lambda_.8} parent=23 // pred_check_branch
              %177 = sbr.rel target = $region32
            $region31: #{_lambda_.8} parent=23 // pred_region
              %s179 = ssub.s32 256, 1
              loop: start=0, step=1, limit=1
              $region33: #{_lambda_.8} parent=31 // loop_pre_header
                _
              $region34: #{_lambda_.8} parent=31 // loop_header
                %s181 = sphi 0, %s185
                %p182 = scmp.ge.s32.totalorder %s181, 1
                %s186 = sphi %s171, %s171
                %s187 = sphi %s166, %s166
              $region35: #{_lambda_.8} parent=31 // loop_header_branch
                %184 = sbr.rel (%p182) target = $region39
              $region36: #{_lambda_.8} parent=31 // loop_body
                %v188 = vld [vmem:[%s186] sm:%s179]
                %189 = vst [vmem:[%s187] sm:%s179] %v188
                %v190 = vld [vmem:[%s186 + $0x28] sm:%s179]
                %191 = vst [vmem:[%s187 + $0x8] sm:%s179] %v190
              $region37: #{_lambda_.8} parent=31 // loop_footer
                %s185 = sadd.s32 1, %s181
              $region38: #{_lambda_.8} parent=31 // loop_footer_branch
                %180 = sbr.rel target = $region34
              $region39: #{_lambda_.8} parent=31 // loop_exit
                _
            $region32: #{_lambda_.8} parent=23 // pred_fallthru
              _
          $region24: #{_lambda_.8} parent=19 // pred_fallthru
            _
          %208 = vnop
        $region20: #{_lambda_.8} parent=15 // pred_fallthru
          _
        // Predicated region
        $region55: #{_lambda_.8} parent=15 // pred_check
          %p209 = pneg %p81
        $region56: #{_lambda_.8} parent=15 // pred_check_branch
          %211 = sbr.rel (%p209) target = $region58
        $region57: #{_lambda_.8} parent=15 // pred_region
          %s212 = sand.u32 %s71, 1
          %s213 = scalar_lea.sflag [#allocation5], %s212
          %s214 = sand.u32 %s71, 1
          %s215 = smul.addr %s214, 128
          %s216 = scalar_lea.vmem [#allocation4], %s215
          %s217 = smul.u32 16, %s21
          %s218 = smul.u32 2, %s20
          %220 = vsyncadd %s213, 0
          %s221 = smul.addr %s217, 4
          %s222 = sadd.s32 %s218, %s221
          %s223 = smul.addr %s222, 4
          %s224 = scalar_lea.hbm %s1, %s223
          %s225 = sshll.u32 %s224, 4
          %s226 = int_to_ptr.hbm [resolvable:$true] %s225
          %s227 = sshll.u32 %s216, 4
          %s228 = int_to_ptr.vmem [resolvable:$true] %s227
          %233 = dma.hbm_to_vmem [thread:$0]  %s226, 2048, %s228, %s213, 256, 128, 8
        $region58: #{_lambda_.8} parent=15 // pred_fallthru
          _
        // Predicated region
        $region59: #{_lambda_.8} parent=15 // pred_check
          %p234 = pneg %p107
        $region60: #{_lambda_.8} parent=15 // pred_check_branch
          %236 = sbr.rel (%p234) target = $region62
        $region61: #{_lambda_.8} parent=15 // pred_region
          %s237 = smul.u32 2, %s20
          %p238 = scmp.lt.s32.totalorder %s237, 3
          %s239 = scalar_select %p238, %s237, 3
          %s240 = scalar_lea.vmem %s2, %s239
          %s241 = smul.u32 2, %s20
        $region62: #{_lambda_.8} parent=15 // pred_fallthru
          _
      $region16: #{_lambda_.8} parent=5 // pred_fallthru
        _
      %p242 = scmp.le.s32.totalorder 1, %s12
      %p243 = scmp.lt.s32.totalorder %s12, 11
      %p244 = pnand %p242, %p243
      %p245 = pneg %p244
      // Predicated region
      $region63: #{_lambda_.8} parent=5 // pred_check
        _
      $region64: #{_lambda_.8} parent=5 // pred_check_branch
        %247 = sbr.rel (%p244) target = $region66
      $region65: #{_lambda_.8} parent=5 // pred_region
        %s248 = ssub.s32 %s12, 1
        %s249 = sand.u32 %s46, 1
        %s250 = sand.u32 %s46, 1
        %s251 = smul.addr %s250, 16
        %s252 = scalar_lea.vmem [#allocation3], %s251
        // Predicated region
        $region67: #{_lambda_.8} parent=65 // pred_check
          %p253 = pneg %p59
        $region68: #{_lambda_.8} parent=65 // pred_check_branch
          %255 = sbr.rel (%p253) target = $region70
        $region69: #{_lambda_.8} parent=65 // pred_region
          _
        $region70: #{_lambda_.8} parent=65 // pred_fallthru
          _
        %s256 = sand.u32 %s74, 1
        %s257 = scalar_lea.sflag [#allocation5], %s256
        %s258 = sand.u32 %s74, 1
        %s259 = smul.addr %s258, 128
        %s260 = scalar_lea.vmem [#allocation4], %s259
        // Predicated region
        $region71: #{_lambda_.8} parent=65 // pred_check
          %p261 = pneg %p87
        $region72: #{_lambda_.8} parent=65 // pred_check_branch
          %263 = sbr.rel (%p261) target = $region74
        $region73: #{_lambda_.8} parent=65 // pred_region
          %265 = dma.done %s257, 2048
        $region74: #{_lambda_.8} parent=65 // pred_fallthru
          _
        %s266 = sand.u32 %s46, 1
        %s267 = sand.u32 %s46, 1
        %s268 = smul.addr %s267, 16
        %s269 = scalar_lea.vmem [#allocation3], %s268
        %p270 = pneg %p59
        %p271 = pneg %p56
        %s272 = sand.u32 %s74, 1
        %s273 = scalar_lea.sflag [#allocation5], %s272
        %s274 = sand.u32 %s74, 1
        %s275 = smul.addr %s274, 128
        %s276 = scalar_lea.vmem [#allocation4], %s275
        %p277 = pneg %p87
        %p278 = pneg %p84
        %s279 = smul.u32 2, %s23
        %p280 = scmp.lt.s32.totalorder %s279, 3
        %s281 = scalar_select %p280, %s279, 3
        %s282 = scalar_lea.vmem %s2, %s281
        %p283 = pneg %p113
        %p284 = pneg %p110
        %p285 = pneg %p141
        %p286 = pneg %p138
        %s287 = sand.u32 %s128, 1
        %s288 = sand.u32 %s128, 1
        %s289 = smul.addr %s288, 32
        %s290 = scalar_lea.vmem [#allocation6], %s289
        %s291 = smul.u32 2, %s22
        %s292 = smul.u32 16, %s24
        %s293 = smul.u32 2, %s23
        %s294 = smul.u32 2, %s23
        %p295 = scmp.lt.s32.totalorder %s294, 3
        %s296 = scalar_select %p295, %s294, 3
        %s297 = scalar_lea.vmem %s2, %s296
        %s298 = smul.u32 2, %s23
        %s299 = smul.u32 2, %s22
        %s300 = smul.u32 2, %s23
        %p301 = scmp.eq.s32.totalorder %s24, 0
        // Predicated region
        $region75: #{_lambda_.8} parent=65 // pred_check
          %p302 = pneg %p301
        $region76: #{_lambda_.8} parent=65 // pred_check_branch
          %304 = sbr.rel (%p302) target = $region78
        $region77: #{_lambda_.8} parent=65 // pred_region
          %305 = vst [vmem:[#allocation2] sm:$0xff] 0.0
          %306 = vst [vmem:[#allocation2 + $0x8] sm:$0xff] 0.0
          %307 = vst [vmem:[#allocation2 + $0x10] sm:$0xff] 0.0
          %308 = vst [vmem:[#allocation2 + $0x18] sm:$0xff] 0.0
        $region78: #{_lambda_.8} parent=65 // pred_fallthru
          _
        %v309 = vld [vmem:[%s252] sm:$0xff]
        %v310 = vld [vmem:[%s252 + $0x8] sm:$0xff]
        %v311 = vpack.c.bf16 %v310, %v309
        %v312 = vld [vmem:[%s260] sm:$0xff]
        %v313 = vld [vmem:[%s260 + $0x8] sm:$0xff]
        %v314 = vld [vmem:[%s260 + $0x10] sm:$0xff]
        %v315 = vld [vmem:[%s260 + $0x18] sm:$0xff]
        %v316 = vld [vmem:[%s260 + $0x20] sm:$0xff]
        %v317 = vld [vmem:[%s260 + $0x28] sm:$0xff]
        %v318 = vld [vmem:[%s260 + $0x30] sm:$0xff]
        %v319 = vld [vmem:[%s260 + $0x38] sm:$0xff]
        %v320 = vld [vmem:[%s260 + $0x40] sm:$0xff]
        %v321 = vld [vmem:[%s260 + $0x48] sm:$0xff]
        %v322 = vld [vmem:[%s260 + $0x50] sm:$0xff]
        %v323 = vld [vmem:[%s260 + $0x58] sm:$0xff]
        %v324 = vld [vmem:[%s260 + $0x60] sm:$0xff]
        %v325 = vld [vmem:[%s260 + $0x68] sm:$0xff]
        %v326 = vld [vmem:[%s260 + $0x70] sm:$0xff]
        %v327 = vld [vmem:[%s260 + $0x78] sm:$0xff]
        %v328 = vld [vmem:[#allocation2] sm:$0xff]
        %v329 = vld [vmem:[#allocation2 + $0x8] sm:$0xff]
        %v330 = vld [vmem:[#allocation2 + $0x10] sm:$0xff]
        %v331 = vld [vmem:[#allocation2 + $0x18] sm:$0xff]
        %v348 = vunpack.c.l.b16 %v312
        %v349 = vunpack.c.h.b16 %v312
        %v350 = vunpack.c.l.b16 %v313
        %v351 = vunpack.c.h.b16 %v313
        %v352 = vunpack.c.l.b16 %v314
        %v353 = vunpack.c.h.b16 %v314
        %v354 = vunpack.c.l.b16 %v315
        %v355 = vunpack.c.h.b16 %v315
        %v356 = vunpack.c.l.b16 %v316
        %v357 = vunpack.c.h.b16 %v316
        %v358 = vunpack.c.l.b16 %v317
        %v359 = vunpack.c.h.b16 %v317
        %v360 = vunpack.c.l.b16 %v318
        %v361 = vunpack.c.h.b16 %v318
        %v362 = vunpack.c.l.b16 %v319
        %v363 = vunpack.c.h.b16 %v319
        %v364 = vunpack.c.l.b16 %v320
        %v365 = vunpack.c.h.b16 %v320
        %v366 = vunpack.c.l.b16 %v321
        %v367 = vunpack.c.h.b16 %v321
        %v368 = vunpack.c.l.b16 %v322
        %v369 = vunpack.c.h.b16 %v322
        %v370 = vunpack.c.l.b16 %v323
        %v371 = vunpack.c.h.b16 %v323
        %v372 = vunpack.c.l.b16 %v324
        %v373 = vunpack.c.h.b16 %v324
        %v374 = vunpack.c.l.b16 %v325
        %v375 = vunpack.c.h.b16 %v325
        %v376 = vunpack.c.l.b16 %v326
        %v377 = vunpack.c.h.b16 %v326
        %v378 = vunpack.c.l.b16 %v327
        %v379 = vunpack.c.h.b16 %v327
        %v380 = vpack.c.b16 %v350, %v348
        %v381 = vpack.c.b16 %v351, %v349
        %v382 = vpack.c.b16 %v354, %v352
        %v383 = vpack.c.b16 %v355, %v353
        %v384 = vpack.c.b16 %v358, %v356
        %v385 = vpack.c.b16 %v359, %v357
        %v386 = vpack.c.b16 %v362, %v360
        %v387 = vpack.c.b16 %v363, %v361
        %v388 = vpack.c.b16 %v366, %v364
        %v389 = vpack.c.b16 %v367, %v365
        %v390 = vpack.c.b16 %v370, %v368
        %v391 = vpack.c.b16 %v371, %v369
        %v392 = vpack.c.b16 %v374, %v372
        %v393 = vpack.c.b16 %v375, %v373
        %v394 = vpack.c.b16 %v378, %v376
        %v395 = vpack.c.b16 %v379, %v377
        %412 = vmatpush.bf16.msra.mxu0 %v394
        %413 = vmatpush.bf16.msra.mxu0 %v392
        %414 = vmatpush.bf16.msra.mxu0 %v390
        %415 = vmatpush.bf16.msra.mxu0 %v388
        %416 = vmatpush.bf16.msra.mxu0 %v386
        %417 = vmatpush.bf16.msra.mxu0 %v384
        %418 = vmatpush.bf16.msra.mxu0 %v382
        %419 = vmatpush.bf16.msra.mxu0 %v380
        %420 = vmatmul.bf16.gmra.mxu0 %v311
        %v421 = vpop.f32.mrf.mxu0
        %v422 = vadd.f32 0.0, %v421
        %v423 = vpop.f32.mrf.mxu0
        %v424 = vadd.f32 0.0, %v423
        %425 = vdwg.mxu0
        %426 = vmatpush.bf16.msra.mxu0 %v395
        %427 = vmatpush.bf16.msra.mxu0 %v393
        %428 = vmatpush.bf16.msra.mxu0 %v391
        %429 = vmatpush.bf16.msra.mxu0 %v389
        %430 = vmatpush.bf16.msra.mxu0 %v387
        %431 = vmatpush.bf16.msra.mxu0 %v385
        %432 = vmatpush.bf16.msra.mxu0 %v383
        %433 = vmatpush.bf16.msra.mxu0 %v381
        %434 = vmatmul.bf16.gmra.mxu0 %v311
        %v435 = vpop.f32.mrf.mxu0
        %v436 = vadd.f32 0.0, %v435
        %v437 = vpop.f32.mrf.mxu0
        %v438 = vadd.f32 0.0, %v437
        %439 = vdwg.mxu0
        %v440 = vadd.f32 %v328, %v422
        %v441 = vadd.f32 %v329, %v436
        %v442 = vadd.f32 %v330, %v424
        %v443 = vadd.f32 %v331, %v438
        %444 = vst [vmem:[#allocation2] sm:$0xff] %v440
        %445 = vst [vmem:[#allocation2 + $0x8] sm:$0xff] %v441
        %446 = vst [vmem:[#allocation2 + $0x10] sm:$0xff] %v442
        %447 = vst [vmem:[#allocation2 + $0x18] sm:$0xff] %v443
        %p448 = scmp.eq.s32.totalorder %s24, 4
        // Predicated region
        $region79: #{_lambda_.8} parent=65 // pred_check
          %p449 = pneg %p448
        $region80: #{_lambda_.8} parent=65 // pred_check_branch
          %451 = sbr.rel (%p449) target = $region82
        $region81: #{_lambda_.8} parent=65 // pred_region
          %v452 = vld [vmem:[#allocation2] sm:$0xff]
          %v453 = vld [vmem:[#allocation2 + $0x8] sm:$0xff]
          %v454 = vld [vmem:[#allocation2 + $0x10] sm:$0xff]
          %v455 = vld [vmem:[#allocation2 + $0x18] sm:$0xff]
          %v456 = vld [vmem:[%s297] sm:$0x3]
          %v458 = vperm.slane %v456, 0
          %v459 = vperm.slane %v456, 1
          %v462 = vadd.f32 %v452, %v458
          %v463 = vadd.f32 %v453, %v459
          %v464 = vadd.f32 %v454, %v458
          %v465 = vadd.f32 %v455, %v459
          %v466 = vmax.f32 %v462, 0.0
          %v467 = vmax.f32 %v463, 0.0
          %v468 = vmax.f32 %v464, 0.0
          %v469 = vmax.f32 %v465, 0.0
          %470 = vst [vmem:[%s290] sm:$0xff] %v466
          %471 = vst [vmem:[%s290 + $0x8] sm:$0xff] %v467
          %472 = vst [vmem:[%s290 + $0x10] sm:$0xff] %v468
          %473 = vst [vmem:[%s290 + $0x18] sm:$0xff] %v469
        $region82: #{_lambda_.8} parent=65 // pred_fallthru
          _
        %s474 = sand.u32 %s128, 1
        %s475 = sand.u32 %s128, 1
        %s476 = smul.addr %s475, 32
        %s477 = scalar_lea.vmem [#allocation6], %s476
        // Predicated region
        $region83: #{_lambda_.8} parent=65 // pred_check
          %p478 = pneg %p138
        $region84: #{_lambda_.8} parent=65 // pred_check_branch
          %480 = sbr.rel (%p478) target = $region86
        $region85: #{_lambda_.8} parent=65 // pred_region
          %s481 = smul.u32 2, %s22
          %s482 = smul.u32 2, %s23
          %s483 = smul.addr %s481, 4
          %s484 = sadd.s32 %s482, %s483
          %s485 = smul.addr %s484, 8
          %s486 = scalar_lea.vmem %s3, %s485
          // Predicated region
          $region87: #{_lambda_.8} parent=85 // pred_check
            _
          $region88: #{_lambda_.8} parent=85 // pred_check_branch
            %488 = sbr.rel (0) target = $region90
          $region89: #{_lambda_.8} parent=85 // pred_region
            // Predicated region
            $region91: #{_lambda_.8} parent=89 // pred_check
              _
            $region92: #{_lambda_.8} parent=89 // pred_check_branch
              %490 = sbr.rel (0) target = $region94
            $region93: #{_lambda_.8} parent=89 // pred_region
              loop: start=0, step=1, limit=1
              $region95: #{_lambda_.8} parent=93 // loop_pre_header
                _
              $region96: #{_lambda_.8} parent=93 // loop_header
                %s492 = sphi 0, %s496
                %p493 = scmp.ge.s32.totalorder %s492, 1
                %s497 = sphi %s477, %s477
                %s498 = sphi %s486, %s486
              $region97: #{_lambda_.8} parent=93 // loop_header_branch
                %495 = sbr.rel (%p493) target = $region101
              $region98: #{_lambda_.8} parent=93 // loop_body
                %v499 = vld [vmem:[%s497] sm:$0xff]
                %500 = vst [vmem:[%s498] sm:$0xff] %v499
                %v501 = vld [vmem:[%s497 + $0x8] sm:$0xff]
                %502 = vst [vmem:[%s498 + $0x8] sm:$0xff] %v501
                %v503 = vld [vmem:[%s497 + $0x10] sm:$0xff]
                %504 = vst [vmem:[%s498 + $0x20] sm:$0xff] %v503
                %v505 = vld [vmem:[%s497 + $0x18] sm:$0xff]
                %506 = vst [vmem:[%s498 + $0x28] sm:$0xff] %v505
              $region99: #{_lambda_.8} parent=93 // loop_footer
                %s496 = sadd.s32 1, %s492
              $region100: #{_lambda_.8} parent=93 // loop_footer_branch
                %491 = sbr.rel target = $region96
              $region101: #{_lambda_.8} parent=93 // loop_exit
                _
            $region94: #{_lambda_.8} parent=89 // pred_fallthru
              _
            // Predicated region
            $region102: #{_lambda_.8} parent=89 // pred_check
              _
            $region103: #{_lambda_.8} parent=89 // pred_check_branch
              %508 = sbr.rel target = $region105
            $region104: #{_lambda_.8} parent=89 // pred_region
              _
            $region105: #{_lambda_.8} parent=89 // pred_fallthru
              _
          $region90: #{_lambda_.8} parent=85 // pred_fallthru
            _
          %509 = vnop
        $region86: #{_lambda_.8} parent=65 // pred_fallthru
          _
      $region66: #{_lambda_.8} parent=5 // pred_fallthru
        _
      %p510 = scmp.le.s32.totalorder 2, %s12
      // Predicated region
      $region106: #{_lambda_.8} parent=5 // pred_check
        %p511 = pneg %p510
      $region107: #{_lambda_.8} parent=5 // pred_check_branch
        %513 = sbr.rel (%p511) target = $region109
      $region108: #{_lambda_.8} parent=5 // pred_region
        %s514 = ssub.s32 %s12, 2
        // Predicated region
        $region110: #{_lambda_.8} parent=108 // pred_check
          %p515 = pneg %p144
        $region111: #{_lambda_.8} parent=108 // pred_check_branch
          %517 = sbr.rel (%p515) target = $region113
        $region112: #{_lambda_.8} parent=108 // pred_region
          %s518 = sand.u32 %s129, 1
          %s519 = sand.u32 %s129, 1
          %s520 = smul.addr %s519, 32
          %s521 = scalar_lea.vmem [#allocation6], %s520
        $region113: #{_lambda_.8} parent=108 // pred_fallthru
          _
      $region109: #{_lambda_.8} parent=5 // pred_fallthru
        _
    $region6: #{_lambda_.8} parent=1 // loop_footer
      %s16 = sadd.s32 1, %s12
    $region7: #{_lambda_.8} parent=1 // loop_footer_branch
      %11 = sbr.rel target = $region3
    $region8: #{_lambda_.8} parent=1 // loop_exit
      _
    %522 = vsyncpa [#allocation5], 1
    %s523 = scalar_lea.sflag [#allocation5], 1
    %524 = vsyncpa %s523, 1

// kernel: _lambda_.9
$region0: #{_lambda_.9}
  #allocation0 [shape = 'u32[]', space=smem, size = 0x4, offset = 0x4, fixed_abs, tag = 'smem constant byte address 0x4 - core index']
  #allocation1 [shape = 'u32[72,128]{1,0:T(1,128)}', space=vmem, size = 0x9000, scoped, tag = 'internal scratch']
  #allocation2 [shape = 'f32[16,256]{1,0:T(8,128)}', space=vmem, size = 0x4000, scoped, tag = 'scratch operand']
  %s0 = inlined_call_operand.vmem [shape: f32[16,512], index: 0, kind: input, shape index: {}]
  %s1 = inlined_call_operand.hbm [shape: bf16[512,512], index: 1, kind: input, shape index: {}]
  %s2 = inlined_call_operand.vmem [shape: f32[16,512], index: 2, kind: output, shape index: {}]
  %s3 = sld [smem:[#allocation0]]
  $region95: #{_lambda_.9} parent=0
    _
  %s5 = ssub.s32 1, %s3
  %s6 = scalar_select 0, %s5, %s3
  $region1: #{_lambda_.9} parent=0
    #allocation3 [shape = 'u8[32768]{0}', space=vmem, size = 0x8000, scoped, tag = 'input window, operand 0']
    #allocation4 [shape = 'u8[262144]{0}', space=vmem, size = 0x40000, scoped, tag = 'input window, operand 1']
    #allocation5 [shape = 's32[2]{0}', space=sflag, size = 0x8, scoped, tag = 'scoped memory for _lambda_.9']
    #allocation6 [shape = 'u8[32768]{0}', space=vmem, size = 0x8000, scoped, tag = 'output window, operand 0']
    %7 = vsyncpa [#allocation5], 0
    %s8 = scalar_lea.sflag [#allocation5], 1
    %9 = vsyncpa %s8, 0
    loop: start=0, step=1, limit=6
    $region2: #{_lambda_.9} parent=1 // loop_pre_header
      _
    $region3: #{_lambda_.9} parent=1 // loop_header
      %s11 = sphi 0, %s15
      %p12 = scmp.ge.s32.totalorder %s11, 6
      %s18 = sphi 0, %s37
      %s19 = sphi 0, %s33
      %s20 = sphi 0, %s29
      %s21 = sphi 0, %s18
      %s22 = sphi 0, %s19
      %s23 = sphi 0, %s20
      %s24 = sphi 0, %s21
      %s25 = sphi 0, %s22
      %s26 = sphi 0, %s23
      %s42 = sphi 0, %s44
      %s45 = sphi 0, %s42
      %s46 = sphi 0, %s45
      %s62 = sphi 0, %s46
      %s70 = sphi 0, %s72
      %s73 = sphi 0, %s70
      %s74 = sphi 0, %s73
      %s90 = sphi 0, %s74
      %s98 = sphi 0, %s100
      %s101 = sphi 0, %s98
      %s102 = sphi 0, %s101
      %s118 = sphi 0, %s102
    $region4: #{_lambda_.9} parent=1 // loop_header_branch
      %14 = sbr.rel (%p12) target = $region8
    $region5: #{_lambda_.9} parent=1 // loop_body
      %s16 = ssub.s32 %s11, 1
      %s17 = ssub.s32 %s11, 2
      %s27 = sadd.s32 1, %s20
      %p28 = scmp.ge.s32.totalorder %s27, 2
      %s29 = scalar_select %p28, 0, %s27
      %s30 = sadd.s32 1, %s19
      %s31 = scalar_select %p28, %s30, %s19
      %p32 = scmp.ge.s32.totalorder %s31, 2
      %s33 = scalar_select %p32, 0, %s31
      %s34 = sadd.s32 1, %s18
      %s35 = scalar_select %p32, %s34, %s18
      %p36 = scmp.ge.s32.totalorder %s35, 1
      %s37 = scalar_select %p36, 0, %s35
      %s38 = ssub.s32 %s18, %s37
      %s39 = ssub.s32 %s20, %s29
      %s40 = sor.u32 %s38, %s39
      %p41 = scmp.eq.s32.totalorder %s40, 0
      %s43 = sadd.s32 %s42, 1
      %s44 = scalar_select %p41, %s42, %s43
      %p47 = pneg %p41
      %p48 = scmp.eq.s32.totalorder %s11, 3
      %p49 = por %p47, %p48
      %p50 = scmp.ne.s32.totalorder %s42, %s45
      %p51 = scmp.eq.s32.totalorder %s11, 0
      %p52 = por %p50, %p51
      %p53 = scmp.ne.s32.totalorder %s42, %s45
      %p54 = scmp.eq.s32.totalorder %s16, 3
      %p55 = por %p53, %p54
      %p56 = scmp.ne.s32.totalorder %s45, %s46
      %p57 = scmp.eq.s32.totalorder %s16, 0
      %p58 = por %p56, %p57
      %p59 = scmp.ne.s32.totalorder %s45, %s46
      %p60 = scmp.eq.s32.totalorder %s17, 3
      %p61 = por %p59, %p60
      %p63 = scmp.ne.s32.totalorder %s46, %s62
      %p64 = scmp.eq.s32.totalorder %s17, 0
      %p65 = por %p63, %p64
      %s66 = ssub.s32 %s20, %s29
      %s67 = ssub.s32 %s19, %s33
      %s68 = sor.u32 %s66, %s67
      %p69 = scmp.eq.s32.totalorder %s68, 0
      %s71 = sadd.s32 %s70, 1
      %s72 = scalar_select %p69, %s70, %s71
      %p75 = pneg %p69
      %p76 = scmp.eq.s32.totalorder %s11, 3
      %p77 = por %p75, %p76
      %p78 = scmp.ne.s32.totalorder %s70, %s73
      %p79 = scmp.eq.s32.totalorder %s11, 0
      %p80 = por %p78, %p79
      %p81 = scmp.ne.s32.totalorder %s70, %s73
      %p82 = scmp.eq.s32.totalorder %s16, 3
      %p83 = por %p81, %p82
      %p84 = scmp.ne.s32.totalorder %s73, %s74
      %p85 = scmp.eq.s32.totalorder %s16, 0
      %p86 = por %p84, %p85
      %p87 = scmp.ne.s32.totalorder %s73, %s74
      %p88 = scmp.eq.s32.totalorder %s17, 3
      %p89 = por %p87, %p88
      %p91 = scmp.ne.s32.totalorder %s74, %s90
      %p92 = scmp.eq.s32.totalorder %s17, 0
      %p93 = por %p91, %p92
      %s94 = ssub.s32 %s18, %s37
      %s95 = ssub.s32 %s19, %s33
      %s96 = sor.u32 %s94, %s95
      %p97 = scmp.eq.s32.totalorder %s96, 0
      %s99 = sadd.s32 %s98, 1
      %s100 = scalar_select %p97, %s98, %s99
      %p103 = pneg %p97
      %p104 = scmp.eq.s32.totalorder %s11, 3
      %p105 = por %p103, %p104
      %p106 = scmp.ne.s32.totalorder %s98, %s101
      %p107 = scmp.eq.s32.totalorder %s11, 0
      %p108 = por %p106, %p107
      %p109 = scmp.ne.s32.totalorder %s98, %s101
      %p110 = scmp.eq.s32.totalorder %s16, 3
      %p111 = por %p109, %p110
      %p112 = scmp.ne.s32.totalorder %s101, %s102
      %p113 = scmp.eq.s32.totalorder %s16, 0
      %p114 = por %p112, %p113
      %p115 = scmp.ne.s32.totalorder %s101, %s102
      %p116 = scmp.eq.s32.totalorder %s17, 3
      %p117 = por %p115, %p116
      %p119 = scmp.ne.s32.totalorder %s102, %s118
      %p120 = scmp.eq.s32.totalorder %s17, 0
      %p121 = por %p119, %p120
      %p122 = scmp.le.s32.totalorder 1, %s11
      %p123 = scmp.lt.s32.totalorder %s11, 5
      %p124 = pnand %p122, %p123
      %p125 = pneg %p124
      // Predicated region
      $region9: #{_lambda_.9} parent=5 // pred_check
        _
      $region10: #{_lambda_.9} parent=5 // pred_check_branch
        %127 = sbr.rel (%p124) target = $region12
      $region11: #{_lambda_.9} parent=5 // pred_region
        %s128 = ssub.s32 %s11, 1
      $region12: #{_lambda_.9} parent=5 // pred_fallthru
        _
      %p129 = scmp.lt.s32.totalorder %s11, 4
      // Predicated region
      $region13: #{_lambda_.9} parent=5 // pred_check
        %p130 = pneg %p129
      $region14: #{_lambda_.9} parent=5 // pred_check_branch
        %132 = sbr.rel (%p130) target = $region16
      $region15: #{_lambda_.9} parent=5 // pred_region
        // Predicated region
        $region17: #{_lambda_.9} parent=15 // pred_check
          %p133 = pneg %p52
        $region18: #{_lambda_.9} parent=15 // pred_check_branch
          %135 = sbr.rel (%p133) target = $region20
        $region19: #{_lambda_.9} parent=15 // pred_region
          %s136 = sand.u32 %s42, 1
          %s137 = sand.u32 %s42, 1
          %s138 = smul.addr %s137, 32
          %s139 = scalar_lea.vmem [#allocation3], %s138
          %s140 = smul.u32 2, %s18
          %s141 = smul.u32 2, %s20
          %s142 = smul.addr %s140, 4
          %s143 = sadd.s32 %s141, %s142
          %s144 = smul.addr %s143, 8
          %s145 = scalar_lea.vmem %s0, %s144
          // Predicated region
          $region21: #{_lambda_.9} parent=19 // pred_check
            _
          $region22: #{_lambda_.9} parent=19 // pred_check_branch
            %147 = sbr.rel (0) target = $region24
          $region23: #{_lambda_.9} parent=19 // pred_region
            // Predicated region
            $region25: #{_lambda_.9} parent=23 // pred_check
              _
            $region26: #{_lambda_.9} parent=23 // pred_check_branch
              %149 = sbr.rel (0) target = $region28
            $region27: #{_lambda_.9} parent=23 // pred_region
              loop: start=0, step=1, limit=1
              $region29: #{_lambda_.9} parent=27 // loop_pre_header
                _
              $region30: #{_lambda_.9} parent=27 // loop_header
                %s151 = sphi 0, %s155
                %p152 = scmp.ge.s32.totalorder %s151, 1
                %s156 = sphi %s145, %s145
                %s157 = sphi %s139, %s139
              $region31: #{_lambda_.9} parent=27 // loop_header_branch
                %154 = sbr.rel (%p152) target = $region35
              $region32: #{_lambda_.9} parent=27 // loop_body
                %v158 = vld [vmem:[%s156] sm:$0xff]
                %159 = vst [vmem:[%s157] sm:$0xff] %v158
                %v160 = vld [vmem:[%s156 + $0x8] sm:$0xff]
                %161 = vst [vmem:[%s157 + $0x8] sm:$0xff] %v160
                %v162 = vld [vmem:[%s156 + $0x20] sm:$0xff]
                %163 = vst [vmem:[%s157 + $0x10] sm:$0xff] %v162
                %v164 = vld [vmem:[%s156 + $0x28] sm:$0xff]
                %165 = vst [vmem:[%s157 + $0x18] sm:$0xff] %v164
              $region33: #{_lambda_.9} parent=27 // loop_footer
                %s155 = sadd.s32 1, %s151
              $region34: #{_lambda_.9} parent=27 // loop_footer_branch
                %150 = sbr.rel target = $region30
              $region35: #{_lambda_.9} parent=27 // loop_exit
                _
            $region28: #{_lambda_.9} parent=23 // pred_fallthru
              _
            // Predicated region
            $region36: #{_lambda_.9} parent=23 // pred_check
              _
            $region37: #{_lambda_.9} parent=23 // pred_check_branch
              %167 = sbr.rel target = $region39
            $region38: #{_lambda_.9} parent=23 // pred_region
              _
            $region39: #{_lambda_.9} parent=23 // pred_fallthru
              _
          $region24: #{_lambda_.9} parent=19 // pred_fallthru
            _
          %168 = vnop
        $region20: #{_lambda_.9} parent=15 // pred_fallthru
          _
        // Predicated region
        $region40: #{_lambda_.9} parent=15 // pred_check
          %p169 = pneg %p80
        $region41: #{_lambda_.9} parent=15 // pred_check_branch
          %171 = sbr.rel (%p169) target = $region43
        $region42: #{_lambda_.9} parent=15 // pred_region
          %s172 = sand.u32 %s70, 1
          %s173 = scalar_lea.sflag [#allocation5], %s172
          %s174 = sand.u32 %s70, 1
          %s175 = smul.addr %s174, 256
          %s176 = scalar_lea.vmem [#allocation4], %s175
          %s177 = smul.u32 32, %s20
          %s178 = smul.u32 2, %s19
          %180 = vsyncadd %s173, 0
          %s181 = smul.addr %s177, 4
          %s182 = sadd.s32 %s178, %s181
          %s183 = smul.addr %s182, 4
          %s184 = scalar_lea.hbm %s1, %s183
          %s185 = sshll.u32 %s184, 4
          %s186 = int_to_ptr.hbm [resolvable:$true] %s185
          %s187 = sshll.u32 %s176, 4
          %s188 = int_to_ptr.vmem [resolvable:$true] %s187
          %193 = dma.hbm_to_vmem [thread:$0]  %s186, 4096, %s188, %s173, 256, 128, 8
        $region43: #{_lambda_.9} parent=15 // pred_fallthru
          _
      $region16: #{_lambda_.9} parent=5 // pred_fallthru
        _
      %p194 = scmp.le.s32.totalorder 1, %s11
      %p195 = scmp.lt.s32.totalorder %s11, 5
      %p196 = pnand %p194, %p195
      %p197 = pneg %p196
      // Predicated region
      $region44: #{_lambda_.9} parent=5 // pred_check
        _
      $region45: #{_lambda_.9} parent=5 // pred_check_branch
        %199 = sbr.rel (%p196) target = $region47
      $region46: #{_lambda_.9} parent=5 // pred_region
        %s200 = ssub.s32 %s11, 1
        %s201 = sand.u32 %s45, 1
        %s202 = sand.u32 %s45, 1
        %s203 = smul.addr %s202, 32
        %s204 = scalar_lea.vmem [#allocation3], %s203
        // Predicated region
        $region48: #{_lambda_.9} parent=46 // pred_check
          %p205 = pneg %p58
        $region49: #{_lambda_.9} parent=46 // pred_check_branch
          %207 = sbr.rel (%p205) target = $region51
        $region50: #{_lambda_.9} parent=46 // pred_region
          _
        $region51: #{_lambda_.9} parent=46 // pred_fallthru
          _
        %s208 = sand.u32 %s73, 1
        %s209 = scalar_lea.sflag [#allocation5], %s208
        %s210 = sand.u32 %s73, 1
        %s211 = smul.addr %s210, 256
        %s212 = scalar_lea.vmem [#allocation4], %s211
        // Predicated region
        $region52: #{_lambda_.9} parent=46 // pred_check
          %p213 = pneg %p86
        $region53: #{_lambda_.9} parent=46 // pred_check_branch
          %215 = sbr.rel (%p213) target = $region55
        $region54: #{_lambda_.9} parent=46 // pred_region
          %217 = dma.done %s209, 4096
        $region55: #{_lambda_.9} parent=46 // pred_fallthru
          _
        %s218 = sand.u32 %s45, 1
        %s219 = sand.u32 %s45, 1
        %s220 = smul.addr %s219, 32
        %s221 = scalar_lea.vmem [#allocation3], %s220
        %p222 = pneg %p58
        %p223 = pneg %p55
        %s224 = sand.u32 %s73, 1
        %s225 = scalar_lea.sflag [#allocation5], %s224
        %s226 = sand.u32 %s73, 1
        %s227 = smul.addr %s226, 256
        %s228 = scalar_lea.vmem [#allocation4], %s227
        %p229 = pneg %p86
        %p230 = pneg %p83
        %p231 = pneg %p114
        %p232 = pneg %p111
        %s233 = sand.u32 %s101, 1
        %s234 = sand.u32 %s101, 1
        %s235 = smul.addr %s234, 32
        %s236 = scalar_lea.vmem [#allocation6], %s235
        %s237 = smul.u32 2, %s21
        %s238 = smul.u32 2, %s23
        %s239 = smul.u32 32, %s23
        %s240 = smul.u32 2, %s22
        %s241 = smul.u32 2, %s21
        %s242 = smul.u32 2, %s22
        %p243 = scmp.eq.s32.totalorder %s23, 0
        // Predicated region
        $region56: #{_lambda_.9} parent=46 // pred_check
          %p244 = pneg %p243
        $region57: #{_lambda_.9} parent=46 // pred_check_branch
          %246 = sbr.rel (%p244) target = $region59
        $region58: #{_lambda_.9} parent=46 // pred_region
          %247 = vst [vmem:[#allocation2] sm:$0xff] 0.0
          %248 = vst [vmem:[#allocation2 + $0x8] sm:$0xff] 0.0
          %249 = vst [vmem:[#allocation2 + $0x10] sm:$0xff] 0.0
          %250 = vst [vmem:[#allocation2 + $0x18] sm:$0xff] 0.0
        $region59: #{_lambda_.9} parent=46 // pred_fallthru
          _
        %v251 = vld [vmem:[%s204] sm:$0xff]
        %v252 = vld [vmem:[%s204 + $0x8] sm:$0xff]
        %v253 = vld [vmem:[%s204 + $0x10] sm:$0xff]
        %v254 = vld [vmem:[%s204 + $0x18] sm:$0xff]
        %v255 = vpack.c.bf16 %v253, %v251
        %v256 = vpack.c.bf16 %v254, %v252
        %v257 = vld [vmem:[%s212] sm:$0xff]
        %v258 = vld [vmem:[%s212 + $0x8] sm:$0xff]
        %v259 = vld [vmem:[%s212 + $0x10] sm:$0xff]
        %v260 = vld [vmem:[%s212 + $0x18] sm:$0xff]
        %v261 = vld [vmem:[%s212 + $0x20] sm:$0xff]
        %v262 = vld [vmem:[%s212 + $0x28] sm:$0xff]
        %v263 = vld [vmem:[%s212 + $0x30] sm:$0xff]
        %v264 = vld [vmem:[%s212 + $0x38] sm:$0xff]
        %v265 = vld [vmem:[%s212 + $0x40] sm:$0xff]
        %v266 = vld [vmem:[%s212 + $0x48] sm:$0xff]
        %v267 = vld [vmem:[%s212 + $0x50] sm:$0xff]
        %v268 = vld [vmem:[%s212 + $0x58] sm:$0xff]
        %v269 = vld [vmem:[%s212 + $0x60] sm:$0xff]
        %v270 = vld [vmem:[%s212 + $0x68] sm:$0xff]
        %v271 = vld [vmem:[%s212 + $0x70] sm:$0xff]
        %v272 = vld [vmem:[%s212 + $0x78] sm:$0xff]
        %v273 = vld [vmem:[%s212 + $0x80] sm:$0xff]
        %v274 = vld [vmem:[%s212 + $0x88] sm:$0xff]
        %v275 = vld [vmem:[%s212 + $0x90] sm:$0xff]
        %v276 = vld [vmem:[%s212 + $0x98] sm:$0xff]
        %v277 = vld [vmem:[%s212 + $0xa0] sm:$0xff]
        %v278 = vld [vmem:[%s212 + $0xa8] sm:$0xff]
        %v279 = vld [vmem:[%s212 + $0xb0] sm:$0xff]
        %v280 = vld [vmem:[%s212 + $0xb8] sm:$0xff]
        %v281 = vld [vmem:[%s212 + $0xc0] sm:$0xff]
        %v282 = vld [vmem:[%s212 + $0xc8] sm:$0xff]
        %v283 = vld [vmem:[%s212 + $0xd0] sm:$0xff]
        %v284 = vld [vmem:[%s212 + $0xd8] sm:$0xff]
        %v285 = vld [vmem:[%s212 + $0xe0] sm:$0xff]
        %v286 = vld [vmem:[%s212 + $0xe8] sm:$0xff]
        %v287 = vld [vmem:[%s212 + $0xf0] sm:$0xff]
        %v288 = vld [vmem:[%s212 + $0xf8] sm:$0xff]
        %v289 = vld [vmem:[#allocation2] sm:$0xff]
        %v290 = vld [vmem:[#allocation2 + $0x8] sm:$0xff]
        %v291 = vld [vmem:[#allocation2 + $0x10] sm:$0xff]
        %v292 = vld [vmem:[#allocation2 + $0x18] sm:$0xff]
        %v325 = vunpack.c.l.b16 %v257
        %v326 = vunpack.c.h.b16 %v257
        %v327 = vunpack.c.l.b16 %v258
        %v328 = vunpack.c.h.b16 %v258
        %v329 = vunpack.c.l.b16 %v259
        %v330 = vunpack.c.h.b16 %v259
        %v331 = vunpack.c.l.b16 %v260
        %v332 = vunpack.c.h.b16 %v260
        %v333 = vunpack.c.l.b16 %v261
        %v334 = vunpack.c.h.b16 %v261
        %v335 = vunpack.c.l.b16 %v262
        %v336 = vunpack.c.h.b16 %v262
        %v337 = vunpack.c.l.b16 %v263
        %v338 = vunpack.c.h.b16 %v263
        %v339 = vunpack.c.l.b16 %v264
        %v340 = vunpack.c.h.b16 %v264
        %v341 = vunpack.c.l.b16 %v265
        %v342 = vunpack.c.h.b16 %v265
        %v343 = vunpack.c.l.b16 %v266
        %v344 = vunpack.c.h.b16 %v266
        %v345 = vunpack.c.l.b16 %v267
        %v346 = vunpack.c.h.b16 %v267
        %v347 = vunpack.c.l.b16 %v268
        %v348 = vunpack.c.h.b16 %v268
        %v349 = vunpack.c.l.b16 %v269
        %v350 = vunpack.c.h.b16 %v269
        %v351 = vunpack.c.l.b16 %v270
        %v352 = vunpack.c.h.b16 %v270
        %v353 = vunpack.c.l.b16 %v271
        %v354 = vunpack.c.h.b16 %v271
        %v355 = vunpack.c.l.b16 %v272
        %v356 = vunpack.c.h.b16 %v272
        %v357 = vunpack.c.l.b16 %v273
        %v358 = vunpack.c.h.b16 %v273
        %v359 = vunpack.c.l.b16 %v274
        %v360 = vunpack.c.h.b16 %v274
        %v361 = vunpack.c.l.b16 %v275
        %v362 = vunpack.c.h.b16 %v275
        %v363 = vunpack.c.l.b16 %v276
        %v364 = vunpack.c.h.b16 %v276
        %v365 = vunpack.c.l.b16 %v277
        %v366 = vunpack.c.h.b16 %v277
        %v367 = vunpack.c.l.b16 %v278
        %v368 = vunpack.c.h.b16 %v278
        %v369 = vunpack.c.l.b16 %v279
        %v370 = vunpack.c.h.b16 %v279
        %v371 = vunpack.c.l.b16 %v280
        %v372 = vunpack.c.h.b16 %v280
        %v373 = vunpack.c.l.b16 %v281
        %v374 = vunpack.c.h.b16 %v281
        %v375 = vunpack.c.l.b16 %v282
        %v376 = vunpack.c.h.b16 %v282
        %v377 = vunpack.c.l.b16 %v283
        %v378 = vunpack.c.h.b16 %v283
        %v379 = vunpack.c.l.b16 %v284
        %v380 = vunpack.c.h.b16 %v284
        %v381 = vunpack.c.l.b16 %v285
        %v382 = vunpack.c.h.b16 %v285
        %v383 = vunpack.c.l.b16 %v286
        %v384 = vunpack.c.h.b16 %v286
        %v385 = vunpack.c.l.b16 %v287
        %v386 = vunpack.c.h.b16 %v287
        %v387 = vunpack.c.l.b16 %v288
        %v388 = vunpack.c.h.b16 %v288
        %v389 = vpack.c.b16 %v327, %v325
        %v390 = vpack.c.b16 %v328, %v326
        %v391 = vpack.c.b16 %v331, %v329
        %v392 = vpack.c.b16 %v332, %v330
        %v393 = vpack.c.b16 %v335, %v333
        %v394 = vpack.c.b16 %v336, %v334
        %v395 = vpack.c.b16 %v339, %v337
        %v396 = vpack.c.b16 %v340, %v338
        %v397 = vpack.c.b16 %v343, %v341
        %v398 = vpack.c.b16 %v344, %v342
        %v399 = vpack.c.b16 %v347, %v345
        %v400 = vpack.c.b16 %v348, %v346
        %v401 = vpack.c.b16 %v351, %v349
        %v402 = vpack.c.b16 %v352, %v350
        %v403 = vpack.c.b16 %v355, %v353
        %v404 = vpack.c.b16 %v356, %v354
        %v405 = vpack.c.b16 %v359, %v357
        %v406 = vpack.c.b16 %v360, %v358
        %v407 = vpack.c.b16 %v363, %v361
        %v408 = vpack.c.b16 %v364, %v362
        %v409 = vpack.c.b16 %v367, %v365
        %v410 = vpack.c.b16 %v368, %v366
        %v411 = vpack.c.b16 %v371, %v369
        %v412 = vpack.c.b16 %v372, %v370
        %v413 = vpack.c.b16 %v375, %v373
        %v414 = vpack.c.b16 %v376, %v374
        %v415 = vpack.c.b16 %v379, %v377
        %v416 = vpack.c.b16 %v380, %v378
        %v417 = vpack.c.b16 %v383, %v381
        %v418 = vpack.c.b16 %v384, %v382
        %v419 = vpack.c.b16 %v387, %v385
        %v420 = vpack.c.b16 %v388, %v386
        %453 = vmatpush.bf16.msra.mxu0 %v403
        %454 = vmatpush.bf16.msra.mxu0 %v401
        %455 = vmatpush.bf16.msra.mxu0 %v399
        %456 = vmatpush.bf16.msra.mxu0 %v397
        %457 = vmatpush.bf16.msra.mxu0 %v395
        %458 = vmatpush.bf16.msra.mxu0 %v393
        %459 = vmatpush.bf16.msra.mxu0 %v391
        %460 = vmatpush.bf16.msra.mxu0 %v389
        %461 = vmatmul.bf16.gmra.mxu0 %v255
        %v462 = vpop.f32.mrf.mxu0
        %v463 = vadd.f32 0.0, %v462
        %v464 = vpop.f32.mrf.mxu0
        %v465 = vadd.f32 0.0, %v464
        %466 = vdwg.mxu0
        %467 = vmatpush.bf16.msra.mxu0 %v419
        %468 = vmatpush.bf16.msra.mxu0 %v417
        %469 = vmatpush.bf16.msra.mxu0 %v415
        %470 = vmatpush.bf16.msra.mxu0 %v413
        %471 = vmatpush.bf16.msra.mxu0 %v411
        %472 = vmatpush.bf16.msra.mxu0 %v409
        %473 = vmatpush.bf16.msra.mxu0 %v407
        %474 = vmatpush.bf16.msra.mxu0 %v405
        %475 = vmatmul.bf16.gmra.mxu0 %v256
        %v476 = vpop.f32.mrf.mxu0
        %v477 = vadd.f32 %v463, %v476
        %v478 = vpop.f32.mrf.mxu0
        %v479 = vadd.f32 %v465, %v478
        %480 = vdwg.mxu0
        %481 = vmatpush.bf16.msra.mxu0 %v404
        %482 = vmatpush.bf16.msra.mxu0 %v402
        %483 = vmatpush.bf16.msra.mxu0 %v400
        %484 = vmatpush.bf16.msra.mxu0 %v398
        %485 = vmatpush.bf16.msra.mxu0 %v396
        %486 = vmatpush.bf16.msra.mxu0 %v394
        %487 = vmatpush.bf16.msra.mxu0 %v392
        %488 = vmatpush.bf16.msra.mxu0 %v390
        %489 = vmatmul.bf16.gmra.mxu0 %v255
        %v490 = vpop.f32.mrf.mxu0
        %v491 = vadd.f32 0.0, %v490
        %v492 = vpop.f32.mrf.mxu0
        %v493 = vadd.f32 0.0, %v492
        %494 = vdwg.mxu0
        %495 = vmatpush.bf16.msra.mxu0 %v420
        %496 = vmatpush.bf16.msra.mxu0 %v418
        %497 = vmatpush.bf16.msra.mxu0 %v416
        %498 = vmatpush.bf16.msra.mxu0 %v414
        %499 = vmatpush.bf16.msra.mxu0 %v412
        %500 = vmatpush.bf16.msra.mxu0 %v410
        %501 = vmatpush.bf16.msra.mxu0 %v408
        %502 = vmatpush.bf16.msra.mxu0 %v406
        %503 = vmatmul.bf16.gmra.mxu0 %v256
        %v504 = vpop.f32.mrf.mxu0
        %v505 = vadd.f32 %v491, %v504
        %v506 = vpop.f32.mrf.mxu0
        %v507 = vadd.f32 %v493, %v506
        %508 = vdwg.mxu0
        %v509 = vadd.f32 %v289, %v477
        %v510 = vadd.f32 %v290, %v505
        %v511 = vadd.f32 %v291, %v479
        %v512 = vadd.f32 %v292, %v507
        %513 = vst [vmem:[#allocation2] sm:$0xff] %v509
        %514 = vst [vmem:[#allocation2 + $0x8] sm:$0xff] %v510
        %515 = vst [vmem:[#allocation2 + $0x10] sm:$0xff] %v511
        %516 = vst [vmem:[#allocation2 + $0x18] sm:$0xff] %v512
        %p517 = scmp.eq.s32.totalorder %s23, 1
        // Predicated region
        $region60: #{_lambda_.9} parent=46 // pred_check
          %p518 = pneg %p517
        $region61: #{_lambda_.9} parent=46 // pred_check_branch
          %520 = sbr.rel (%p518) target = $region63
        $region62: #{_lambda_.9} parent=46 // pred_region
          %v521 = vld [vmem:[#allocation2] sm:$0xff]
          %v522 = vld [vmem:[#allocation2 + $0x8] sm:$0xff]
          %v523 = vld [vmem:[#allocation2 + $0x10] sm:$0xff]
          %v524 = vld [vmem:[#allocation2 + $0x18] sm:$0xff]
          %525 = vst [vmem:[%s236] sm:$0xff] %v521
          %526 = vst [vmem:[%s236 + $0x8] sm:$0xff] %v522
          %527 = vst [vmem:[%s236 + $0x10] sm:$0xff] %v523
          %528 = vst [vmem:[%s236 + $0x18] sm:$0xff] %v524
        $region63: #{_lambda_.9} parent=46 // pred_fallthru
          _
        %s529 = sand.u32 %s101, 1
        %s530 = sand.u32 %s101, 1
        %s531 = smul.addr %s530, 32
        %s532 = scalar_lea.vmem [#allocation6], %s531
        // Predicated region
        $region64: #{_lambda_.9} parent=46 // pred_check
          %p533 = pneg %p111
        $region65: #{_lambda_.9} parent=46 // pred_check_branch
          %535 = sbr.rel (%p533) target = $region67
        $region66: #{_lambda_.9} parent=46 // pred_region
          %s536 = smul.u32 2, %s21
          %s537 = smul.u32 2, %s22
          %s538 = smul.addr %s536, 4
          %s539 = sadd.s32 %s537, %s538
          %s540 = smul.addr %s539, 8
          %s541 = scalar_lea.vmem %s2, %s540
          // Predicated region
          $region68: #{_lambda_.9} parent=66 // pred_check
            _
          $region69: #{_lambda_.9} parent=66 // pred_check_branch
            %543 = sbr.rel (0) target = $region71
          $region70: #{_lambda_.9} parent=66 // pred_region
            // Predicated region
            $region72: #{_lambda_.9} parent=70 // pred_check
              _
            $region73: #{_lambda_.9} parent=70 // pred_check_branch
              %545 = sbr.rel (0) target = $region75
            $region74: #{_lambda_.9} parent=70 // pred_region
              loop: start=0, step=1, limit=1
              $region76: #{_lambda_.9} parent=74 // loop_pre_header
                _
              $region77: #{_lambda_.9} parent=74 // loop_header
                %s547 = sphi 0, %s551
                %p548 = scmp.ge.s32.totalorder %s547, 1
                %s552 = sphi %s532, %s532
                %s553 = sphi %s541, %s541
              $region78: #{_lambda_.9} parent=74 // loop_header_branch
                %550 = sbr.rel (%p548) target = $region82
              $region79: #{_lambda_.9} parent=74 // loop_body
                %v554 = vld [vmem:[%s552] sm:$0xff]
                %555 = vst [vmem:[%s553] sm:$0xff] %v554
                %v556 = vld [vmem:[%s552 + $0x8] sm:$0xff]
                %557 = vst [vmem:[%s553 + $0x8] sm:$0xff] %v556
                %v558 = vld [vmem:[%s552 + $0x10] sm:$0xff]
                %559 = vst [vmem:[%s553 + $0x20] sm:$0xff] %v558
                %v560 = vld [vmem:[%s552 + $0x18] sm:$0xff]
                %561 = vst [vmem:[%s553 + $0x28] sm:$0xff] %v560
              $region80: #{_lambda_.9} parent=74 // loop_footer
                %s551 = sadd.s32 1, %s547
              $region81: #{_lambda_.9} parent=74 // loop_footer_branch
                %546 = sbr.rel target = $region77
              $region82: #{_lambda_.9} parent=74 // loop_exit
                _
            $region75: #{_lambda_.9} parent=70 // pred_fallthru
              _
            // Predicated region
            $region83: #{_lambda_.9} parent=70 // pred_check
              _
            $region84: #{_lambda_.9} parent=70 // pred_check_branch
              %563 = sbr.rel target = $region86
            $region85: #{_lambda_.9} parent=70 // pred_region
              _
            $region86: #{_lambda_.9} parent=70 // pred_fallthru
              _
          $region71: #{_lambda_.9} parent=66 // pred_fallthru
            _
          %564 = vnop
        $region67: #{_lambda_.9} parent=46 // pred_fallthru
          _
      $region47: #{_lambda_.9} parent=5 // pred_fallthru
        _
      %p565 = scmp.le.s32.totalorder 2, %s11
      // Predicated region
      $region87: #{_lambda_.9} parent=5 // pred_check
        %p566 = pneg %p565
      $region88: #{_lambda_.9} parent=5 // pred_check_branch
        %568 = sbr.rel (%p566) target = $region90
      $region89: #{_lambda_.9} parent=5 // pred_region
        %s569 = ssub.s32 %s11, 2
        // Predicated region
        $region91: #{_lambda_.9} parent=89 // pred_check
          %p570 = pneg %p117
        $region92: #{_lambda_.9} parent=89 // pred_check_branch
          %572 = sbr.rel (%p570) target = $region94
        $region93: #{_lambda_.9} parent=89 // pred_region
          %s573 = sand.u32 %s102, 1
          %s574 = sand.u32 %s102, 1
          %s575 = smul.addr %s574, 32
          %s576 = scalar_lea.vmem [#allocation6], %s575
        $region94: #{_lambda_.9} parent=89 // pred_fallthru
          _
      $region90: #{_lambda_.9} parent=5 // pred_fallthru
        _
    $region6: #{_lambda_.9} parent=1 // loop_footer
      %s15 = sadd.s32 1, %s11
    $region7: #{_lambda_.9} parent=1 // loop_footer_branch
      %10 = sbr.rel target = $region3
    $region8: #{_lambda_.9} parent=1 // loop_exit
      _
    %577 = vsyncpa [#allocation5], 1
    %s578 = scalar_lea.sflag [#allocation5], 1
    %579 = vsyncpa %s578, 1

// kernel: _lambda_.10
$region0: #{_lambda_.10}
  #allocation0 [shape = 'u32[]', space=smem, size = 0x4, offset = 0x4, fixed_abs, tag = 'smem constant byte address 0x4 - core index']
  #allocation1 [shape = 'u32[72,128]{1,0:T(1,128)}', space=vmem, size = 0x9000, scoped, tag = 'internal scratch']
  #allocation2 [shape = 'f32[16,16]{1,0:T(8,128)}', space=vmem, size = 0x2000, scoped, tag = 'scratch operand']
  %s0 = inlined_call_operand.vmem [shape: f32[16,512], index: 0, kind: input, shape index: {}]
  %s1 = inlined_call_operand.vmem [shape: bf16[512,16], index: 1, kind: input, shape index: {}]
  %s2 = inlined_call_operand.vmem [shape: f32[16,16], index: 2, kind: output, shape index: {}]
  %s3 = sld [smem:[#allocation0]]
  $region72: #{_lambda_.10} parent=0
    _
  %s5 = ssub.s32 1, %s3
  %s6 = scalar_select 0, %s5, %s3
  $region1: #{_lambda_.10} parent=0
    #allocation3 [shape = 'u8[32768]{0}', space=vmem, size = 0x8000, scoped, tag = 'input window, operand 0']
    loop: start=0, step=1, limit=4
    $region2: #{_lambda_.10} parent=1 // loop_pre_header
      _
    $region3: #{_lambda_.10} parent=1 // loop_header
      %s8 = sphi 0, %s12
      %p9 = scmp.ge.s32.totalorder %s8, 4
      %s15 = sphi 0, %s34
      %s16 = sphi 0, %s30
      %s17 = sphi 0, %s26
      %s18 = sphi 0, %s15
      %s19 = sphi 0, %s16
      %s20 = sphi 0, %s17
      %s21 = sphi 0, %s18
      %s22 = sphi 0, %s19
      %s23 = sphi 0, %s20
      %s39 = sphi 0, %s41
      %s42 = sphi 0, %s39
      %s43 = sphi 0, %s42
      %s59 = sphi 0, %s43
      %s67 = sphi 0, %s69
      %s70 = sphi 0, %s67
      %s71 = sphi 0, %s70
      %s87 = sphi 0, %s71
      %s95 = sphi 0, %s97
      %s98 = sphi 0, %s95
      %s99 = sphi 0, %s98
      %s115 = sphi 0, %s99
    $region4: #{_lambda_.10} parent=1 // loop_header_branch
      %11 = sbr.rel (%p9) target = $region8
    $region5: #{_lambda_.10} parent=1 // loop_body
      %s13 = ssub.s32 %s8, 1
      %s14 = ssub.s32 %s8, 2
      %s24 = sadd.s32 1, %s17
      %p25 = scmp.ge.s32.totalorder %s24, 2
      %s26 = scalar_select %p25, 0, %s24
      %s27 = sadd.s32 1, %s16
      %s28 = scalar_select %p25, %s27, %s16
      %p29 = scmp.ge.s32.totalorder %s28, 1
      %s30 = scalar_select %p29, 0, %s28
      %s31 = sadd.s32 1, %s15
      %s32 = scalar_select %p29, %s31, %s15
      %p33 = scmp.ge.s32.totalorder %s32, 1
      %s34 = scalar_select %p33, 0, %s32
      %s35 = ssub.s32 %s15, %s34
      %s36 = ssub.s32 %s17, %s26
      %s37 = sor.u32 %s35, %s36
      %p38 = scmp.eq.s32.totalorder %s37, 0
      %s40 = sadd.s32 %s39, 1
      %s41 = scalar_select %p38, %s39, %s40
      %p44 = pneg %p38
      %p45 = scmp.eq.s32.totalorder %s8, 1
      %p46 = por %p44, %p45
      %p47 = scmp.ne.s32.totalorder %s39, %s42
      %p48 = scmp.eq.s32.totalorder %s8, 0
      %p49 = por %p47, %p48
      %p50 = scmp.ne.s32.totalorder %s39, %s42
      %p51 = scmp.eq.s32.totalorder %s13, 1
      %p52 = por %p50, %p51
      %p53 = scmp.ne.s32.totalorder %s42, %s43
      %p54 = scmp.eq.s32.totalorder %s13, 0
      %p55 = por %p53, %p54
      %p56 = scmp.ne.s32.totalorder %s42, %s43
      %p57 = scmp.eq.s32.totalorder %s14, 1
      %p58 = por %p56, %p57
      %p60 = scmp.ne.s32.totalorder %s43, %s59
      %p61 = scmp.eq.s32.totalorder %s14, 0
      %p62 = por %p60, %p61
      %s63 = ssub.s32 %s17, %s26
      %s64 = ssub.s32 %s16, %s30
      %s65 = sor.u32 %s63, %s64
      %p66 = scmp.eq.s32.totalorder %s65, 0
      %s68 = sadd.s32 %s67, 1
      %s69 = scalar_select %p66, %s67, %s68
      %p72 = pneg %p66
      %p73 = scmp.eq.s32.totalorder %s8, 1
      %p74 = por %p72, %p73
      %p75 = scmp.ne.s32.totalorder %s67, %s70
      %p76 = scmp.eq.s32.totalorder %s8, 0
      %p77 = por %p75, %p76
      %p78 = scmp.ne.s32.totalorder %s67, %s70
      %p79 = scmp.eq.s32.totalorder %s13, 1
      %p80 = por %p78, %p79
      %p81 = scmp.ne.s32.totalorder %s70, %s71
      %p82 = scmp.eq.s32.totalorder %s13, 0
      %p83 = por %p81, %p82
      %p84 = scmp.ne.s32.totalorder %s70, %s71
      %p85 = scmp.eq.s32.totalorder %s14, 1
      %p86 = por %p84, %p85
      %p88 = scmp.ne.s32.totalorder %s71, %s87
      %p89 = scmp.eq.s32.totalorder %s14, 0
      %p90 = por %p88, %p89
      %s91 = ssub.s32 %s15, %s34
      %s92 = ssub.s32 %s16, %s30
      %s93 = sor.u32 %s91, %s92
      %p94 = scmp.eq.s32.totalorder %s93, 0
      %s96 = sadd.s32 %s95, 1
      %s97 = scalar_select %p94, %s95, %s96
      %p100 = pneg %p94
      %p101 = scmp.eq.s32.totalorder %s8, 1
      %p102 = por %p100, %p101
      %p103 = scmp.ne.s32.totalorder %s95, %s98
      %p104 = scmp.eq.s32.totalorder %s8, 0
      %p105 = por %p103, %p104
      %p106 = scmp.ne.s32.totalorder %s95, %s98
      %p107 = scmp.eq.s32.totalorder %s13, 1
      %p108 = por %p106, %p107
      %p109 = scmp.ne.s32.totalorder %s98, %s99
      %p110 = scmp.eq.s32.totalorder %s13, 0
      %p111 = por %p109, %p110
      %p112 = scmp.ne.s32.totalorder %s98, %s99
      %p113 = scmp.eq.s32.totalorder %s14, 1
      %p114 = por %p112, %p113
      %p116 = scmp.ne.s32.totalorder %s99, %s115
      %p117 = scmp.eq.s32.totalorder %s14, 0
      %p118 = por %p116, %p117
      %p119 = scmp.le.s32.totalorder 1, %s8
      %p120 = scmp.lt.s32.totalorder %s8, 3
      %p121 = pnand %p119, %p120
      %p122 = pneg %p121
      // Predicated region
      $region9: #{_lambda_.10} parent=5 // pred_check
        _
      $region10: #{_lambda_.10} parent=5 // pred_check_branch
        %124 = sbr.rel (%p121) target = $region12
      $region11: #{_lambda_.10} parent=5 // pred_region
        %s125 = ssub.s32 %s8, 1
      $region12: #{_lambda_.10} parent=5 // pred_fallthru
        _
      %p126 = scmp.lt.s32.totalorder %s8, 2
      // Predicated region
      $region13: #{_lambda_.10} parent=5 // pred_check
        %p127 = pneg %p126
      $region14: #{_lambda_.10} parent=5 // pred_check_branch
        %129 = sbr.rel (%p127) target = $region16
      $region15: #{_lambda_.10} parent=5 // pred_region
        // Predicated region
        $region17: #{_lambda_.10} parent=15 // pred_check
          %p130 = pneg %p49
        $region18: #{_lambda_.10} parent=15 // pred_check_branch
          %132 = sbr.rel (%p130) target = $region20
        $region19: #{_lambda_.10} parent=15 // pred_region
          %s133 = sand.u32 %s39, 1
          %s134 = sand.u32 %s39, 1
          %s135 = smul.addr %s134, 32
          %s136 = scalar_lea.vmem [#allocation3], %s135
          %s137 = smul.u32 2, %s15
          %s138 = smul.u32 2, %s17
          %s139 = smul.addr %s137, 4
          %s140 = sadd.s32 %s138, %s139
          %s141 = smul.addr %s140, 8
          %s142 = scalar_lea.vmem %s0, %s141
          // Predicated region
          $region21: #{_lambda_.10} parent=19 // pred_check
            _
          $region22: #{_lambda_.10} parent=19 // pred_check_branch
            %144 = sbr.rel (0) target = $region24
          $region23: #{_lambda_.10} parent=19 // pred_region
            // Predicated region
            $region25: #{_lambda_.10} parent=23 // pred_check
              _
            $region26: #{_lambda_.10} parent=23 // pred_check_branch
              %146 = sbr.rel (0) target = $region28
            $region27: #{_lambda_.10} parent=23 // pred_region
              loop: start=0, step=1, limit=1
              $region29: #{_lambda_.10} parent=27 // loop_pre_header
                _
              $region30: #{_lambda_.10} parent=27 // loop_header
                %s148 = sphi 0, %s152
                %p149 = scmp.ge.s32.totalorder %s148, 1
                %s153 = sphi %s142, %s142
                %s154 = sphi %s136, %s136
              $region31: #{_lambda_.10} parent=27 // loop_header_branch
                %151 = sbr.rel (%p149) target = $region35
              $region32: #{_lambda_.10} parent=27 // loop_body
                %v155 = vld [vmem:[%s153] sm:$0xff]
                %156 = vst [vmem:[%s154] sm:$0xff] %v155
                %v157 = vld [vmem:[%s153 + $0x8] sm:$0xff]
                %158 = vst [vmem:[%s154 + $0x8] sm:$0xff] %v157
                %v159 = vld [vmem:[%s153 + $0x20] sm:$0xff]
                %160 = vst [vmem:[%s154 + $0x10] sm:$0xff] %v159
                %v161 = vld [vmem:[%s153 + $0x28] sm:$0xff]
                %162 = vst [vmem:[%s154 + $0x18] sm:$0xff] %v161
              $region33: #{_lambda_.10} parent=27 // loop_footer
                %s152 = sadd.s32 1, %s148
              $region34: #{_lambda_.10} parent=27 // loop_footer_branch
                %147 = sbr.rel target = $region30
              $region35: #{_lambda_.10} parent=27 // loop_exit
                _
            $region28: #{_lambda_.10} parent=23 // pred_fallthru
              _
            // Predicated region
            $region36: #{_lambda_.10} parent=23 // pred_check
              _
            $region37: #{_lambda_.10} parent=23 // pred_check_branch
              %164 = sbr.rel target = $region39
            $region38: #{_lambda_.10} parent=23 // pred_region
              _
            $region39: #{_lambda_.10} parent=23 // pred_fallthru
              _
          $region24: #{_lambda_.10} parent=19 // pred_fallthru
            _
          %165 = vnop
        $region20: #{_lambda_.10} parent=15 // pred_fallthru
          _
        // Predicated region
        $region40: #{_lambda_.10} parent=15 // pred_check
          %p166 = pneg %p77
        $region41: #{_lambda_.10} parent=15 // pred_check_branch
          %168 = sbr.rel (%p166) target = $region43
        $region42: #{_lambda_.10} parent=15 // pred_region
          %s169 = smul.u32 32, %s17
          %p170 = scmp.lt.s32.totalorder %s169, 63
          %s171 = scalar_select %p170, %s169, 63
          %p172 = scmp.lt.s32.totalorder %s16, 0
          %s173 = scalar_select %p172, %s16, 0
          %s174 = sadd.s32 %s173, %s171
          %s175 = smul.addr %s174, 4
          %s176 = scalar_lea.vmem %s1, %s175
          %s177 = smul.u32 32, %s17
        $region43: #{_lambda_.10} parent=15 // pred_fallthru
          _
      $region16: #{_lambda_.10} parent=5 // pred_fallthru
        _
      %p178 = scmp.le.s32.totalorder 1, %s8
      %p179 = scmp.lt.s32.totalorder %s8, 3
      %p180 = pnand %p178, %p179
      %p181 = pneg %p180
      // Predicated region
      $region44: #{_lambda_.10} parent=5 // pred_check
        _
      $region45: #{_lambda_.10} parent=5 // pred_check_branch
        %183 = sbr.rel (%p180) target = $region47
      $region46: #{_lambda_.10} parent=5 // pred_region
        %s184 = ssub.s32 %s8, 1
        %s185 = sand.u32 %s42, 1
        %s186 = sand.u32 %s42, 1
        %s187 = smul.addr %s186, 32
        %s188 = scalar_lea.vmem [#allocation3], %s187
        // Predicated region
        $region48: #{_lambda_.10} parent=46 // pred_check
          %p189 = pneg %p55
        $region49: #{_lambda_.10} parent=46 // pred_check_branch
          %191 = sbr.rel (%p189) target = $region51
        $region50: #{_lambda_.10} parent=46 // pred_region
          _
        $region51: #{_lambda_.10} parent=46 // pred_fallthru
          _
        %s192 = sand.u32 %s42, 1
        %s193 = sand.u32 %s42, 1
        %s194 = smul.addr %s193, 32
        %s195 = scalar_lea.vmem [#allocation3], %s194
        %p196 = pneg %p55
        %p197 = pneg %p52
        %s198 = smul.u32 32, %s20
        %p199 = scmp.lt.s32.totalorder %s198, 63
        %s200 = scalar_select %p199, %s198, 63
        %p201 = scmp.lt.s32.totalorder %s19, 0
        %s202 = scalar_select %p201, %s19, 0
        %s203 = sadd.s32 %s202, %s200
        %s204 = smul.addr %s203, 4
        %s205 = scalar_lea.vmem %s1, %s204
        %p206 = pneg %p83
        %p207 = pneg %p80
        %p208 = pneg %p111
        %p209 = pneg %p108
        %s210 = smul.u32 2, %s18
        %p211 = scmp.lt.s32.totalorder %s210, 1
        %s212 = scalar_select %p211, %s210, 1
        %p213 = scmp.lt.s32.totalorder %s19, 0
        %s214 = scalar_select %p213, %s19, 0
        %s215 = sadd.s32 %s214, %s212
        %s216 = smul.addr %s215, 8
        %s217 = scalar_lea.vmem %s2, %s216
        %s218 = smul.u32 2, %s18
        %s219 = smul.u32 2, %s20
        %s220 = smul.u32 32, %s20
        %p221 = scmp.lt.s32.totalorder %s220, 63
        %s222 = scalar_select %p221, %s220, 63
        %p223 = scmp.lt.s32.totalorder %s19, 0
        %s224 = scalar_select %p223, %s19, 0
        %s225 = sadd.s32 %s224, %s222
        %s226 = smul.addr %s225, 4
        %s227 = scalar_lea.vmem %s1, %s226
        %s228 = smul.u32 32, %s20
        %s229 = smul.u32 2, %s18
        %p230 = scmp.lt.s32.totalorder %s229, 1
        %s231 = scalar_select %p230, %s229, 1
        %p232 = scmp.lt.s32.totalorder %s19, 0
        %s233 = scalar_select %p232, %s19, 0
        %s234 = sadd.s32 %s233, %s231
        %s235 = smul.addr %s234, 8
        %s236 = scalar_lea.vmem %s2, %s235
        %s237 = smul.u32 2, %s18
        %p238 = scmp.eq.s32.totalorder %s20, 0
        // Predicated region
        $region52: #{_lambda_.10} parent=46 // pred_check
          %p239 = pneg %p238
        $region53: #{_lambda_.10} parent=46 // pred_check_branch
          %241 = sbr.rel (%p239) target = $region55
        $region54: #{_lambda_.10} parent=46 // pred_region
          %vm242 = vcmask 130048
          %243 = vst.msk [vmem:[#allocation2] sm:$0xff] %vm242, 0.0
          %244 = vst.msk [vmem:[#allocation2 + $0x8] sm:$0xff] %vm242, 0.0
        $region55: #{_lambda_.10} parent=46 // pred_fallthru
          _
        %v245 = vld [vmem:[%s188] sm:$0xff]
        %v246 = vld [vmem:[%s188 + $0x8] sm:$0xff]
        %v247 = vld [vmem:[%s188 + $0x10] sm:$0xff]
        %v248 = vld [vmem:[%s188 + $0x18] sm:$0xff]
        %v249 = vpack.c.bf16 %v247, %v245
        %v250 = vpack.c.bf16 %v248, %v246
        %v251 = vld [vmem:[%s227] sm:$0xf]
        %v252 = vld [vmem:[%s227 + $0x4] sm:$0xf]
        %v253 = vld [vmem:[%s227 + $0x8] sm:$0xf]
        %v254 = vld [vmem:[%s227 + $0xc] sm:$0xf]
        %v255 = vld [vmem:[%s227 + $0x10] sm:$0xf]
        %v256 = vld [vmem:[%s227 + $0x14] sm:$0xf]
        %v257 = vld [vmem:[%s227 + $0x18] sm:$0xf]
        %v258 = vld [vmem:[%s227 + $0x1c] sm:$0xf]
        %v259 = vld [vmem:[%s227 + $0x20] sm:$0xf]
        %v260 = vld [vmem:[%s227 + $0x24] sm:$0xf]
        %v261 = vld [vmem:[%s227 + $0x28] sm:$0xf]
        %v262 = vld [vmem:[%s227 + $0x2c] sm:$0xf]
        %v263 = vld [vmem:[%s227 + $0x30] sm:$0xf]
        %v264 = vld [vmem:[%s227 + $0x34] sm:$0xf]
        %v265 = vld [vmem:[%s227 + $0x38] sm:$0xf]
        %v266 = vld [vmem:[%s227 + $0x3c] sm:$0xf]
        %v267 = vld [vmem:[%s227 + $0x40] sm:$0xf]
        %v268 = vld [vmem:[%s227 + $0x44] sm:$0xf]
        %v269 = vld [vmem:[%s227 + $0x48] sm:$0xf]
        %v270 = vld [vmem:[%s227 + $0x4c] sm:$0xf]
        %v271 = vld [vmem:[%s227 + $0x50] sm:$0xf]
        %v272 = vld [vmem:[%s227 + $0x54] sm:$0xf]
        %v273 = vld [vmem:[%s227 + $0x58] sm:$0xf]
        %v274 = vld [vmem:[%s227 + $0x5c] sm:$0xf]
        %v275 = vld [vmem:[%s227 + $0x60] sm:$0xf]
        %v276 = vld [vmem:[%s227 + $0x64] sm:$0xf]
        %v277 = vld [vmem:[%s227 + $0x68] sm:$0xf]
        %v278 = vld [vmem:[%s227 + $0x6c] sm:$0xf]
        %v279 = vld [vmem:[%s227 + $0x70] sm:$0xf]
        %v280 = vld [vmem:[%s227 + $0x74] sm:$0xf]
        %v281 = vld [vmem:[%s227 + $0x78] sm:$0xf]
        %v282 = vld [vmem:[%s227 + $0x7c] sm:$0xf]
        %v283 = vld [vmem:[#allocation2] sm:$0xff]
        %v284 = vld [vmem:[#allocation2 + $0x8] sm:$0xff]
        %v317 = vunpack.c.l.b16 %v251
        %v318 = vunpack.c.l.b16 %v252
        %v319 = vunpack.c.l.b16 %v253
        %v320 = vunpack.c.l.b16 %v254
        %v321 = vunpack.c.l.b16 %v255
        %v322 = vunpack.c.l.b16 %v256
        %v323 = vunpack.c.l.b16 %v257
        %v324 = vunpack.c.l.b16 %v258
        %v325 = vunpack.c.l.b16 %v259
        %v326 = vunpack.c.l.b16 %v260
        %v327 = vunpack.c.l.b16 %v261
        %v328 = vunpack.c.l.b16 %v262
        %v329 = vunpack.c.l.b16 %v263
        %v330 = vunpack.c.l.b16 %v264
        %v331 = vunpack.c.l.b16 %v265
        %v332 = vunpack.c.l.b16 %v266
        %v333 = vunpack.c.l.b16 %v267
        %v334 = vunpack.c.l.b16 %v268
        %v335 = vunpack.c.l.b16 %v269
        %v336 = vunpack.c.l.b16 %v270
        %v337 = vunpack.c.l.b16 %v271
        %v338 = vunpack.c.l.b16 %v272
        %v339 = vunpack.c.l.b16 %v273
        %v340 = vunpack.c.l.b16 %v274
        %v341 = vunpack.c.l.b16 %v275
        %v342 = vunpack.c.l.b16 %v276
        %v343 = vunpack.c.l.b16 %v277
        %v344 = vunpack.c.l.b16 %v278
        %v345 = vunpack.c.l.b16 %v279
        %v346 = vunpack.c.l.b16 %v280
        %v347 = vunpack.c.l.b16 %v281
        %v348 = vunpack.c.l.b16 %v282
        %v349 = vpack.c.b16 %v318, %v317
        %v350 = vpack.c.b16 %v320, %v319
        %v351 = vpack.c.b16 %v322, %v321
        %v352 = vpack.c.b16 %v324, %v323
        %v353 = vpack.c.b16 %v326, %v325
        %v354 = vpack.c.b16 %v328, %v327
        %v355 = vpack.c.b16 %v330, %v329
        %v356 = vpack.c.b16 %v332, %v331
        %v357 = vpack.c.b16 %v334, %v333
        %v358 = vpack.c.b16 %v336, %v335
        %v359 = vpack.c.b16 %v338, %v337
        %v360 = vpack.c.b16 %v340, %v339
        %v361 = vpack.c.b16 %v342, %v341
        %v362 = vpack.c.b16 %v344, %v343
        %v363 = vpack.c.b16 %v346, %v345
        %v364 = vpack.c.b16 %v348, %v347
        %381 = vmatpush.bf16.msra.mxu0 %v356
        %382 = vmatpush.bf16.msra.mxu0 %v355
        %383 = vmatpush.bf16.msra.mxu0 %v354
        %384 = vmatpush.bf16.msra.mxu0 %v353
        %385 = vmatpush.bf16.msra.mxu0 %v352
        %386 = vmatpush.bf16.msra.mxu0 %v351
        %387 = vmatpush.bf16.msra.mxu0 %v350
        %388 = vmatpush.bf16.msra.mxu0 %v349
        %389 = vmatmul.bf16.gmra.mxu0 %v249
        %v390 = vpop.f32.mrf.mxu0
        %v391 = vadd.f32 0.0, %v390
        %v392 = vpop.f32.mrf.mxu0
        %v393 = vadd.f32 0.0, %v392
        %394 = vdwg.mxu0
        %395 = vmatpush.bf16.msra.mxu0 %v364
        %396 = vmatpush.bf16.msra.mxu0 %v363
        %397 = vmatpush.bf16.msra.mxu0 %v362
        %398 = vmatpush.bf16.msra.mxu0 %v361
        %399 = vmatpush.bf16.msra.mxu0 %v360
        %400 = vmatpush.bf16.msra.mxu0 %v359
        %401 = vmatpush.bf16.msra.mxu0 %v358
        %402 = vmatpush.bf16.msra.mxu0 %v357
        %403 = vmatmul.bf16.gmra.mxu0 %v250
        %v404 = vpop.f32.mrf.mxu0
        %v405 = vadd.f32 %v391, %v404
        %v406 = vpop.f32.mrf.mxu0
        %v407 = vadd.f32 %v393, %v406
        %408 = vdwg.mxu0
        %v409 = vadd.f32 %v283, %v405
        %v410 = vadd.f32 %v284, %v407
        %vm411 = vcmask 130048
        %412 = vst.msk [vmem:[#allocation2] sm:$0xff] %vm411, %v409
        %413 = vst.msk [vmem:[#allocation2 + $0x8] sm:$0xff] %vm411, %v410
        %p414 = scmp.eq.s32.totalorder %s20, 1
        // Predicated region
        $region56: #{_lambda_.10} parent=46 // pred_check
          %p415 = pneg %p414
        $region57: #{_lambda_.10} parent=46 // pred_check_branch
          %417 = sbr.rel (%p415) target = $region59
        $region58: #{_lambda_.10} parent=46 // pred_region
          %v418 = vld [vmem:[#allocation2] sm:$0xff]
          %v419 = vld [vmem:[#allocation2 + $0x8] sm:$0xff]
          %420 = vst.msk [vmem:[%s236] sm:$0xff] %vm411, %v418
          %421 = vst.msk [vmem:[%s236 + $0x8] sm:$0xff] %vm411, %v419
        $region59: #{_lambda_.10} parent=46 // pred_fallthru
          _
        %s422 = smul.u32 2, %s18
        %p423 = scmp.lt.s32.totalorder %s422, 1
        %s424 = scalar_select %p423, %s422, 1
        %p425 = scmp.lt.s32.totalorder %s19, 0
        %s426 = scalar_select %p425, %s19, 0
        %s427 = sadd.s32 %s426, %s424
        %s428 = smul.addr %s427, 8
        %s429 = scalar_lea.vmem %s2, %s428
        // Predicated region
        $region60: #{_lambda_.10} parent=46 // pred_check
          %p430 = pneg %p108
        $region61: #{_lambda_.10} parent=46 // pred_check_branch
          %432 = sbr.rel (%p430) target = $region63
        $region62: #{_lambda_.10} parent=46 // pred_region
          %s433 = smul.u32 2, %s18
        $region63: #{_lambda_.10} parent=46 // pred_fallthru
          _
        // Predicated region
        $region64: #{_lambda_.10} parent=46 // pred_check
          %p434 = pneg %p108
        $region65: #{_lambda_.10} parent=46 // pred_check_branch
          %436 = sbr.rel (%p434) target = $region67
        $region66: #{_lambda_.10} parent=46 // pred_region
          %s437 = smul.u32 2, %s18
          %p438 = scmp.lt.s32.totalorder %s437, 1
          %s439 = scalar_select %p438, %s437, 1
          %p440 = scmp.lt.s32.totalorder %s19, 0
          %s441 = scalar_select %p440, %s19, 0
          %s442 = sadd.s32 %s441, %s439
          %s443 = smul.addr %s442, 8
          %s444 = scalar_lea.vmem %s2, %s443
        $region67: #{_lambda_.10} parent=46 // pred_fallthru
          _
      $region47: #{_lambda_.10} parent=5 // pred_fallthru
        _
      %p445 = scmp.le.s32.totalorder 2, %s8
      // Predicated region
      $region68: #{_lambda_.10} parent=5 // pred_check
        %p446 = pneg %p445
      $region69: #{_lambda_.10} parent=5 // pred_check_branch
        %448 = sbr.rel (%p446) target = $region71
      $region70: #{_lambda_.10} parent=5 // pred_region
        %s449 = ssub.s32 %s8, 2
      $region71: #{_lambda_.10} parent=5 // pred_fallthru
        _
    $region6: #{_lambda_.10} parent=1 // loop_footer
      %s12 = sadd.s32 1, %s8
    $region7: #{_lambda_.10} parent=1 // loop_footer_branch
      %7 = sbr.rel target = $region3
    $region8: #{_lambda_.10} parent=1 // loop_exit
      _

// kernel: _lambda_.11
$region0: #{_lambda_.11}
  #allocation0 [shape = 'u32[]', space=smem, size = 0x4, offset = 0x4, fixed_abs, tag = 'smem constant byte address 0x4 - core index']
  #allocation1 [shape = 'u32[72,128]{1,0:T(1,128)}', space=vmem, size = 0x9000, scoped, tag = 'internal scratch']
  #allocation2 [shape = 'f32[16,16]{1,0:T(8,128)}', space=vmem, size = 0x2000, scoped, tag = 'scratch operand']
  %s0 = inlined_call_operand.vmem [shape: f32[16,528], index: 0, kind: input, shape index: {}]
  %s1 = inlined_call_operand.vmem [shape: bf16[528,16], index: 1, kind: input, shape index: {}]
  %s2 = inlined_call_operand.vmem [shape: f32[1,16], index: 2, kind: input, shape index: {}]
  %s3 = inlined_call_operand.hbm [shape: f32[16,16], index: 3, kind: output, shape index: {}]
  %s4 = sld [smem:[#allocation0]]
  $region30: #{_lambda_.11} parent=0
    _
  %s6 = ssub.s32 1, %s4
  %s7 = scalar_select 0, %s6, %s4
  $region1: #{_lambda_.11} parent=0
    #allocation3 [shape = 'u8[8192]{0}', space=vmem, size = 0x2000, scoped, tag = 'output window, operand 0, single buffered']
    #allocation4 [shape = 's32[1]{0}', space=sflag, size = 0x4, scoped, tag = 'scoped memory for _lambda_.11']
    %8 = vsyncpa [#allocation4], 0
    // Predicated region
    $region2: #{_lambda_.11} parent=1 // pred_check
      _
    $region3: #{_lambda_.11} parent=1 // pred_check_branch
      %10 = sbr.rel (0) target = $region5
    $region4: #{_lambda_.11} parent=1 // pred_region
      _
    $region5: #{_lambda_.11} parent=1 // pred_fallthru
      _
    // Predicated region
    $region6: #{_lambda_.11} parent=1 // pred_check
      _
    $region7: #{_lambda_.11} parent=1 // pred_check_branch
      %12 = sbr.rel (0) target = $region9
    $region8: #{_lambda_.11} parent=1 // pred_region
      _
    $region9: #{_lambda_.11} parent=1 // pred_fallthru
      _
    // Predicated region
    $region10: #{_lambda_.11} parent=1 // pred_check
      _
    $region11: #{_lambda_.11} parent=1 // pred_check_branch
      %14 = sbr.rel (0) target = $region13
    $region12: #{_lambda_.11} parent=1 // pred_region
      _
    $region13: #{_lambda_.11} parent=1 // pred_fallthru
      _
    %p16 = scmp.eq.s32.totalorder 0, 0
    // Predicated region
    $region14: #{_lambda_.11} parent=1 // pred_check
      %p17 = pneg %p16
    $region15: #{_lambda_.11} parent=1 // pred_check_branch
      %19 = sbr.rel (%p17) target = $region17
    $region16: #{_lambda_.11} parent=1 // pred_region
      %vm20 = vcmask 130048
      %21 = vst.msk [vmem:[#allocation2] sm:$0xff] %vm20, 0.0
      %22 = vst.msk [vmem:[#allocation2 + $0x8] sm:$0xff] %vm20, 0.0
    $region17: #{_lambda_.11} parent=1 // pred_fallthru
      _
    %v23 = vld [vmem:[%s0] sm:$0xff]
    %v24 = vld [vmem:[%s0 + $0x8] sm:$0xff]
    %v25 = vld [vmem:[%s0 + $0x10] sm:$0xff]
    %v26 = vld [vmem:[%s0 + $0x18] sm:$0xff]
    %v27 = vld [vmem:[%s0 + $0x20] sm:$0xff]
    %v28 = vld [vmem:[%s0 + $0x28] sm:$0xff]
    %v29 = vld [vmem:[%s0 + $0x30] sm:$0xff]
    %v30 = vld [vmem:[%s0 + $0x38] sm:$0xff]
    %v31 = vld [vmem:[%s0 + $0x40] sm:$0xff]
    %v32 = vld [vmem:[%s0 + $0x48] sm:$0xff]
    %v33 = vpack.c.bf16 %v28, %v23
    %v34 = vpack.c.bf16 %v29, %v24
    %v35 = vpack.c.bf16 %v30, %v25
    %v36 = vpack.c.bf16 %v31, %v26
    %v37 = vpack.c.bf16 %v32, %v27
    %v38 = vld [vmem:[%s1] sm:$0xf]
    %v39 = vld [vmem:[%s1 + $0x4] sm:$0xf]
    %v40 = vld [vmem:[%s1 + $0x8] sm:$0xf]
    %v41 = vld [vmem:[%s1 + $0xc] sm:$0xf]
    %v42 = vld [vmem:[%s1 + $0x10] sm:$0xf]
    %v43 = vld [vmem:[%s1 + $0x14] sm:$0xf]
    %v44 = vld [vmem:[%s1 + $0x18] sm:$0xf]
    %v45 = vld [vmem:[%s1 + $0x1c] sm:$0xf]
    %v46 = vld [vmem:[%s1 + $0x20] sm:$0xf]
    %v47 = vld [vmem:[%s1 + $0x24] sm:$0xf]
    %v48 = vld [vmem:[%s1 + $0x28] sm:$0xf]
    %v49 = vld [vmem:[%s1 + $0x2c] sm:$0xf]
    %v50 = vld [vmem:[%s1 + $0x30] sm:$0xf]
    %v51 = vld [vmem:[%s1 + $0x34] sm:$0xf]
    %v52 = vld [vmem:[%s1 + $0x38] sm:$0xf]
    %v53 = vld [vmem:[%s1 + $0x3c] sm:$0xf]
    %v54 = vld [vmem:[%s1 + $0x40] sm:$0xf]
    %v55 = vld [vmem:[%s1 + $0x44] sm:$0xf]
    %v56 = vld [vmem:[%s1 + $0x48] sm:$0xf]
    %v57 = vld [vmem:[%s1 + $0x4c] sm:$0xf]
    %v58 = vld [vmem:[%s1 + $0x50] sm:$0xf]
    %v59 = vld [vmem:[%s1 + $0x54] sm:$0xf]
    %v60 = vld [vmem:[%s1 + $0x58] sm:$0xf]
    %v61 = vld [vmem:[%s1 + $0x5c] sm:$0xf]
    %v62 = vld [vmem:[%s1 + $0x60] sm:$0xf]
    %v63 = vld [vmem:[%s1 + $0x64] sm:$0xf]
    %v64 = vld [vmem:[%s1 + $0x68] sm:$0xf]
    %v65 = vld [vmem:[%s1 + $0x6c] sm:$0xf]
    %v66 = vld [vmem:[%s1 + $0x70] sm:$0xf]
    %v67 = vld [vmem:[%s1 + $0x74] sm:$0xf]
    %v68 = vld [vmem:[%s1 + $0x78] sm:$0xf]
    %v69 = vld [vmem:[%s1 + $0x7c] sm:$0xf]
    %v70 = vld [vmem:[%s1 + $0x80] sm:$0xf]
    %v71 = vld [vmem:[%s1 + $0x84] sm:$0xf]
    %v72 = vld [vmem:[%s1 + $0x88] sm:$0xf]
    %v73 = vld [vmem:[%s1 + $0x8c] sm:$0xf]
    %v74 = vld [vmem:[%s1 + $0x90] sm:$0xf]
    %v75 = vld [vmem:[%s1 + $0x94] sm:$0xf]
    %v76 = vld [vmem:[%s1 + $0x98] sm:$0xf]
    %v77 = vld [vmem:[%s1 + $0x9c] sm:$0xf]
    %v78 = vld [vmem:[%s1 + $0xa0] sm:$0xf]
    %v79 = vld [vmem:[%s1 + $0xa4] sm:$0xf]
    %v80 = vld [vmem:[%s1 + $0xa8] sm:$0xf]
    %v81 = vld [vmem:[%s1 + $0xac] sm:$0xf]
    %v82 = vld [vmem:[%s1 + $0xb0] sm:$0xf]
    %v83 = vld [vmem:[%s1 + $0xb4] sm:$0xf]
    %v84 = vld [vmem:[%s1 + $0xb8] sm:$0xf]
    %v85 = vld [vmem:[%s1 + $0xbc] sm:$0xf]
    %v86 = vld [vmem:[%s1 + $0xc0] sm:$0xf]
    %v87 = vld [vmem:[%s1 + $0xc4] sm:$0xf]
    %v88 = vld [vmem:[%s1 + $0xc8] sm:$0xf]
    %v89 = vld [vmem:[%s1 + $0xcc] sm:$0xf]
    %v90 = vld [vmem:[%s1 + $0xd0] sm:$0xf]
    %v91 = vld [vmem:[%s1 + $0xd4] sm:$0xf]
    %v92 = vld [vmem:[%s1 + $0xd8] sm:$0xf]
    %v93 = vld [vmem:[%s1 + $0xdc] sm:$0xf]
    %v94 = vld [vmem:[%s1 + $0xe0] sm:$0xf]
    %v95 = vld [vmem:[%s1 + $0xe4] sm:$0xf]
    %v96 = vld [vmem:[%s1 + $0xe8] sm:$0xf]
    %v97 = vld [vmem:[%s1 + $0xec] sm:$0xf]
    %v98 = vld [vmem:[%s1 + $0xf0] sm:$0xf]
    %v99 = vld [vmem:[%s1 + $0xf4] sm:$0xf]
    %v100 = vld [vmem:[%s1 + $0xf8] sm:$0xf]
    %v101 = vld [vmem:[%s1 + $0xfc] sm:$0xf]
    %v102 = vld [vmem:[%s1 + $0x100] sm:$0xf]
    %v103 = vld [vmem:[%s1 + $0x104] sm:$0xf]
    %v104 = vld [vmem:[#allocation2] sm:$0xff]
    %v105 = vld [vmem:[#allocation2 + $0x8] sm:$0xff]
    %v172 = vunpack.c.l.b16 %v38
    %v173 = vunpack.c.l.b16 %v39
    %v174 = vunpack.c.l.b16 %v40
    %v175 = vunpack.c.l.b16 %v41
    %v176 = vunpack.c.l.b16 %v42
    %v177 = vunpack.c.l.b16 %v43
    %v178 = vunpack.c.l.b16 %v44
    %v179 = vunpack.c.l.b16 %v45
    %v180 = vunpack.c.l.b16 %v46
    %v181 = vunpack.c.l.b16 %v47
    %v182 = vunpack.c.l.b16 %v48
    %v183 = vunpack.c.l.b16 %v49
    %v184 = vunpack.c.l.b16 %v50
    %v185 = vunpack.c.l.b16 %v51
    %v186 = vunpack.c.l.b16 %v52
    %v187 = vunpack.c.l.b16 %v53
    %v188 = vunpack.c.l.b16 %v54
    %v189 = vunpack.c.l.b16 %v55
    %v190 = vunpack.c.l.b16 %v56
    %v191 = vunpack.c.l.b16 %v57
    %v192 = vunpack.c.l.b16 %v58
    %v193 = vunpack.c.l.b16 %v59
    %v194 = vunpack.c.l.b16 %v60
    %v195 = vunpack.c.l.b16 %v61
    %v196 = vunpack.c.l.b16 %v62
    %v197 = vunpack.c.l.b16 %v63
    %v198 = vunpack.c.l.b16 %v64
    %v199 = vunpack.c.l.b16 %v65
    %v200 = vunpack.c.l.b16 %v66
    %v201 = vunpack.c.l.b16 %v67
    %v202 = vunpack.c.l.b16 %v68
    %v203 = vunpack.c.l.b16 %v69
    %v204 = vunpack.c.l.b16 %v70
    %v205 = vunpack.c.l.b16 %v71
    %v206 = vunpack.c.l.b16 %v72
    %v207 = vunpack.c.l.b16 %v73
    %v208 = vunpack.c.l.b16 %v74
    %v209 = vunpack.c.l.b16 %v75
    %v210 = vunpack.c.l.b16 %v76
    %v211 = vunpack.c.l.b16 %v77
    %v212 = vunpack.c.l.b16 %v78
    %v213 = vunpack.c.l.b16 %v79
    %v214 = vunpack.c.l.b16 %v80
    %v215 = vunpack.c.l.b16 %v81
    %v216 = vunpack.c.l.b16 %v82
    %v217 = vunpack.c.l.b16 %v83
    %v218 = vunpack.c.l.b16 %v84
    %v219 = vunpack.c.l.b16 %v85
    %v220 = vunpack.c.l.b16 %v86
    %v221 = vunpack.c.l.b16 %v87
    %v222 = vunpack.c.l.b16 %v88
    %v223 = vunpack.c.l.b16 %v89
    %v224 = vunpack.c.l.b16 %v90
    %v225 = vunpack.c.l.b16 %v91
    %v226 = vunpack.c.l.b16 %v92
    %v227 = vunpack.c.l.b16 %v93
    %v228 = vunpack.c.l.b16 %v94
    %v229 = vunpack.c.l.b16 %v95
    %v230 = vunpack.c.l.b16 %v96
    %v231 = vunpack.c.l.b16 %v97
    %v232 = vunpack.c.l.b16 %v98
    %v233 = vunpack.c.l.b16 %v99
    %v234 = vunpack.c.l.b16 %v100
    %v235 = vunpack.c.l.b16 %v101
    %v236 = vunpack.c.l.b16 %v102
    %v237 = vunpack.c.l.b16 %v103
    %v238 = vpack.c.b16 %v173, %v172
    %v239 = vpack.c.b16 %v175, %v174
    %v240 = vpack.c.b16 %v177, %v176
    %v241 = vpack.c.b16 %v179, %v178
    %v242 = vpack.c.b16 %v181, %v180
    %v243 = vpack.c.b16 %v183, %v182
    %v244 = vpack.c.b16 %v185, %v184
    %v245 = vpack.c.b16 %v187, %v186
    %v246 = vpack.c.b16 %v189, %v188
    %v247 = vpack.c.b16 %v191, %v190
    %v248 = vpack.c.b16 %v193, %v192
    %v249 = vpack.c.b16 %v195, %v194
    %v250 = vpack.c.b16 %v197, %v196
    %v251 = vpack.c.b16 %v199, %v198
    %v252 = vpack.c.b16 %v201, %v200
    %v253 = vpack.c.b16 %v203, %v202
    %v254 = vpack.c.b16 %v205, %v204
    %v255 = vpack.c.b16 %v207, %v206
    %v256 = vpack.c.b16 %v209, %v208
    %v257 = vpack.c.b16 %v211, %v210
    %v258 = vpack.c.b16 %v213, %v212
    %v259 = vpack.c.b16 %v215, %v214
    %v260 = vpack.c.b16 %v217, %v216
    %v261 = vpack.c.b16 %v219, %v218
    %v262 = vpack.c.b16 %v221, %v220
    %v263 = vpack.c.b16 %v223, %v222
    %v264 = vpack.c.b16 %v225, %v224
    %v265 = vpack.c.b16 %v227, %v226
    %v266 = vpack.c.b16 %v229, %v228
    %v267 = vpack.c.b16 %v231, %v230
    %v268 = vpack.c.b16 %v233, %v232
    %v269 = vpack.c.b16 %v235, %v234
    %v270 = vpack.c.b16 %v237, %v236
    %vm304 = vcmask 130048
    %v306 = vsel %vm304, %v37, 0
    %308 = vmatpush.bf16.msra.mxu0 %v245
    %309 = vmatpush.bf16.msra.mxu0 %v244
    %310 = vmatpush.bf16.msra.mxu0 %v243
    %311 = vmatpush.bf16.msra.mxu0 %v242
    %312 = vmatpush.bf16.msra.mxu0 %v241
    %313 = vmatpush.bf16.msra.mxu0 %v240
    %314 = vmatpush.bf16.msra.mxu0 %v239
    %315 = vmatpush.bf16.msra.mxu0 %v238
    %316 = vmatmul.bf16.gmra.mxu0 %v33
    %v317 = vpop.f32.mrf.mxu0
    %v318 = vadd.f32 0.0, %v317
    %v319 = vpop.f32.mrf.mxu0
    %v320 = vadd.f32 0.0, %v319
    %321 = vdwg.mxu0
    %322 = vmatpush.bf16.msra.mxu0 %v253
    %323 = vmatpush.bf16.msra.mxu0 %v252
    %324 = vmatpush.bf16.msra.mxu0 %v251
    %325 = vmatpush.bf16.msra.mxu0 %v250
    %326 = vmatpush.bf16.msra.mxu0 %v249
    %327 = vmatpush.bf16.msra.mxu0 %v248
    %328 = vmatpush.bf16.msra.mxu0 %v247
    %329 = vmatpush.bf16.msra.mxu0 %v246
    %330 = vmatmul.bf16.gmra.mxu0 %v34
    %v331 = vpop.f32.mrf.mxu0
    %v332 = vadd.f32 %v318, %v331
    %v333 = vpop.f32.mrf.mxu0
    %v334 = vadd.f32 %v320, %v333
    %335 = vdwg.mxu0
    %336 = vmatpush.bf16.msra.mxu0 %v261
    %337 = vmatpush.bf16.msra.mxu0 %v260
    %338 = vmatpush.bf16.msra.mxu0 %v259
    %339 = vmatpush.bf16.msra.mxu0 %v258
    %340 = vmatpush.bf16.msra.mxu0 %v257
    %341 = vmatpush.bf16.msra.mxu0 %v256
    %342 = vmatpush.bf16.msra.mxu0 %v255
    %343 = vmatpush.bf16.msra.mxu0 %v254
    %344 = vmatmul.bf16.gmra.mxu0 %v35
    %v345 = vpop.f32.mrf.mxu0
    %v346 = vadd.f32 %v332, %v345
    %v347 = vpop.f32.mrf.mxu0
    %v348 = vadd.f32 %v334, %v347
    %349 = vdwg.mxu0
    %350 = vmatpush.bf16.msra.mxu0 %v269
    %351 = vmatpush.bf16.msra.mxu0 %v268
    %352 = vmatpush.bf16.msra.mxu0 %v267
    %353 = vmatpush.bf16.msra.mxu0 %v266
    %354 = vmatpush.bf16.msra.mxu0 %v265
    %355 = vmatpush.bf16.msra.mxu0 %v264
    %356 = vmatpush.bf16.msra.mxu0 %v263
    %357 = vmatpush.bf16.msra.mxu0 %v262
    %358 = vmatmul.bf16.gmra.mxu0 %v36
    %v359 = vpop.f32.mrf.mxu0
    %v360 = vadd.f32 %v346, %v359
    %v361 = vpop.f32.mrf.mxu0
    %v362 = vadd.f32 %v348, %v361
    %363 = vdwg.mxu0
    %364 = vmatpush.bf16.msra.mxu0 0
    %365 = vmatpush.bf16.msra.mxu0 0
    %366 = vmatpush.bf16.msra.mxu0 0
    %367 = vmatpush.bf16.msra.mxu0 0
    %368 = vmatpush.bf16.msra.mxu0 0
    %369 = vmatpush.bf16.msra.mxu0 0
    %370 = vmatpush.bf16.msra.mxu0 0
    %371 = vmatpush.bf16.msra.mxu0 %v270
    %372 = vmatmul.bf16.gmra.mxu0 %v306
    %v373 = vpop.f32.mrf.mxu0
    %v374 = vadd.f32 %v360, %v373
    %v375 = vpop.f32.mrf.mxu0
    %v376 = vadd.f32 %v362, %v375
    %377 = vdwg.mxu0
    %v378 = vadd.f32 %v104, %v374
    %v379 = vadd.f32 %v105, %v376
    %380 = vst.msk [vmem:[#allocation2] sm:$0xff] %vm304, %v378
    %381 = vst.msk [vmem:[#allocation2 + $0x8] sm:$0xff] %vm304, %v379
    // Predicated region
    $region18: #{_lambda_.11} parent=1 // pred_check
      %p382 = pneg %p16
    $region19: #{_lambda_.11} parent=1 // pred_check_branch
      %384 = sbr.rel (%p382) target = $region21
    $region20: #{_lambda_.11} parent=1 // pred_region
      %v385 = vld [vmem:[#allocation2] sm:$0xff]
      %v386 = vld [vmem:[#allocation2 + $0x8] sm:$0xff]
      %v387 = vld [vmem:[%s2] sm:$0x1]
      %v389 = vperm.slane %v387, 0
      %v391 = vadd.f32 %v385, %v389
      %v392 = vadd.f32 %v386, %v389
      %393 = vst.msk [vmem:[#allocation3] sm:$0xff] %vm304, %v391
      %394 = vst.msk [vmem:[#allocation3 + $0x8] sm:$0xff] %vm304, %v392
    $region21: #{_lambda_.11} parent=1 // pred_fallthru
      _
    // Predicated region
    $region22: #{_lambda_.11} parent=1 // pred_check
      _
    $region23: #{_lambda_.11} parent=1 // pred_check_branch
      %396 = sbr.rel (0) target = $region25
    $region24: #{_lambda_.11} parent=1 // pred_region
      %398 = vsyncadd [#allocation4], 0
      %s399 = sshll.u32 [#allocation3], 4
      %s400 = int_to_ptr.vmem [resolvable:$true] %s399
      %s401 = sshll.u32 %s3, 4
      %s402 = int_to_ptr.hbm [resolvable:$true] %s401
      %407 = dma.vmem_to_hbm [thread:$0]  %s400, 256, %s402, [#allocation4], 128, 128, 8
    $region25: #{_lambda_.11} parent=1 // pred_fallthru
      _
    // Predicated region
    $region26: #{_lambda_.11} parent=1 // pred_check
      _
    $region27: #{_lambda_.11} parent=1 // pred_check_branch
      %409 = sbr.rel (0) target = $region29
    $region28: #{_lambda_.11} parent=1 // pred_region
      %411 = dma.done [#allocation4], 256
    $region29: #{_lambda_.11} parent=1 // pred_fallthru
      _
    %412 = vsyncpa [#allocation4], 1

</llo_original>
